<compile_context>
chip_gen: v6e
topology: v6e:2x2x1
jax: 0.10.0
libtpu: 0.0.40
codegen_flags: <defaults>
</compile_context>

<pallas_src>
import functools

import jax
import jax.numpy as jnp
from jax.experimental import pallas as pl
from jax.experimental.pallas import tpu as pltpu


def _moe_kernel(h_ref, gw_ref, w1_ref, w2_ref,
                out_ref, logits_ref, idx_ref,
                count_ref,
                *, num_experts: int, num_experts_pad: int,
                expert_capacity: int, tile_s: int):
    # grid = (batch, seq_tile); experts are an unrolled in-kernel loop over
    # VMEM-resident weights (fetched once thanks to the constant index_map).
    s = pl.program_id(1)

    # New batch element -> reset the carried per-expert token counter.
    @pl.when(s == 0)
    def _():
        count_ref[...] = jnp.zeros_like(count_ref)

    h = h_ref[0]                                                  # (tS, D) f32

    # ------------------------------------------------------------------
    # Router (kept in f32 so argmax / capacity decisions cannot flip).
    # Gate width is lane-padded to num_experts_pad: lane-dense vregs/stores
    # and full MXU N width; padded columns are masked to -inf.
    # ------------------------------------------------------------------
    logits = jnp.dot(h, gw_ref[...], preferred_element_type=jnp.float32)
    logits_ref[0] = logits                                        # (tS, Ep)

    lane = jax.lax.broadcasted_iota(jnp.int32, (tile_s, num_experts_pad), 1)
    logits_m = jnp.where(lane < num_experts, logits, -jnp.inf)

    m = jnp.max(logits_m, axis=-1, keepdims=True)                 # (tS, 1)
    # max softmax prob = exp(0) / sum(exp(logits - m)) = 1 / denom; output
    # scale only -> EUP approximate reciprocal.
    denom = jnp.sum(jnp.exp(logits_m - m), axis=-1, keepdims=True)
    maxp = pl.reciprocal(denom, approx=True)                      # (tS, 1)

    # argmax on logits (softmax is monotone), first-occurrence tie break.
    colf = lane.astype(jnp.float32)
    is_max = logits_m == m
    arg = jnp.min(jnp.where(is_max, colf, jnp.float32(num_experts_pad)),
                  axis=-1, keepdims=True)                         # (tS, 1)
    one_hot = (colf == arg).astype(jnp.float32)                   # (tS, Ep)

    # Capacity mask: inclusive cumsum over the sequence = tile-local
    # triangular matmul (bf16 0/1 operands, f32 accumulation -> exact, single
    # MXU pass) + per-expert running count carried across S tiles.
    r = jax.lax.broadcasted_iota(jnp.int32, (tile_s, tile_s), 0)
    c = jax.lax.broadcasted_iota(jnp.int32, (tile_s, tile_s), 1)
    tri = (r >= c).astype(jnp.bfloat16)                           # (tS, tS)
    prio = jnp.dot(tri, one_hot.astype(jnp.bfloat16),
                   preferred_element_type=jnp.float32)            # (tS, Ep)
    prio = prio + count_ref[...]
    count_ref[...] += jnp.sum(one_hot, axis=0, keepdims=True)

    cap_ok = (prio <= jnp.float32(expert_capacity)).astype(jnp.float32)
    rmask = one_hot * cap_ok                                      # (tS, Ep)

    routed = jnp.sum(rmask, axis=-1, keepdims=True) > 0.0         # (tS, 1)
    idx_ref[0] = jnp.where(routed, arg, 0.0).astype(jnp.int32)

    # ------------------------------------------------------------------
    # Gated per-expert FFN: bf16 MXU inputs / f32 accumulation; experts with
    # no routed tokens in this tile skip both matmuls.
    # ------------------------------------------------------------------
    h_bf = h.astype(jnp.bfloat16)          # cast once per tile, not per expert
    out_ref[0] = jnp.zeros_like(h)
    for e in range(num_experts):
        mcol = rmask[:, e:e + 1]                                  # (tS, 1)

        @pl.when(jnp.sum(mcol) > 0.0)
        def _():
            h1 = jnp.dot(h_bf, w1_ref[e], preferred_element_type=jnp.float32)
            h1 = h1 * jax.nn.sigmoid(h1)                          # SiLU in f32
            oe = jnp.dot(h1.astype(jnp.bfloat16), w2_ref[e],
                         preferred_element_type=jnp.float32)      # (tS, D)
            out_ref[0] += mcol * oe

    # Dropped tokens keep the input hidden state; scale by max router prob.
    # (ffn_dropout_ = 0 -> Dropout is identity.)
    out_ref[0] = maxp * jnp.where(routed, out_ref[0], h)


def switch_sparse_moe(hidden_states, gate_w, w1, w2, expert_capacity,
                      *, tile_s=None):
    """hidden_states: (B, S, D) f32; gate_w: (D, E); w1: (E, D, F); w2: (E, F, D)."""
    B, S, D = hidden_states.shape
    E = gate_w.shape[1]
    F_ = w1.shape[-1]
    if tile_s is None:
        tile_s = S if S <= 256 else 256
    assert S % tile_s == 0 and (tile_s == S or tile_s % 8 == 0)
    n_s = S // tile_s

    # Lane-pad the router width to a multiple of 128 (zero weight columns).
    E_pad = ((E + 127) // 128) * 128
    gate_pad = jnp.zeros((D, E_pad), jnp.float32)
    gate_pad = gate_pad.at[:, :E].set(gate_w.astype(jnp.float32))

    # bf16 expert weights at the MXU inputs (f32 accumulation in-kernel).
    w1_bf = w1.astype(jnp.bfloat16)
    w2_bf = w2.astype(jnp.bfloat16)

    # VMEM budget: raise the limit on 128 MiB parts (v5e/v6e), keep headroom
    # on 64 MiB parts (v7x).
    try:
        vmem_cap = int(pltpu.get_tpu_info().vmem_capacity_bytes)
    except Exception:
        vmem_cap = 128 * 1024 * 1024
    vmem_limit = min(int(0.75 * vmem_cap), 100 * 1024 * 1024)

    # Residency guard: expert weights (x2 pipeline buffers) + activation tiles.
    w_bytes = 2 * int(w1_bf.size + w2_bf.size) * 2
    act_bytes = 2 * tile_s * (4 * D * 4 + 2 * E_pad * 4) + 2 * D * E_pad * 4
    if w_bytes + act_bytes > vmem_limit:
        # TODO(synk): F-tiled / streamed-expert variant (grid axes over E and F)
        # for transformer-sized experts that do not fit VMEM-resident.
        raise NotImplementedError(
            "expert weights do not fit VMEM-resident; add the streamed variant")

    kernel = functools.partial(
        _moe_kernel, num_experts=E, num_experts_pad=E_pad,
        expert_capacity=expert_capacity, tile_s=tile_s)

    out, logits_pad, idx = pl.pallas_call(
        kernel,
        out_shape=(
            jax.ShapeDtypeStruct((B, S, D), jnp.float32),
            jax.ShapeDtypeStruct((B, S, E_pad), jnp.float32),
            jax.ShapeDtypeStruct((B, S, 1), jnp.int32),
        ),
        grid_spec=pltpu.PrefetchScalarGridSpec(
            num_scalar_prefetch=0,
            grid=(B, n_s),
            in_specs=[
                # hidden tile
                pl.BlockSpec((1, tile_s, D), lambda b, s: (b, s, 0)),
                # lane-padded gate weight: resident.
                pl.BlockSpec((D, E_pad), lambda b, s: (0, 0)),
                # expert weights: VMEM-resident, fetched once (constant index).
                pl.BlockSpec((E, D, F_), lambda b, s: (0, 0, 0)),
                pl.BlockSpec((E, F_, D), lambda b, s: (0, 0, 0)),
            ],
            out_specs=[
                pl.BlockSpec((1, tile_s, D), lambda b, s: (b, s, 0)),
                pl.BlockSpec((1, tile_s, E_pad), lambda b, s: (b, s, 0)),
                # idx is tiny (4*S bytes per batch); masked store acceptable.
                pl.BlockSpec((1, tile_s, 1), lambda b, s: (b, s, 0)),
            ],
            scratch_shapes=[
                pltpu.VMEM((1, E_pad), jnp.float32),   # carried capacity count
            ],
        ),
        compiler_params=pltpu.CompilerParams(
            # B independent; S carries the capacity counter (sequential).
            # TODO(synk): precompute per-tile base expert counts outside the
            # kernel so the S axis can be marked "parallel" for v7x megacore.
            dimension_semantics=("parallel", "arbitrary"),
            vmem_limit_bytes=vmem_limit,
        ),
    )(hidden_states, gate_pad, w1_bf, w2_bf)

    # Matches the PyTorch return structure: (hidden, (router_logits, expert_index))
    return out, (logits_pad[..., :E], idx[..., 0])


def _ref_forward(h, gate_w, w1, w2, cap):
    """Pure-JAX reference mirroring the PyTorch module semantics (same
    precision policy as the kernel: f32 router, bf16 FFN inputs / f32 acc)."""
    E = gate_w.shape[1]
    logits = h @ gate_w
    probs = jax.nn.softmax(logits, axis=-1)
    top = jnp.argmax(probs, axis=-1)
    one_hot = jax.nn.one_hot(top, E, dtype=jnp.float32)
    priority = jnp.cumsum(one_hot, axis=-2)
    router_mask = one_hot * (priority <= cap)
    router_probs = jnp.max(probs, axis=-1, keepdims=True)
    expert_index = jnp.argmax(router_mask, axis=-1)
    h_bf = h.astype(jnp.bfloat16)
    next_states = h
    for e in range(E):
        h1 = jnp.dot(h_bf, w1[e].astype(jnp.bfloat16),
                     preferred_element_type=jnp.float32)
        h1 = h1 * jax.nn.sigmoid(h1)
        out_e = jnp.dot(h1.astype(jnp.bfloat16), w2[e].astype(jnp.bfloat16),
                        preferred_element_type=jnp.float32)
        sel = router_mask[:, :, e:e + 1] > 0
        next_states = jnp.where(sel, out_e, next_states)
    return router_probs * next_states, logits, expert_index


if __name__ == "__main__":
    B, S, D, E, F_ = 2, 128, 128, 8, 256
    tile_s = 64                 # exercises the carried-count S tiling (2 tiles)
    expert_capacity = 12        # below S/E average -> some tokens get dropped

    key = jax.random.PRNGKey(0)
    k_h, k_g, k_w1, k_w2 = jax.random.split(key, 4)
    hidden = jax.random.normal(k_h, (B, S, D), jnp.float32) * 0.5
    gate_w = jax.random.normal(k_g, (D, E), jnp.float32) * 0.2
    w1 = jax.random.normal(k_w1, (E, D, F_), jnp.float32) * 0.05
    w2 = jax.random.normal(k_w2, (E, F_, D), jnp.float32) * 0.05

    out, (router_logits, expert_index) = switch_sparse_moe(
        hidden, gate_w, w1, w2, expert_capacity, tile_s=tile_s)
    jax.block_until_ready(out)
    jax.block_until_ready(router_logits)
    jax.block_until_ready(expert_index)

    # Cross-check against the pure-JAX reference.
    ref_out, ref_logits, ref_idx = _ref_forward(hidden, gate_w, w1, w2,
                                                expert_capacity)
    assert out.shape == (B, S, D) and out.dtype == jnp.float32
    assert router_logits.shape == (B, S, E)
    assert expert_index.shape == (B, S)
    assert jnp.allclose(router_logits, ref_logits, rtol=1e-3, atol=1e-3)
    assert jnp.array_equal(expert_index.astype(jnp.int32),
                           ref_idx.astype(jnp.int32))
    assert jnp.allclose(out, ref_out, rtol=2e-3, atol=2e-3)

    # TODO(synk): jitter_noise_>0 and Dropout>0 paths involve runtime RNG on
    # activations; they are identity in the deterministic config used here.
    print("KERNEL_OK")
</pallas_src>

<mosaic_0001>
module attributes {stable_mosaic.version = 11 : i64} {
  func.func @_moe_kernel(%arg0: i32, %arg1: i32, %arg2: memref<1x64x128xf32, #tpu.memory_space<vmem>>, %arg3: memref<128x128xf32, #tpu.memory_space<vmem>>, %arg4: memref<8x128x256xbf16, #tpu.memory_space<vmem>>, %arg5: memref<8x256x128xbf16, #tpu.memory_space<vmem>>, %arg6: memref<1x64x128xf32, #tpu.memory_space<vmem>>, %arg7: memref<1x64x128xf32, #tpu.memory_space<vmem>>, %arg8: memref<1x64x1xi32, #tpu.memory_space<vmem>>, %arg9: memref<1x128xf32, #tpu.memory_space<vmem>>) attributes {dimension_semantics = [#tpu.dimension_semantics<parallel>, #tpu.dimension_semantics<arbitrary>], iteration_bounds = array<i64: 2, 2>, scalar_prefetch = 0 : i64, scratch_operands = 1 : i64, tpu.core_type = #tpu.core_type<tc>, window_params = [{transform_indices = @transform_0, window_bounds = array<i64: 1, 64, 128>}, {pipeline_mode = #tpu.pipeline_mode<synchronous>, transform_indices = @transform_1, window_bounds = array<i64: 128, 128>}, {pipeline_mode = #tpu.pipeline_mode<synchronous>, transform_indices = @transform_2, window_bounds = array<i64: 8, 128, 256>}, {pipeline_mode = #tpu.pipeline_mode<synchronous>, transform_indices = @transform_3, window_bounds = array<i64: 8, 256, 128>}, {transform_indices = @transform_4, window_bounds = array<i64: 1, 64, 128>}, {transform_indices = @transform_5, window_bounds = array<i64: 1, 64, 128>}, {transform_indices = @transform_6, window_bounds = array<i64: 1, 64, 1>}]} {
    %c0_i32 = arith.constant 0 : i32
    %0 = arith.cmpi eq, %arg1, %c0_i32 : i32
    %1 = arith.extui %0 : i1 to i32
    %c0_i32_0 = arith.constant 0 : i32
    %2 = arith.cmpi ne, %1, %c0_i32_0 : i32
    scf.if %2 {
      %cst_62 = arith.constant 0.000000e+00 : f32
      %144 = vector.broadcast %cst_62 : f32 to vector<1x128xf32>
      %c0_63 = arith.constant 0 : index
      %c0_64 = arith.constant 0 : index
      %145 = vector.load %arg9[%c0_63, %c0_64] : memref<1x128xf32, #tpu.memory_space<vmem>>, vector<1x128xf32>
      tpu.vector_store %arg9[%c0_63, %c0_64], %144 {strides = array<i32>} : memref<1x128xf32, #tpu.memory_space<vmem>>, vector<1x128xf32>,
    } else {
    }
    %c0 = arith.constant 0 : index
    %c0_1 = arith.constant 0 : index
    %c0_2 = arith.constant 0 : index
    %3 = vector.load %arg2[%c0, %c0_1, %c0_2] : memref<1x64x128xf32, #tpu.memory_space<vmem>>, vector<1x64x128xf32>
    %4 = vector.shape_cast %3 : vector<1x64x128xf32> to vector<64x128xf32>
    %c0_3 = arith.constant 0 : index
    %c0_4 = arith.constant 0 : index
    %5 = vector.load %arg3[%c0_3, %c0_4] : memref<128x128xf32, #tpu.memory_space<vmem>>, vector<128x128xf32>
    %cst = arith.constant dense<0.000000e+00> : vector<64x128xf32>
    %6 = tpu.matmul %4, %5, %cst {dimension_numbers = #tpu.dot_dimension_numbers<[1], [0], [0], [1], [0, 0, 1, 1], [], []>} : vector<64x128xf32>, vector<128x128xf32>, vector<64x128xf32> -> vector<64x128xf32>
    %c0_5 = arith.constant 0 : index
    %c0_6 = arith.constant 0 : index
    %c0_7 = arith.constant 0 : index
    %7 = vector.load %arg7[%c0_5, %c0_6, %c0_7] : memref<1x64x128xf32, #tpu.memory_space<vmem>>, vector<1x64x128xf32>
    %8 = vector.shape_cast %7 : vector<1x64x128xf32> to vector<64x128xf32>
    %9 = vector.shape_cast %6 : vector<64x128xf32> to vector<1x64x128xf32>
    tpu.vector_store %arg7[%c0_5, %c0_6, %c0_7], %9 {strides = array<i32>} : memref<1x64x128xf32, #tpu.memory_space<vmem>>, vector<1x64x128xf32>,
    %10 = tpu.iota {dimensions = array<i32: 1>} : vector<64x128xi32>
    %c8_i32 = arith.constant 8 : i32
    %11 = vector.broadcast %c8_i32 : i32 to vector<64x128xi32>
    %12 = arith.cmpi slt, %10, %11 : vector<64x128xi32>
    %cst_8 = arith.constant 0xFF800000 : f32
    %13 = vector.broadcast %cst_8 : f32 to vector<64x128xf32>
    %14 = arith.select %12, %6, %13 : vector<64x128xi1>, vector<64x128xf32>
    %cst_9 = arith.constant dense<0xFF800000> : vector<64xf32>
    %15 = vector.multi_reduction <maximumf>, %14, %cst_9 [1] : vector<64x128xf32> to vector<64xf32>
    %16 = vector.shape_cast %15 : vector<64xf32> to vector<64x1xf32>
    %17 = vector.broadcast %16 : vector<64x1xf32> to vector<64x128xf32>
    %18 = arith.subf %14, %17 : vector<64x128xf32>
    %19 = math.exp %18 : vector<64x128xf32>
    %cst_10 = arith.constant dense<0.000000e+00> : vector<64xf32>
    %20 = vector.multi_reduction <add>, %19, %cst_10 [1] : vector<64x128xf32> to vector<64xf32>
    %21 = vector.shape_cast %20 : vector<64xf32> to vector<64x1xf32>
    %22 = tpu.reciprocal %21 {approx = true} : vector<64x1xf32> -> vector<64x1xf32>
    %23 = arith.sitofp %10 : vector<64x128xi32> to vector<64x128xf32>
    %24 = vector.broadcast %16 : vector<64x1xf32> to vector<64x128xf32>
    %25 = arith.cmpf oeq, %14, %24 : vector<64x128xf32>
    %cst_11 = arith.constant 1.280000e+02 : f32
    %26 = vector.broadcast %cst_11 : f32 to vector<64x128xf32>
    %27 = arith.select %25, %23, %26 : vector<64x128xi1>, vector<64x128xf32>
    %cst_12 = arith.constant dense<0x7F800000> : vector<64xf32>
    %28 = vector.multi_reduction <minimumf>, %27, %cst_12 [1] : vector<64x128xf32> to vector<64xf32>
    %29 = vector.shape_cast %28 : vector<64xf32> to vector<64x1xf32>
    %30 = vector.broadcast %29 : vector<64x1xf32> to vector<64x128xf32>
    %31 = arith.cmpf oeq, %23, %30 : vector<64x128xf32>
    %32 = arith.extui %31 : vector<64x128xi1> to vector<64x128xi32>
    %33 = arith.sitofp %32 : vector<64x128xi32> to vector<64x128xf32>
    %34 = tpu.iota {dimensions = array<i32: 0>} : vector<64x64xi32>
    %35 = tpu.iota {dimensions = array<i32: 1>} : vector<64x64xi32>
    %36 = arith.cmpi sge, %34, %35 : vector<64x64xi32>
    %37 = arith.extui %36 : vector<64x64xi1> to vector<64x64xi32>
    %38 = arith.sitofp %37 : vector<64x64xi32> to vector<64x64xf32>
    %39 = arith.truncf %38 : vector<64x64xf32> to vector<64x64xbf16>
    %40 = arith.truncf %33 : vector<64x128xf32> to vector<64x128xbf16>
    %cst_13 = arith.constant dense<0.000000e+00> : vector<64x128xf32>
    %41 = tpu.matmul %39, %40, %cst_13 {dimension_numbers = #tpu.dot_dimension_numbers<[1], [0], [0], [1], [0, 0, 1, 1], [], []>} : vector<64x64xbf16>, vector<64x128xbf16>, vector<64x128xf32> -> vector<64x128xf32>
    %c0_14 = arith.constant 0 : index
    %c0_15 = arith.constant 0 : index
    %42 = vector.load %arg9[%c0_14, %c0_15] : memref<1x128xf32, #tpu.memory_space<vmem>>, vector<1x128xf32>
    %43 = vector.broadcast %42 : vector<1x128xf32> to vector<64x128xf32>
    %44 = arith.addf %41, %43 : vector<64x128xf32>
    %c0_16 = arith.constant 0 : index
    %c0_17 = arith.constant 0 : index
    %45 = vector.load %arg9[%c0_16, %c0_17] : memref<1x128xf32, #tpu.memory_space<vmem>>, vector<1x128xf32>
    %cst_18 = arith.constant dense<0.000000e+00> : vector<128xf32>
    %46 = vector.multi_reduction <add>, %33, %cst_18 [0] : vector<64x128xf32> to vector<128xf32>
    %47 = vector.shape_cast %46 : vector<128xf32> to vector<1x128xf32>
    %48 = arith.addf %45, %47 : vector<1x128xf32>
    %c0_19 = arith.constant 0 : index
    %c0_20 = arith.constant 0 : index
    %49 = vector.load %arg9[%c0_19, %c0_20] : memref<1x128xf32, #tpu.memory_space<vmem>>, vector<1x128xf32>
    tpu.vector_store %arg9[%c0_19, %c0_20], %48 {strides = array<i32>} : memref<1x128xf32, #tpu.memory_space<vmem>>, vector<1x128xf32>,
    %cst_21 = arith.constant 1.200000e+01 : f32
    %50 = vector.broadcast %cst_21 : f32 to vector<64x128xf32>
    %51 = arith.cmpf ole, %44, %50 : vector<64x128xf32>
    %52 = arith.extui %51 : vector<64x128xi1> to vector<64x128xi32>
    %53 = arith.sitofp %52 : vector<64x128xi32> to vector<64x128xf32>
    %54 = arith.mulf %33, %53 : vector<64x128xf32>
    %cst_22 = arith.constant dense<0.000000e+00> : vector<64xf32>
    %55 = vector.multi_reduction <add>, %54, %cst_22 [1] : vector<64x128xf32> to vector<64xf32>
    %56 = vector.shape_cast %55 : vector<64xf32> to vector<64x1xf32>
    %cst_23 = arith.constant 0.000000e+00 : f32
    %57 = vector.broadcast %cst_23 : f32 to vector<64x1xf32>
    %58 = arith.cmpf ogt, %56, %57 : vector<64x1xf32>
    %cst_24 = arith.constant 0.000000e+00 : f32
    %59 = vector.broadcast %cst_24 : f32 to vector<64x1xf32>
    %60 = arith.select %58, %29, %59 : vector<64x1xi1>, vector<64x1xf32>
    %61 = arith.fptosi %60 : vector<64x1xf32> to vector<64x1xi32>
    %c0_25 = arith.constant 0 : index
    %c0_26 = arith.constant 0 : index
    %c0_27 = arith.constant 0 : index
    %62 = vector.load %arg8[%c0_25, %c0_26, %c0_27] : memref<1x64x1xi32, #tpu.memory_space<vmem>>, vector<1x64x1xi32>
    %63 = vector.shape_cast %62 : vector<1x64x1xi32> to vector<64x1xi32>
    %64 = vector.shape_cast %61 : vector<64x1xi32> to vector<1x64x1xi32>
    tpu.vector_store %arg8[%c0_25, %c0_26, %c0_27], %64 {strides = array<i32>} : memref<1x64x1xi32, #tpu.memory_space<vmem>>, vector<1x64x1xi32>,
    %65 = arith.truncf %4 : vector<64x128xf32> to vector<64x128xbf16>
    %cst_28 = arith.constant 0.000000e+00 : f32
    %66 = vector.broadcast %cst_28 : f32 to vector<64x128xf32>
    %c0_29 = arith.constant 0 : index
    %c0_30 = arith.constant 0 : index
    %c0_31 = arith.constant 0 : index
    %67 = vector.load %arg6[%c0_29, %c0_30, %c0_31] : memref<1x64x128xf32, #tpu.memory_space<vmem>>, vector<1x64x128xf32>
    %68 = vector.shape_cast %67 : vector<1x64x128xf32> to vector<64x128xf32>
    %69 = vector.shape_cast %66 : vector<64x128xf32> to vector<1x64x128xf32>
    tpu.vector_store %arg6[%c0_29, %c0_30, %c0_31], %69 {strides = array<i32>} : memref<1x64x128xf32, #tpu.memory_space<vmem>>, vector<1x64x128xf32>,
    %70 = vector.extract_strided_slice %54 {offsets = [0, 0], sizes = [64, 1], strides = [1, 1]} : vector<64x128xf32> to vector<64x1xf32>
    %71 = vector.shape_cast %70 : vector<64x1xf32> to vector<1x64x1xf32>
    %cst_32 = arith.constant dense<0.000000e+00> : vector<1xf32>
    %72 = vector.multi_reduction <add>, %71, %cst_32 [1, 2] : vector<1x64x1xf32> to vector<1xf32>
    %73 = vector.shape_cast %72 : vector<1xf32> to vector<1x1x1xf32>
    %74 = vector.extract %73[0, 0, 0] : f32 from vector<1x1x1xf32>
    %cst_33 = arith.constant 0.000000e+00 : f32
    %75 = arith.cmpf ogt, %74, %cst_33 : f32
    %76 = arith.extui %75 : i1 to i32
    %c0_i32_34 = arith.constant 0 : i32
    %77 = arith.cmpi ne, %76, %c0_i32_34 : i32
    scf.if %77 {
      %c0_62 = arith.constant 0 : index
      %c0_63 = arith.constant 0 : index
      %c0_64 = arith.constant 0 : index
      %144 = vector.load %arg4[%c0_62, %c0_63, %c0_64] : memref<8x128x256xbf16, #tpu.memory_space<vmem>>, vector<1x128x256xbf16>
      %145 = vector.shape_cast %144 : vector<1x128x256xbf16> to vector<128x256xbf16>
      %cst_65 = arith.constant dense<0.000000e+00> : vector<64x256xf32>
      %146 = tpu.matmul %65, %145, %cst_65 {dimension_numbers = #tpu.dot_dimension_numbers<[1], [0], [0], [1], [0, 0, 1, 1], [], []>} : vector<64x128xbf16>, vector<128x256xbf16>, vector<64x256xf32> -> vector<64x256xf32>
      %147 = arith.negf %146 : vector<64x256xf32>
      %148 = math.exp %147 : vector<64x256xf32>
      %cst_66 = arith.constant 1.000000e+00 : f32
      %149 = vector.broadcast %cst_66 : f32 to vector<64x256xf32>
      %150 = arith.addf %149, %148 : vector<64x256xf32>
      %151 = arith.divf %149, %150 : vector<64x256xf32>
      %152 = arith.mulf %146, %151 : vector<64x256xf32>
      %153 = arith.truncf %152 : vector<64x256xf32> to vector<64x256xbf16>
      %c0_67 = arith.constant 0 : index
      %c0_68 = arith.constant 0 : index
      %c0_69 = arith.constant 0 : index
      %154 = vector.load %arg5[%c0_67, %c0_68, %c0_69] : memref<8x256x128xbf16, #tpu.memory_space<vmem>>, vector<1x256x128xbf16>
      %155 = vector.shape_cast %154 : vector<1x256x128xbf16> to vector<256x128xbf16>
      %cst_70 = arith.constant dense<0.000000e+00> : vector<64x128xf32>
      %156 = tpu.matmul %153, %155, %cst_70 {dimension_numbers = #tpu.dot_dimension_numbers<[1], [0], [0], [1], [0, 0, 1, 1], [], []>} : vector<64x256xbf16>, vector<256x128xbf16>, vector<64x128xf32> -> vector<64x128xf32>
      %c0_71 = arith.constant 0 : index
      %c0_72 = arith.constant 0 : index
      %c0_73 = arith.constant 0 : index
      %157 = vector.load %arg6[%c0_71, %c0_72, %c0_73] : memref<1x64x128xf32, #tpu.memory_space<vmem>>, vector<1x64x128xf32>
      %158 = vector.shape_cast %157 : vector<1x64x128xf32> to vector<64x128xf32>
      %159 = vector.broadcast %70 : vector<64x1xf32> to vector<64x128xf32>
      %160 = arith.mulf %159, %156 : vector<64x128xf32>
      %161 = arith.addf %158, %160 : vector<64x128xf32>
      %c0_74 = arith.constant 0 : index
      %c0_75 = arith.constant 0 : index
      %c0_76 = arith.constant 0 : index
      %162 = vector.load %arg6[%c0_74, %c0_75, %c0_76] : memref<1x64x128xf32, #tpu.memory_space<vmem>>, vector<1x64x128xf32>
      %163 = vector.shape_cast %162 : vector<1x64x128xf32> to vector<64x128xf32>
      %164 = vector.shape_cast %161 : vector<64x128xf32> to vector<1x64x128xf32>
      tpu.vector_store %arg6[%c0_74, %c0_75, %c0_76], %164 {strides = array<i32>} : memref<1x64x128xf32, #tpu.memory_space<vmem>>, vector<1x64x128xf32>,
    } else {
    }
    %78 = vector.extract_strided_slice %54 {offsets = [0, 1], sizes = [64, 1], strides = [1, 1]} : vector<64x128xf32> to vector<64x1xf32>
    %79 = vector.shape_cast %78 : vector<64x1xf32> to vector<1x64x1xf32>
    %cst_35 = arith.constant dense<0.000000e+00> : vector<1xf32>
    %80 = vector.multi_reduction <add>, %79, %cst_35 [1, 2] : vector<1x64x1xf32> to vector<1xf32>
    %81 = vector.shape_cast %80 : vector<1xf32> to vector<1x1x1xf32>
    %82 = vector.extract %81[0, 0, 0] : f32 from vector<1x1x1xf32>
    %cst_36 = arith.constant 0.000000e+00 : f32
    %83 = arith.cmpf ogt, %82, %cst_36 : f32
    %84 = arith.extui %83 : i1 to i32
    %c0_i32_37 = arith.constant 0 : i32
    %85 = arith.cmpi ne, %84, %c0_i32_37 : i32
    scf.if %85 {
      %c1 = arith.constant 1 : index
      %c0_62 = arith.constant 0 : index
      %c0_63 = arith.constant 0 : index
      %144 = vector.load %arg4[%c1, %c0_62, %c0_63] : memref<8x128x256xbf16, #tpu.memory_space<vmem>>, vector<1x128x256xbf16>
      %145 = vector.shape_cast %144 : vector<1x128x256xbf16> to vector<128x256xbf16>
      %cst_64 = arith.constant dense<0.000000e+00> : vector<64x256xf32>
      %146 = tpu.matmul %65, %145, %cst_64 {dimension_numbers = #tpu.dot_dimension_numbers<[1], [0], [0], [1], [0, 0, 1, 1], [], []>} : vector<64x128xbf16>, vector<128x256xbf16>, vector<64x256xf32> -> vector<64x256xf32>
      %147 = arith.negf %146 : vector<64x256xf32>
      %148 = math.exp %147 : vector<64x256xf32>
      %cst_65 = arith.constant 1.000000e+00 : f32
      %149 = vector.broadcast %cst_65 : f32 to vector<64x256xf32>
      %150 = arith.addf %149, %148 : vector<64x256xf32>
      %151 = arith.divf %149, %150 : vector<64x256xf32>
      %152 = arith.mulf %146, %151 : vector<64x256xf32>
      %153 = arith.truncf %152 : vector<64x256xf32> to vector<64x256xbf16>
      %c1_66 = arith.constant 1 : index
      %c0_67 = arith.constant 0 : index
      %c0_68 = arith.constant 0 : index
      %154 = vector.load %arg5[%c1_66, %c0_67, %c0_68] : memref<8x256x128xbf16, #tpu.memory_space<vmem>>, vector<1x256x128xbf16>
      %155 = vector.shape_cast %154 : vector<1x256x128xbf16> to vector<256x128xbf16>
      %cst_69 = arith.constant dense<0.000000e+00> : vector<64x128xf32>
      %156 = tpu.matmul %153, %155, %cst_69 {dimension_numbers = #tpu.dot_dimension_numbers<[1], [0], [0], [1], [0, 0, 1, 1], [], []>} : vector<64x256xbf16>, vector<256x128xbf16>, vector<64x128xf32> -> vector<64x128xf32>
      %c0_70 = arith.constant 0 : index
      %c0_71 = arith.constant 0 : index
      %c0_72 = arith.constant 0 : index
      %157 = vector.load %arg6[%c0_70, %c0_71, %c0_72] : memref<1x64x128xf32, #tpu.memory_space<vmem>>, vector<1x64x128xf32>
      %158 = vector.shape_cast %157 : vector<1x64x128xf32> to vector<64x128xf32>
      %159 = vector.broadcast %78 : vector<64x1xf32> to vector<64x128xf32>
      %160 = arith.mulf %159, %156 : vector<64x128xf32>
      %161 = arith.addf %158, %160 : vector<64x128xf32>
      %c0_73 = arith.constant 0 : index
      %c0_74 = arith.constant 0 : index
      %c0_75 = arith.constant 0 : index
      %162 = vector.load %arg6[%c0_73, %c0_74, %c0_75] : memref<1x64x128xf32, #tpu.memory_space<vmem>>, vector<1x64x128xf32>
      %163 = vector.shape_cast %162 : vector<1x64x128xf32> to vector<64x128xf32>
      %164 = vector.shape_cast %161 : vector<64x128xf32> to vector<1x64x128xf32>
      tpu.vector_store %arg6[%c0_73, %c0_74, %c0_75], %164 {strides = array<i32>} : memref<1x64x128xf32, #tpu.memory_space<vmem>>, vector<1x64x128xf32>,
    } else {
    }
    %86 = vector.extract_strided_slice %54 {offsets = [0, 2], sizes = [64, 1], strides = [1, 1]} : vector<64x128xf32> to vector<64x1xf32>
    %87 = vector.shape_cast %86 : vector<64x1xf32> to vector<1x64x1xf32>
    %cst_38 = arith.constant dense<0.000000e+00> : vector<1xf32>
    %88 = vector.multi_reduction <add>, %87, %cst_38 [1, 2] : vector<1x64x1xf32> to vector<1xf32>
    %89 = vector.shape_cast %88 : vector<1xf32> to vector<1x1x1xf32>
    %90 = vector.extract %89[0, 0, 0] : f32 from vector<1x1x1xf32>
    %cst_39 = arith.constant 0.000000e+00 : f32
    %91 = arith.cmpf ogt, %90, %cst_39 : f32
    %92 = arith.extui %91 : i1 to i32
    %c0_i32_40 = arith.constant 0 : i32
    %93 = arith.cmpi ne, %92, %c0_i32_40 : i32
    scf.if %93 {
      %c2 = arith.constant 2 : index
      %c0_62 = arith.constant 0 : index
      %c0_63 = arith.constant 0 : index
      %144 = vector.load %arg4[%c2, %c0_62, %c0_63] : memref<8x128x256xbf16, #tpu.memory_space<vmem>>, vector<1x128x256xbf16>
      %145 = vector.shape_cast %144 : vector<1x128x256xbf16> to vector<128x256xbf16>
      %cst_64 = arith.constant dense<0.000000e+00> : vector<64x256xf32>
      %146 = tpu.matmul %65, %145, %cst_64 {dimension_numbers = #tpu.dot_dimension_numbers<[1], [0], [0], [1], [0, 0, 1, 1], [], []>} : vector<64x128xbf16>, vector<128x256xbf16>, vector<64x256xf32> -> vector<64x256xf32>
      %147 = arith.negf %146 : vector<64x256xf32>
      %148 = math.exp %147 : vector<64x256xf32>
      %cst_65 = arith.constant 1.000000e+00 : f32
      %149 = vector.broadcast %cst_65 : f32 to vector<64x256xf32>
      %150 = arith.addf %149, %148 : vector<64x256xf32>
      %151 = arith.divf %149, %150 : vector<64x256xf32>
      %152 = arith.mulf %146, %151 : vector<64x256xf32>
      %153 = arith.truncf %152 : vector<64x256xf32> to vector<64x256xbf16>
      %c2_66 = arith.constant 2 : index
      %c0_67 = arith.constant 0 : index
      %c0_68 = arith.constant 0 : index
      %154 = vector.load %arg5[%c2_66, %c0_67, %c0_68] : memref<8x256x128xbf16, #tpu.memory_space<vmem>>, vector<1x256x128xbf16>
      %155 = vector.shape_cast %154 : vector<1x256x128xbf16> to vector<256x128xbf16>
      %cst_69 = arith.constant dense<0.000000e+00> : vector<64x128xf32>
      %156 = tpu.matmul %153, %155, %cst_69 {dimension_numbers = #tpu.dot_dimension_numbers<[1], [0], [0], [1], [0, 0, 1, 1], [], []>} : vector<64x256xbf16>, vector<256x128xbf16>, vector<64x128xf32> -> vector<64x128xf32>
      %c0_70 = arith.constant 0 : index
      %c0_71 = arith.constant 0 : index
      %c0_72 = arith.constant 0 : index
      %157 = vector.load %arg6[%c0_70, %c0_71, %c0_72] : memref<1x64x128xf32, #tpu.memory_space<vmem>>, vector<1x64x128xf32>
      %158 = vector.shape_cast %157 : vector<1x64x128xf32> to vector<64x128xf32>
      %159 = vector.broadcast %86 : vector<64x1xf32> to vector<64x128xf32>
      %160 = arith.mulf %159, %156 : vector<64x128xf32>
      %161 = arith.addf %158, %160 : vector<64x128xf32>
      %c0_73 = arith.constant 0 : index
      %c0_74 = arith.constant 0 : index
      %c0_75 = arith.constant 0 : index
      %162 = vector.load %arg6[%c0_73, %c0_74, %c0_75] : memref<1x64x128xf32, #tpu.memory_space<vmem>>, vector<1x64x128xf32>
      %163 = vector.shape_cast %162 : vector<1x64x128xf32> to vector<64x128xf32>
      %164 = vector.shape_cast %161 : vector<64x128xf32> to vector<1x64x128xf32>
      tpu.vector_store %arg6[%c0_73, %c0_74, %c0_75], %164 {strides = array<i32>} : memref<1x64x128xf32, #tpu.memory_space<vmem>>, vector<1x64x128xf32>,
    } else {
    }
    %94 = vector.extract_strided_slice %54 {offsets = [0, 3], sizes = [64, 1], strides = [1, 1]} : vector<64x128xf32> to vector<64x1xf32>
    %95 = vector.shape_cast %94 : vector<64x1xf32> to vector<1x64x1xf32>
    %cst_41 = arith.constant dense<0.000000e+00> : vector<1xf32>
    %96 = vector.multi_reduction <add>, %95, %cst_41 [1, 2] : vector<1x64x1xf32> to vector<1xf32>
    %97 = vector.shape_cast %96 : vector<1xf32> to vector<1x1x1xf32>
    %98 = vector.extract %97[0, 0, 0] : f32 from vector<1x1x1xf32>
    %cst_42 = arith.constant 0.000000e+00 : f32
    %99 = arith.cmpf ogt, %98, %cst_42 : f32
    %100 = arith.extui %99 : i1 to i32
    %c0_i32_43 = arith.constant 0 : i32
    %101 = arith.cmpi ne, %100, %c0_i32_43 : i32
    scf.if %101 {
      %c3 = arith.constant 3 : index
      %c0_62 = arith.constant 0 : index
      %c0_63 = arith.constant 0 : index
      %144 = vector.load %arg4[%c3, %c0_62, %c0_63] : memref<8x128x256xbf16, #tpu.memory_space<vmem>>, vector<1x128x256xbf16>
      %145 = vector.shape_cast %144 : vector<1x128x256xbf16> to vector<128x256xbf16>
      %cst_64 = arith.constant dense<0.000000e+00> : vector<64x256xf32>
      %146 = tpu.matmul %65, %145, %cst_64 {dimension_numbers = #tpu.dot_dimension_numbers<[1], [0], [0], [1], [0, 0, 1, 1], [], []>} : vector<64x128xbf16>, vector<128x256xbf16>, vector<64x256xf32> -> vector<64x256xf32>
      %147 = arith.negf %146 : vector<64x256xf32>
      %148 = math.exp %147 : vector<64x256xf32>
      %cst_65 = arith.constant 1.000000e+00 : f32
      %149 = vector.broadcast %cst_65 : f32 to vector<64x256xf32>
      %150 = arith.addf %149, %148 : vector<64x256xf32>
      %151 = arith.divf %149, %150 : vector<64x256xf32>
      %152 = arith.mulf %146, %151 : vector<64x256xf32>
      %153 = arith.truncf %152 : vector<64x256xf32> to vector<64x256xbf16>
      %c3_66 = arith.constant 3 : index
      %c0_67 = arith.constant 0 : index
      %c0_68 = arith.constant 0 : index
      %154 = vector.load %arg5[%c3_66, %c0_67, %c0_68] : memref<8x256x128xbf16, #tpu.memory_space<vmem>>, vector<1x256x128xbf16>
      %155 = vector.shape_cast %154 : vector<1x256x128xbf16> to vector<256x128xbf16>
      %cst_69 = arith.constant dense<0.000000e+00> : vector<64x128xf32>
      %156 = tpu.matmul %153, %155, %cst_69 {dimension_numbers = #tpu.dot_dimension_numbers<[1], [0], [0], [1], [0, 0, 1, 1], [], []>} : vector<64x256xbf16>, vector<256x128xbf16>, vector<64x128xf32> -> vector<64x128xf32>
      %c0_70 = arith.constant 0 : index
      %c0_71 = arith.constant 0 : index
      %c0_72 = arith.constant 0 : index
      %157 = vector.load %arg6[%c0_70, %c0_71, %c0_72] : memref<1x64x128xf32, #tpu.memory_space<vmem>>, vector<1x64x128xf32>
      %158 = vector.shape_cast %157 : vector<1x64x128xf32> to vector<64x128xf32>
      %159 = vector.broadcast %94 : vector<64x1xf32> to vector<64x128xf32>
      %160 = arith.mulf %159, %156 : vector<64x128xf32>
      %161 = arith.addf %158, %160 : vector<64x128xf32>
      %c0_73 = arith.constant 0 : index
      %c0_74 = arith.constant 0 : index
      %c0_75 = arith.constant 0 : index
      %162 = vector.load %arg6[%c0_73, %c0_74, %c0_75] : memref<1x64x128xf32, #tpu.memory_space<vmem>>, vector<1x64x128xf32>
      %163 = vector.shape_cast %162 : vector<1x64x128xf32> to vector<64x128xf32>
      %164 = vector.shape_cast %161 : vector<64x128xf32> to vector<1x64x128xf32>
      tpu.vector_store %arg6[%c0_73, %c0_74, %c0_75], %164 {strides = array<i32>} : memref<1x64x128xf32, #tpu.memory_space<vmem>>, vector<1x64x128xf32>,
    } else {
    }
    %102 = vector.extract_strided_slice %54 {offsets = [0, 4], sizes = [64, 1], strides = [1, 1]} : vector<64x128xf32> to vector<64x1xf32>
    %103 = vector.shape_cast %102 : vector<64x1xf32> to vector<1x64x1xf32>
    %cst_44 = arith.constant dense<0.000000e+00> : vector<1xf32>
    %104 = vector.multi_reduction <add>, %103, %cst_44 [1, 2] : vector<1x64x1xf32> to vector<1xf32>
    %105 = vector.shape_cast %104 : vector<1xf32> to vector<1x1x1xf32>
    %106 = vector.extract %105[0, 0, 0] : f32 from vector<1x1x1xf32>
    %cst_45 = arith.constant 0.000000e+00 : f32
    %107 = arith.cmpf ogt, %106, %cst_45 : f32
    %108 = arith.extui %107 : i1 to i32
    %c0_i32_46 = arith.constant 0 : i32
    %109 = arith.cmpi ne, %108, %c0_i32_46 : i32
    scf.if %109 {
      %c4 = arith.constant 4 : index
      %c0_62 = arith.constant 0 : index
      %c0_63 = arith.constant 0 : index
      %144 = vector.load %arg4[%c4, %c0_62, %c0_63] : memref<8x128x256xbf16, #tpu.memory_space<vmem>>, vector<1x128x256xbf16>
      %145 = vector.shape_cast %144 : vector<1x128x256xbf16> to vector<128x256xbf16>
      %cst_64 = arith.constant dense<0.000000e+00> : vector<64x256xf32>
      %146 = tpu.matmul %65, %145, %cst_64 {dimension_numbers = #tpu.dot_dimension_numbers<[1], [0], [0], [1], [0, 0, 1, 1], [], []>} : vector<64x128xbf16>, vector<128x256xbf16>, vector<64x256xf32> -> vector<64x256xf32>
      %147 = arith.negf %146 : vector<64x256xf32>
      %148 = math.exp %147 : vector<64x256xf32>
      %cst_65 = arith.constant 1.000000e+00 : f32
      %149 = vector.broadcast %cst_65 : f32 to vector<64x256xf32>
      %150 = arith.addf %149, %148 : vector<64x256xf32>
      %151 = arith.divf %149, %150 : vector<64x256xf32>
      %152 = arith.mulf %146, %151 : vector<64x256xf32>
      %153 = arith.truncf %152 : vector<64x256xf32> to vector<64x256xbf16>
      %c4_66 = arith.constant 4 : index
      %c0_67 = arith.constant 0 : index
      %c0_68 = arith.constant 0 : index
      %154 = vector.load %arg5[%c4_66, %c0_67, %c0_68] : memref<8x256x128xbf16, #tpu.memory_space<vmem>>, vector<1x256x128xbf16>
      %155 = vector.shape_cast %154 : vector<1x256x128xbf16> to vector<256x128xbf16>
      %cst_69 = arith.constant dense<0.000000e+00> : vector<64x128xf32>
      %156 = tpu.matmul %153, %155, %cst_69 {dimension_numbers = #tpu.dot_dimension_numbers<[1], [0], [0], [1], [0, 0, 1, 1], [], []>} : vector<64x256xbf16>, vector<256x128xbf16>, vector<64x128xf32> -> vector<64x128xf32>
      %c0_70 = arith.constant 0 : index
      %c0_71 = arith.constant 0 : index
      %c0_72 = arith.constant 0 : index
      %157 = vector.load %arg6[%c0_70, %c0_71, %c0_72] : memref<1x64x128xf32, #tpu.memory_space<vmem>>, vector<1x64x128xf32>
      %158 = vector.shape_cast %157 : vector<1x64x128xf32> to vector<64x128xf32>
      %159 = vector.broadcast %102 : vector<64x1xf32> to vector<64x128xf32>
      %160 = arith.mulf %159, %156 : vector<64x128xf32>
      %161 = arith.addf %158, %160 : vector<64x128xf32>
      %c0_73 = arith.constant 0 : index
      %c0_74 = arith.constant 0 : index
      %c0_75 = arith.constant 0 : index
      %162 = vector.load %arg6[%c0_73, %c0_74, %c0_75] : memref<1x64x128xf32, #tpu.memory_space<vmem>>, vector<1x64x128xf32>
      %163 = vector.shape_cast %162 : vector<1x64x128xf32> to vector<64x128xf32>
      %164 = vector.shape_cast %161 : vector<64x128xf32> to vector<1x64x128xf32>
      tpu.vector_store %arg6[%c0_73, %c0_74, %c0_75], %164 {strides = array<i32>} : memref<1x64x128xf32, #tpu.memory_space<vmem>>, vector<1x64x128xf32>,
    } else {
    }
    %110 = vector.extract_strided_slice %54 {offsets = [0, 5], sizes = [64, 1], strides = [1, 1]} : vector<64x128xf32> to vector<64x1xf32>
    %111 = vector.shape_cast %110 : vector<64x1xf32> to vector<1x64x1xf32>
    %cst_47 = arith.constant dense<0.000000e+00> : vector<1xf32>
    %112 = vector.multi_reduction <add>, %111, %cst_47 [1, 2] : vector<1x64x1xf32> to vector<1xf32>
    %113 = vector.shape_cast %112 : vector<1xf32> to vector<1x1x1xf32>
    %114 = vector.extract %113[0, 0, 0] : f32 from vector<1x1x1xf32>
    %cst_48 = arith.constant 0.000000e+00 : f32
    %115 = arith.cmpf ogt, %114, %cst_48 : f32
    %116 = arith.extui %115 : i1 to i32
    %c0_i32_49 = arith.constant 0 : i32
    %117 = arith.cmpi ne, %116, %c0_i32_49 : i32
    scf.if %117 {
      %c5 = arith.constant 5 : index
      %c0_62 = arith.constant 0 : index
      %c0_63 = arith.constant 0 : index
      %144 = vector.load %arg4[%c5, %c0_62, %c0_63] : memref<8x128x256xbf16, #tpu.memory_space<vmem>>, vector<1x128x256xbf16>
      %145 = vector.shape_cast %144 : vector<1x128x256xbf16> to vector<128x256xbf16>
      %cst_64 = arith.constant dense<0.000000e+00> : vector<64x256xf32>
      %146 = tpu.matmul %65, %145, %cst_64 {dimension_numbers = #tpu.dot_dimension_numbers<[1], [0], [0], [1], [0, 0, 1, 1], [], []>} : vector<64x128xbf16>, vector<128x256xbf16>, vector<64x256xf32> -> vector<64x256xf32>
      %147 = arith.negf %146 : vector<64x256xf32>
      %148 = math.exp %147 : vector<64x256xf32>
      %cst_65 = arith.constant 1.000000e+00 : f32
      %149 = vector.broadcast %cst_65 : f32 to vector<64x256xf32>
      %150 = arith.addf %149, %148 : vector<64x256xf32>
      %151 = arith.divf %149, %150 : vector<64x256xf32>
      %152 = arith.mulf %146, %151 : vector<64x256xf32>
      %153 = arith.truncf %152 : vector<64x256xf32> to vector<64x256xbf16>
      %c5_66 = arith.constant 5 : index
      %c0_67 = arith.constant 0 : index
      %c0_68 = arith.constant 0 : index
      %154 = vector.load %arg5[%c5_66, %c0_67, %c0_68] : memref<8x256x128xbf16, #tpu.memory_space<vmem>>, vector<1x256x128xbf16>
      %155 = vector.shape_cast %154 : vector<1x256x128xbf16> to vector<256x128xbf16>
      %cst_69 = arith.constant dense<0.000000e+00> : vector<64x128xf32>
      %156 = tpu.matmul %153, %155, %cst_69 {dimension_numbers = #tpu.dot_dimension_numbers<[1], [0], [0], [1], [0, 0, 1, 1], [], []>} : vector<64x256xbf16>, vector<256x128xbf16>, vector<64x128xf32> -> vector<64x128xf32>
      %c0_70 = arith.constant 0 : index
      %c0_71 = arith.constant 0 : index
      %c0_72 = arith.constant 0 : index
      %157 = vector.load %arg6[%c0_70, %c0_71, %c0_72] : memref<1x64x128xf32, #tpu.memory_space<vmem>>, vector<1x64x128xf32>
      %158 = vector.shape_cast %157 : vector<1x64x128xf32> to vector<64x128xf32>
      %159 = vector.broadcast %110 : vector<64x1xf32> to vector<64x128xf32>
      %160 = arith.mulf %159, %156 : vector<64x128xf32>
      %161 = arith.addf %158, %160 : vector<64x128xf32>
      %c0_73 = arith.constant 0 : index
      %c0_74 = arith.constant 0 : index
      %c0_75 = arith.constant 0 : index
      %162 = vector.load %arg6[%c0_73, %c0_74, %c0_75] : memref<1x64x128xf32, #tpu.memory_space<vmem>>, vector<1x64x128xf32>
      %163 = vector.shape_cast %162 : vector<1x64x128xf32> to vector<64x128xf32>
      %164 = vector.shape_cast %161 : vector<64x128xf32> to vector<1x64x128xf32>
      tpu.vector_store %arg6[%c0_73, %c0_74, %c0_75], %164 {strides = array<i32>} : memref<1x64x128xf32, #tpu.memory_space<vmem>>, vector<1x64x128xf32>,
    } else {
    }
    %118 = vector.extract_strided_slice %54 {offsets = [0, 6], sizes = [64, 1], strides = [1, 1]} : vector<64x128xf32> to vector<64x1xf32>
    %119 = vector.shape_cast %118 : vector<64x1xf32> to vector<1x64x1xf32>
    %cst_50 = arith.constant dense<0.000000e+00> : vector<1xf32>
    %120 = vector.multi_reduction <add>, %119, %cst_50 [1, 2] : vector<1x64x1xf32> to vector<1xf32>
    %121 = vector.shape_cast %120 : vector<1xf32> to vector<1x1x1xf32>
    %122 = vector.extract %121[0, 0, 0] : f32 from vector<1x1x1xf32>
    %cst_51 = arith.constant 0.000000e+00 : f32
    %123 = arith.cmpf ogt, %122, %cst_51 : f32
    %124 = arith.extui %123 : i1 to i32
    %c0_i32_52 = arith.constant 0 : i32
    %125 = arith.cmpi ne, %124, %c0_i32_52 : i32
    scf.if %125 {
      %c6 = arith.constant 6 : index
      %c0_62 = arith.constant 0 : index
      %c0_63 = arith.constant 0 : index
      %144 = vector.load %arg4[%c6, %c0_62, %c0_63] : memref<8x128x256xbf16, #tpu.memory_space<vmem>>, vector<1x128x256xbf16>
      %145 = vector.shape_cast %144 : vector<1x128x256xbf16> to vector<128x256xbf16>
      %cst_64 = arith.constant dense<0.000000e+00> : vector<64x256xf32>
      %146 = tpu.matmul %65, %145, %cst_64 {dimension_numbers = #tpu.dot_dimension_numbers<[1], [0], [0], [1], [0, 0, 1, 1], [], []>} : vector<64x128xbf16>, vector<128x256xbf16>, vector<64x256xf32> -> vector<64x256xf32>
      %147 = arith.negf %146 : vector<64x256xf32>
      %148 = math.exp %147 : vector<64x256xf32>
      %cst_65 = arith.constant 1.000000e+00 : f32
      %149 = vector.broadcast %cst_65 : f32 to vector<64x256xf32>
      %150 = arith.addf %149, %148 : vector<64x256xf32>
      %151 = arith.divf %149, %150 : vector<64x256xf32>
      %152 = arith.mulf %146, %151 : vector<64x256xf32>
      %153 = arith.truncf %152 : vector<64x256xf32> to vector<64x256xbf16>
      %c6_66 = arith.constant 6 : index
      %c0_67 = arith.constant 0 : index
      %c0_68 = arith.constant 0 : index
      %154 = vector.load %arg5[%c6_66, %c0_67, %c0_68] : memref<8x256x128xbf16, #tpu.memory_space<vmem>>, vector<1x256x128xbf16>
      %155 = vector.shape_cast %154 : vector<1x256x128xbf16> to vector<256x128xbf16>
      %cst_69 = arith.constant dense<0.000000e+00> : vector<64x128xf32>
      %156 = tpu.matmul %153, %155, %cst_69 {dimension_numbers = #tpu.dot_dimension_numbers<[1], [0], [0], [1], [0, 0, 1, 1], [], []>} : vector<64x256xbf16>, vector<256x128xbf16>, vector<64x128xf32> -> vector<64x128xf32>
      %c0_70 = arith.constant 0 : index
      %c0_71 = arith.constant 0 : index
      %c0_72 = arith.constant 0 : index
      %157 = vector.load %arg6[%c0_70, %c0_71, %c0_72] : memref<1x64x128xf32, #tpu.memory_space<vmem>>, vector<1x64x128xf32>
      %158 = vector.shape_cast %157 : vector<1x64x128xf32> to vector<64x128xf32>
      %159 = vector.broadcast %118 : vector<64x1xf32> to vector<64x128xf32>
      %160 = arith.mulf %159, %156 : vector<64x128xf32>
      %161 = arith.addf %158, %160 : vector<64x128xf32>
      %c0_73 = arith.constant 0 : index
      %c0_74 = arith.constant 0 : index
      %c0_75 = arith.constant 0 : index
      %162 = vector.load %arg6[%c0_73, %c0_74, %c0_75] : memref<1x64x128xf32, #tpu.memory_space<vmem>>, vector<1x64x128xf32>
      %163 = vector.shape_cast %162 : vector<1x64x128xf32> to vector<64x128xf32>
      %164 = vector.shape_cast %161 : vector<64x128xf32> to vector<1x64x128xf32>
      tpu.vector_store %arg6[%c0_73, %c0_74, %c0_75], %164 {strides = array<i32>} : memref<1x64x128xf32, #tpu.memory_space<vmem>>, vector<1x64x128xf32>,
    } else {
    }
    %126 = vector.extract_strided_slice %54 {offsets = [0, 7], sizes = [64, 1], strides = [1, 1]} : vector<64x128xf32> to vector<64x1xf32>
    %127 = vector.shape_cast %126 : vector<64x1xf32> to vector<1x64x1xf32>
    %cst_53 = arith.constant dense<0.000000e+00> : vector<1xf32>
    %128 = vector.multi_reduction <add>, %127, %cst_53 [1, 2] : vector<1x64x1xf32> to vector<1xf32>
    %129 = vector.shape_cast %128 : vector<1xf32> to vector<1x1x1xf32>
    %130 = vector.extract %129[0, 0, 0] : f32 from vector<1x1x1xf32>
    %cst_54 = arith.constant 0.000000e+00 : f32
    %131 = arith.cmpf ogt, %130, %cst_54 : f32
    %132 = arith.extui %131 : i1 to i32
    %c0_i32_55 = arith.constant 0 : i32
    %133 = arith.cmpi ne, %132, %c0_i32_55 : i32
    scf.if %133 {
      %c7 = arith.constant 7 : index
      %c0_62 = arith.constant 0 : index
      %c0_63 = arith.constant 0 : index
      %144 = vector.load %arg4[%c7, %c0_62, %c0_63] : memref<8x128x256xbf16, #tpu.memory_space<vmem>>, vector<1x128x256xbf16>
      %145 = vector.shape_cast %144 : vector<1x128x256xbf16> to vector<128x256xbf16>
      %cst_64 = arith.constant dense<0.000000e+00> : vector<64x256xf32>
      %146 = tpu.matmul %65, %145, %cst_64 {dimension_numbers = #tpu.dot_dimension_numbers<[1], [0], [0], [1], [0, 0, 1, 1], [], []>} : vector<64x128xbf16>, vector<128x256xbf16>, vector<64x256xf32> -> vector<64x256xf32>
      %147 = arith.negf %146 : vector<64x256xf32>
      %148 = math.exp %147 : vector<64x256xf32>
      %cst_65 = arith.constant 1.000000e+00 : f32
      %149 = vector.broadcast %cst_65 : f32 to vector<64x256xf32>
      %150 = arith.addf %149, %148 : vector<64x256xf32>
      %151 = arith.divf %149, %150 : vector<64x256xf32>
      %152 = arith.mulf %146, %151 : vector<64x256xf32>
      %153 = arith.truncf %152 : vector<64x256xf32> to vector<64x256xbf16>
      %c7_66 = arith.constant 7 : index
      %c0_67 = arith.constant 0 : index
      %c0_68 = arith.constant 0 : index
      %154 = vector.load %arg5[%c7_66, %c0_67, %c0_68] : memref<8x256x128xbf16, #tpu.memory_space<vmem>>, vector<1x256x128xbf16>
      %155 = vector.shape_cast %154 : vector<1x256x128xbf16> to vector<256x128xbf16>
      %cst_69 = arith.constant dense<0.000000e+00> : vector<64x128xf32>
      %156 = tpu.matmul %153, %155, %cst_69 {dimension_numbers = #tpu.dot_dimension_numbers<[1], [0], [0], [1], [0, 0, 1, 1], [], []>} : vector<64x256xbf16>, vector<256x128xbf16>, vector<64x128xf32> -> vector<64x128xf32>
      %c0_70 = arith.constant 0 : index
      %c0_71 = arith.constant 0 : index
      %c0_72 = arith.constant 0 : index
      %157 = vector.load %arg6[%c0_70, %c0_71, %c0_72] : memref<1x64x128xf32, #tpu.memory_space<vmem>>, vector<1x64x128xf32>
      %158 = vector.shape_cast %157 : vector<1x64x128xf32> to vector<64x128xf32>
      %159 = vector.broadcast %126 : vector<64x1xf32> to vector<64x128xf32>
      %160 = arith.mulf %159, %156 : vector<64x128xf32>
      %161 = arith.addf %158, %160 : vector<64x128xf32>
      %c0_73 = arith.constant 0 : index
      %c0_74 = arith.constant 0 : index
      %c0_75 = arith.constant 0 : index
      %162 = vector.load %arg6[%c0_73, %c0_74, %c0_75] : memref<1x64x128xf32, #tpu.memory_space<vmem>>, vector<1x64x128xf32>
      %163 = vector.shape_cast %162 : vector<1x64x128xf32> to vector<64x128xf32>
      %164 = vector.shape_cast %161 : vector<64x128xf32> to vector<1x64x128xf32>
      tpu.vector_store %arg6[%c0_73, %c0_74, %c0_75], %164 {strides = array<i32>} : memref<1x64x128xf32, #tpu.memory_space<vmem>>, vector<1x64x128xf32>,
    } else {
    }
    %c0_56 = arith.constant 0 : index
    %c0_57 = arith.constant 0 : index
    %c0_58 = arith.constant 0 : index
    %134 = vector.load %arg6[%c0_56, %c0_57, %c0_58] : memref<1x64x128xf32, #tpu.memory_space<vmem>>, vector<1x64x128xf32>
    %135 = vector.shape_cast %134 : vector<1x64x128xf32> to vector<64x128xf32>
    %136 = vector.shape_cast %58 : vector<64x1xi1> to vector<64x1xi1>
    %137 = vector.broadcast %136 : vector<64x1xi1> to vector<64x128xi1>
    %138 = arith.select %137, %135, %4 : vector<64x128xi1>, vector<64x128xf32>
    %139 = vector.broadcast %22 : vector<64x1xf32> to vector<64x128xf32>
    %140 = arith.mulf %139, %138 : vector<64x128xf32>
    %c0_59 = arith.constant 0 : index
    %c0_60 = arith.constant 0 : index
    %c0_61 = arith.constant 0 : index
    %141 = vector.load %arg6[%c0_59, %c0_60, %c0_61] : memref<1x64x128xf32, #tpu.memory_space<vmem>>, vector<1x64x128xf32>
    %142 = vector.shape_cast %141 : vector<1x64x128xf32> to vector<64x128xf32>
    %143 = vector.shape_cast %140 : vector<64x128xf32> to vector<1x64x128xf32>
    tpu.vector_store %arg6[%c0_59, %c0_60, %c0_61], %143 {strides = array<i32>} : memref<1x64x128xf32, #tpu.memory_space<vmem>>, vector<1x64x128xf32>,
    return
  }
  func.func @transform_0(%arg0: i32, %arg1: i32) -> (i32, i32, i32) {
    %c0_i32 = arith.constant 0 : i32
    %c0_i32_0 = arith.constant 0 : i32
    return %arg0, %arg1, %c0_i32 : i32, i32, i32
  }
  func.func @transform_1(%arg0: i32, %arg1: i32) -> (i32, i32) {
    %c0_i32 = arith.constant 0 : i32
    %c0_i32_0 = arith.constant 0 : i32
    %c0_i32_1 = arith.constant 0 : i32
    return %c0_i32, %c0_i32_0 : i32, i32
  }
  func.func @transform_2(%arg0: i32, %arg1: i32) -> (i32, i32, i32) {
    %c0_i32 = arith.constant 0 : i32
    %c0_i32_0 = arith.constant 0 : i32
    %c0_i32_1 = arith.constant 0 : i32
    %c0_i32_2 = arith.constant 0 : i32
    return %c0_i32, %c0_i32_0, %c0_i32_1 : i32, i32, i32
  }
  func.func @transform_3(%arg0: i32, %arg1: i32) -> (i32, i32, i32) {
    %c0_i32 = arith.constant 0 : i32
    %c0_i32_0 = arith.constant 0 : i32
    %c0_i32_1 = arith.constant 0 : i32
    %c0_i32_2 = arith.constant 0 : i32
    return %c0_i32, %c0_i32_0, %c0_i32_1 : i32, i32, i32
  }
  func.func @transform_4(%arg0: i32, %arg1: i32) -> (i32, i32, i32) {
    %c0_i32 = arith.constant 0 : i32
    %c0_i32_0 = arith.constant 0 : i32
    return %arg0, %arg1, %c0_i32 : i32, i32, i32
  }
  func.func @transform_5(%arg0: i32, %arg1: i32) -> (i32, i32, i32) {
    %c0_i32 = arith.constant 0 : i32
    %c0_i32_0 = arith.constant 0 : i32
    return %arg0, %arg1, %c0_i32 : i32, i32, i32
  }
  func.func @transform_6(%arg0: i32, %arg1: i32) -> (i32, i32, i32) {
    %c0_i32 = arith.constant 0 : i32
    %c0_i32_0 = arith.constant 0 : i32
    return %arg0, %arg1, %c0_i32 : i32, i32, i32
  }
}

</mosaic_0001>

<llo_original>
// kernel: tpu_custom_call.1
$region0: #{tpu_custom_call.1}
  #allocation0 [shape = 'u32[]', space=smem, size = 0x4, offset = 0x4, fixed_abs, tag = 'smem constant byte address 0x4 - core index']
  #allocation1 [shape = 'u32[144,128]{1,0:T(1,128)}', space=vmem, size = 0x12000, scoped, tag = 'internal scratch']
  #allocation2 [shape = 'f32[1,128]{1,0:T(1,128)}', space=vmem, size = 0x200, scoped, tag = 'scratch operand']
  %s0 = inlined_call_operand.hbm [shape: f32[2,128,128], index: 0, kind: input, shape index: {}]
  %s1 = inlined_call_operand.hbm [shape: f32[128,128], index: 1, kind: input, shape index: {}]
  %s2 = inlined_call_operand.hbm [shape: bf16[8,128,256], index: 2, kind: input, shape index: {}]
  %s3 = inlined_call_operand.hbm [shape: bf16[8,256,128], index: 3, kind: input, shape index: {}]
  %s4 = inlined_call_operand.hbm [shape: f32[2,128,128], index: 4, kind: output, shape index: {0}]
  %s5 = inlined_call_operand.hbm [shape: f32[2,128,128], index: 5, kind: output, shape index: {1}]
  %s6 = inlined_call_operand.vmem [shape: s32[2,128,1], index: 6, kind: output, shape index: {2}]
  %7 = xla_tuple %s4, %s5, %s6
  %s8 = sld [smem:[#allocation0]]
  $region117: #{tpu_custom_call.1} parent=0
    _
  %s10 = ssub.s32 1, %s8
  %s11 = scalar_select 0, %s10, %s8
  $region1: #{tpu_custom_call.1} parent=0
    #allocation3 [shape = 'u8[65536]{0}', space=vmem, size = 0x10000, scoped, tag = 'input window, operand 0']
    #allocation4 [shape = 's32[2]{0}', space=sflag, size = 0x8, scoped, tag = 'scoped memory for tpu_custom_call.1']
    #allocation5 [shape = 's32[2]{0}', space=sflag, size = 0x8, scoped, tag = 'scoped memory for tpu_custom_call.1']
    #allocation6 [shape = 'u8[65536]{0}', space=vmem, size = 0x10000, scoped, tag = 'input window, operand 1, single buffered']
    #allocation7 [shape = 's32[1]{0}', space=sflag, size = 0x4, scoped, tag = 'scoped memory for tpu_custom_call.1']
    #allocation8 [shape = 'u8[524288]{0}', space=vmem, size = 0x80000, scoped, tag = 'input window, operand 2, single buffered']
    #allocation9 [shape = 'u8[524288]{0}', space=vmem, size = 0x80000, scoped, tag = 'input window, operand 3, single buffered']
    #allocation10 [shape = 's32[1]{0}', space=sflag, size = 0x4, scoped, tag = 'scoped memory for tpu_custom_call.1']
    #allocation11 [shape = 'u8[65536]{0}', space=vmem, size = 0x10000, scoped, tag = 'output window, operand 0']
    #allocation12 [shape = 'u8[65536]{0}', space=vmem, size = 0x10000, scoped, tag = 'output window, operand 1']
    #allocation13 [shape = 's32[2]{0}', space=sflag, size = 0x8, scoped, tag = 'scoped memory for tpu_custom_call.1']
    %12 = vsyncpa [#allocation4], 0
    %s13 = scalar_lea.sflag [#allocation4], 1
    %14 = vsyncpa %s13, 0
    %15 = vsyncpa [#allocation7], 0
    %16 = vsyncpa [#allocation10], 0
    %17 = vsyncpa [#allocation5], 0
    %s18 = scalar_lea.sflag [#allocation5], 1
    %19 = vsyncpa %s18, 0
    %20 = vsyncpa [#allocation13], 0
    %s21 = scalar_lea.sflag [#allocation13], 1
    %22 = vsyncpa %s21, 0
    loop: start=0, step=1, limit=6
    $region2: #{tpu_custom_call.1} parent=1 // loop_pre_header
      _
    $region3: #{tpu_custom_call.1} parent=1 // loop_header
      %s24 = sphi 0, %s28
      %p25 = scmp.ge.s32.totalorder %s24, 6
      %s31 = sphi 0, %s43
      %s32 = sphi 0, %s39
      %s33 = sphi 0, %s31
      %s34 = sphi 0, %s32
      %s35 = sphi 0, %s33
      %s36 = sphi 0, %s34
      %s48 = sphi 0, %s50
      %s51 = sphi 0, %s48
      %s52 = sphi 0, %s51
      %s68 = sphi 0, %s52
      %s72 = sphi 0, %s72
      %s74 = sphi 0, %s72
      %s75 = sphi 0, %s74
      %s89 = sphi 0, %s75
      %s93 = sphi 0, %s93
      %s95 = sphi 0, %s93
      %s96 = sphi 0, %s95
      %s110 = sphi 0, %s96
      %s114 = sphi 0, %s114
      %s116 = sphi 0, %s114
      %s117 = sphi 0, %s116
      %s131 = sphi 0, %s117
      %s139 = sphi 0, %s141
      %s142 = sphi 0, %s139
      %s143 = sphi 0, %s142
      %s159 = sphi 0, %s143
      %s167 = sphi 0, %s169
      %s170 = sphi 0, %s167
      %s171 = sphi 0, %s170
      %s187 = sphi 0, %s171
      %s195 = sphi 0, %s197
      %s198 = sphi 0, %s195
      %s199 = sphi 0, %s198
      %s215 = sphi 0, %s199
    $region4: #{tpu_custom_call.1} parent=1 // loop_header_branch
      %27 = sbr.rel (%p25) target = $region8
    $region5: #{tpu_custom_call.1} parent=1 // loop_body
      %s29 = ssub.s32 %s24, 1
      %s30 = ssub.s32 %s24, 2
      %s37 = sadd.s32 1, %s32
      %p38 = scmp.ge.s32.totalorder %s37, 2
      %s39 = scalar_select %p38, 0, %s37
      %s40 = sadd.s32 1, %s31
      %s41 = scalar_select %p38, %s40, %s31
      %p42 = scmp.ge.s32.totalorder %s41, 2
      %s43 = scalar_select %p42, 0, %s41
      %s44 = ssub.s32 %s31, %s43
      %s45 = ssub.s32 %s32, %s39
      %s46 = sor.u32 %s44, %s45
      %p47 = scmp.eq.s32.totalorder %s46, 0
      %s49 = sadd.s32 %s48, 1
      %s50 = scalar_select %p47, %s48, %s49
      %p53 = pneg %p47
      %p54 = scmp.eq.s32.totalorder %s24, 3
      %p55 = por %p53, %p54
      %p56 = scmp.ne.s32.totalorder %s48, %s51
      %p57 = scmp.eq.s32.totalorder %s24, 0
      %p58 = por %p56, %p57
      %p59 = scmp.ne.s32.totalorder %s48, %s51
      %p60 = scmp.eq.s32.totalorder %s29, 3
      %p61 = por %p59, %p60
      %p62 = scmp.ne.s32.totalorder %s51, %s52
      %p63 = scmp.eq.s32.totalorder %s29, 0
      %p64 = por %p62, %p63
      %p65 = scmp.ne.s32.totalorder %s51, %s52
      %p66 = scmp.eq.s32.totalorder %s30, 3
      %p67 = por %p65, %p66
      %p69 = scmp.ne.s32.totalorder %s52, %s68
      %p70 = scmp.eq.s32.totalorder %s30, 0
      %p71 = por %p69, %p70
      %s73 = sadd.s32 %s72, 1
      %p76 = scmp.eq.s32.totalorder %s24, 3
      %p77 = scmp.ne.s32.totalorder %s72, %s74
      %p78 = scmp.eq.s32.totalorder %s24, 0
      %p79 = por %p77, %p78
      %p80 = scmp.ne.s32.totalorder %s72, %s74
      %p81 = scmp.eq.s32.totalorder %s29, 3
      %p82 = por %p80, %p81
      %p83 = scmp.ne.s32.totalorder %s74, %s75
      %p84 = scmp.eq.s32.totalorder %s29, 0
      %p85 = por %p83, %p84
      %p86 = scmp.ne.s32.totalorder %s74, %s75
      %p87 = scmp.eq.s32.totalorder %s30, 3
      %p88 = por %p86, %p87
      %p90 = scmp.ne.s32.totalorder %s75, %s89
      %p91 = scmp.eq.s32.totalorder %s30, 0
      %p92 = por %p90, %p91
      %s94 = sadd.s32 %s93, 1
      %p97 = scmp.eq.s32.totalorder %s24, 3
      %p98 = scmp.ne.s32.totalorder %s93, %s95
      %p99 = scmp.eq.s32.totalorder %s24, 0
      %p100 = por %p98, %p99
      %p101 = scmp.ne.s32.totalorder %s93, %s95
      %p102 = scmp.eq.s32.totalorder %s29, 3
      %p103 = por %p101, %p102
      %p104 = scmp.ne.s32.totalorder %s95, %s96
      %p105 = scmp.eq.s32.totalorder %s29, 0
      %p106 = por %p104, %p105
      %p107 = scmp.ne.s32.totalorder %s95, %s96
      %p108 = scmp.eq.s32.totalorder %s30, 3
      %p109 = por %p107, %p108
      %p111 = scmp.ne.s32.totalorder %s96, %s110
      %p112 = scmp.eq.s32.totalorder %s30, 0
      %p113 = por %p111, %p112
      %s115 = sadd.s32 %s114, 1
      %p118 = scmp.eq.s32.totalorder %s24, 3
      %p119 = scmp.ne.s32.totalorder %s114, %s116
      %p120 = scmp.eq.s32.totalorder %s24, 0
      %p121 = por %p119, %p120
      %p122 = scmp.ne.s32.totalorder %s114, %s116
      %p123 = scmp.eq.s32.totalorder %s29, 3
      %p124 = por %p122, %p123
      %p125 = scmp.ne.s32.totalorder %s116, %s117
      %p126 = scmp.eq.s32.totalorder %s29, 0
      %p127 = por %p125, %p126
      %p128 = scmp.ne.s32.totalorder %s116, %s117
      %p129 = scmp.eq.s32.totalorder %s30, 3
      %p130 = por %p128, %p129
      %p132 = scmp.ne.s32.totalorder %s117, %s131
      %p133 = scmp.eq.s32.totalorder %s30, 0
      %p134 = por %p132, %p133
      %s135 = ssub.s32 %s31, %s43
      %s136 = ssub.s32 %s32, %s39
      %s137 = sor.u32 %s135, %s136
      %p138 = scmp.eq.s32.totalorder %s137, 0
      %s140 = sadd.s32 %s139, 1
      %s141 = scalar_select %p138, %s139, %s140
      %p144 = pneg %p138
      %p145 = scmp.eq.s32.totalorder %s24, 3
      %p146 = por %p144, %p145
      %p147 = scmp.ne.s32.totalorder %s139, %s142
      %p148 = scmp.eq.s32.totalorder %s24, 0
      %p149 = por %p147, %p148
      %p150 = scmp.ne.s32.totalorder %s139, %s142
      %p151 = scmp.eq.s32.totalorder %s29, 3
      %p152 = por %p150, %p151
      %p153 = scmp.ne.s32.totalorder %s142, %s143
      %p154 = scmp.eq.s32.totalorder %s29, 0
      %p155 = por %p153, %p154
      %p156 = scmp.ne.s32.totalorder %s142, %s143
      %p157 = scmp.eq.s32.totalorder %s30, 3
      %p158 = por %p156, %p157
      %p160 = scmp.ne.s32.totalorder %s143, %s159
      %p161 = scmp.eq.s32.totalorder %s30, 0
      %p162 = por %p160, %p161
      %s163 = ssub.s32 %s31, %s43
      %s164 = ssub.s32 %s32, %s39
      %s165 = sor.u32 %s163, %s164
      %p166 = scmp.eq.s32.totalorder %s165, 0
      %s168 = sadd.s32 %s167, 1
      %s169 = scalar_select %p166, %s167, %s168
      %p172 = pneg %p166
      %p173 = scmp.eq.s32.totalorder %s24, 3
      %p174 = por %p172, %p173
      %p175 = scmp.ne.s32.totalorder %s167, %s170
      %p176 = scmp.eq.s32.totalorder %s24, 0
      %p177 = por %p175, %p176
      %p178 = scmp.ne.s32.totalorder %s167, %s170
      %p179 = scmp.eq.s32.totalorder %s29, 3
      %p180 = por %p178, %p179
      %p181 = scmp.ne.s32.totalorder %s170, %s171
      %p182 = scmp.eq.s32.totalorder %s29, 0
      %p183 = por %p181, %p182
      %p184 = scmp.ne.s32.totalorder %s170, %s171
      %p185 = scmp.eq.s32.totalorder %s30, 3
      %p186 = por %p184, %p185
      %p188 = scmp.ne.s32.totalorder %s171, %s187
      %p189 = scmp.eq.s32.totalorder %s30, 0
      %p190 = por %p188, %p189
      %s191 = ssub.s32 %s31, %s43
      %s192 = ssub.s32 %s32, %s39
      %s193 = sor.u32 %s191, %s192
      %p194 = scmp.eq.s32.totalorder %s193, 0
      %s196 = sadd.s32 %s195, 1
      %s197 = scalar_select %p194, %s195, %s196
      %p200 = pneg %p194
      %p201 = scmp.eq.s32.totalorder %s24, 3
      %p202 = por %p200, %p201
      %p203 = scmp.ne.s32.totalorder %s195, %s198
      %p204 = scmp.eq.s32.totalorder %s24, 0
      %p205 = por %p203, %p204
      %p206 = scmp.ne.s32.totalorder %s195, %s198
      %p207 = scmp.eq.s32.totalorder %s29, 3
      %p208 = por %p206, %p207
      %p209 = scmp.ne.s32.totalorder %s198, %s199
      %p210 = scmp.eq.s32.totalorder %s29, 0
      %p211 = por %p209, %p210
      %p212 = scmp.ne.s32.totalorder %s198, %s199
      %p213 = scmp.eq.s32.totalorder %s30, 3
      %p214 = por %p212, %p213
      %p216 = scmp.ne.s32.totalorder %s199, %s215
      %p217 = scmp.eq.s32.totalorder %s30, 0
      %p218 = por %p216, %p217
      %p219 = scmp.le.s32.totalorder 1, %s24
      %p220 = scmp.lt.s32.totalorder %s24, 5
      %p221 = pnand %p219, %p220
      %p222 = pneg %p221
      // Predicated region
      $region9: #{tpu_custom_call.1} parent=5 // pred_check
        _
      $region10: #{tpu_custom_call.1} parent=5 // pred_check_branch
        %224 = sbr.rel (%p221) target = $region12
      $region11: #{tpu_custom_call.1} parent=5 // pred_region
        %s225 = ssub.s32 %s24, 1
        // Predicated region
        $region13: #{tpu_custom_call.1} parent=11 // pred_check
          %p226 = pneg %p85
        $region14: #{tpu_custom_call.1} parent=11 // pred_check_branch
          %228 = sbr.rel (%p226) target = $region16
        $region15: #{tpu_custom_call.1} parent=11 // pred_region
          %s230 = ssub.s32 2048, 2048
          %231 = vsyncadd [#allocation7], %s230
          %s232 = sshll.u32 [#allocation6], 4
          %s233 = int_to_ptr.vmem [resolvable:$true] %s232
          %238 = dma.hbm_to_vmem [thread:$0]  %s1, 2048, %s233, [#allocation7], 128, 128, 8
        $region16: #{tpu_custom_call.1} parent=11 // pred_fallthru
          _
        // Predicated region
        $region17: #{tpu_custom_call.1} parent=11 // pred_check
          %p239 = pneg %p106
        $region18: #{tpu_custom_call.1} parent=11 // pred_check_branch
          %241 = sbr.rel (%p239) target = $region20
        $region19: #{tpu_custom_call.1} parent=11 // pred_region
          %s243 = ssub.s32 16384, 16384
          %244 = vsyncadd [#allocation7], %s243
          %s245 = sshll.u32 [#allocation8], 4
          %s246 = int_to_ptr.vmem [resolvable:$true] %s245
          %251 = dma.hbm_to_vmem [thread:$0]  %s2, 16384, %s246, [#allocation7], 128, 128, 8
        $region20: #{tpu_custom_call.1} parent=11 // pred_fallthru
          _
        // Predicated region
        $region21: #{tpu_custom_call.1} parent=11 // pred_check
          %p252 = pneg %p127
        $region22: #{tpu_custom_call.1} parent=11 // pred_check_branch
          %254 = sbr.rel (%p252) target = $region24
        $region23: #{tpu_custom_call.1} parent=11 // pred_region
          %s256 = ssub.s32 16384, 16384
          %257 = vsyncadd [#allocation10], %s256
          %s258 = sshll.u32 [#allocation9], 4
          %s259 = int_to_ptr.vmem [resolvable:$true] %s258
          %264 = dma.hbm_to_vmem [thread:$0]  %s3, 16384, %s259, [#allocation10], 64, 64, 4
        $region24: #{tpu_custom_call.1} parent=11 // pred_fallthru
          _
      $region12: #{tpu_custom_call.1} parent=5 // pred_fallthru
        _
      %p265 = scmp.lt.s32.totalorder %s24, 4
      // Predicated region
      $region25: #{tpu_custom_call.1} parent=5 // pred_check
        %p266 = pneg %p265
      $region26: #{tpu_custom_call.1} parent=5 // pred_check_branch
        %268 = sbr.rel (%p266) target = $region28
      $region27: #{tpu_custom_call.1} parent=5 // pred_region
        // Predicated region
        $region29: #{tpu_custom_call.1} parent=27 // pred_check
          %p269 = pneg %p58
        $region30: #{tpu_custom_call.1} parent=27 // pred_check_branch
          %271 = sbr.rel (%p269) target = $region32
        $region31: #{tpu_custom_call.1} parent=27 // pred_region
          %s272 = sand.u32 %s48, 1
          %s273 = scalar_lea.sflag [#allocation4], %s272
          %s274 = sand.u32 %s48, 1
          %s275 = smul.addr %s274, 64
          %s276 = scalar_lea.vmem [#allocation3], %s275
          %s277 = smul.u32 8, %s32
          %s279 = ssub.s32 1024, 1024
          %280 = vsyncadd %s273, %s279
          %s281 = smul.addr %s31, 16
          %s282 = sadd.s32 %s277, %s281
          %s283 = smul.addr %s282, 128
          %s284 = scalar_lea.hbm %s0, %s283
          %s285 = sshll.u32 %s276, 4
          %s286 = int_to_ptr.vmem [resolvable:$true] %s285
          %291 = dma.hbm_to_vmem [thread:$0]  %s284, 1024, %s286, %s273, 128, 128, 8
        $region32: #{tpu_custom_call.1} parent=27 // pred_fallthru
          _
      $region28: #{tpu_custom_call.1} parent=5 // pred_fallthru
        _
      %p292 = scmp.le.s32.totalorder 1, %s24
      %p293 = scmp.lt.s32.totalorder %s24, 5
      %p294 = pnand %p292, %p293
      %p295 = pneg %p294
      // Predicated region
      $region33: #{tpu_custom_call.1} parent=5 // pred_check
        _
      $region34: #{tpu_custom_call.1} parent=5 // pred_check_branch
        %297 = sbr.rel (%p294) target = $region36
      $region35: #{tpu_custom_call.1} parent=5 // pred_region
        %s298 = ssub.s32 %s24, 1
        %s299 = sand.u32 %s51, 1
        %s300 = scalar_lea.sflag [#allocation4], %s299
        %s301 = sand.u32 %s51, 1
        %s302 = smul.addr %s301, 64
        %s303 = scalar_lea.vmem [#allocation3], %s302
        // Predicated region
        $region37: #{tpu_custom_call.1} parent=35 // pred_check
          %p304 = pneg %p64
        $region38: #{tpu_custom_call.1} parent=35 // pred_check_branch
          %306 = sbr.rel (%p304) target = $region40
        $region39: #{tpu_custom_call.1} parent=35 // pred_region
          %307 = dma.done %s300, 1024
        $region40: #{tpu_custom_call.1} parent=35 // pred_fallthru
          _
        // Predicated region
        $region41: #{tpu_custom_call.1} parent=35 // pred_check
          %p308 = pneg %p85
        $region42: #{tpu_custom_call.1} parent=35 // pred_check_branch
          %310 = sbr.rel (%p308) target = $region44
        $region43: #{tpu_custom_call.1} parent=35 // pred_region
          %311 = dma.done [#allocation7], 2048
        $region44: #{tpu_custom_call.1} parent=35 // pred_fallthru
          _
        // Predicated region
        $region45: #{tpu_custom_call.1} parent=35 // pred_check
          %p312 = pneg %p106
        $region46: #{tpu_custom_call.1} parent=35 // pred_check_branch
          %314 = sbr.rel (%p312) target = $region48
        $region47: #{tpu_custom_call.1} parent=35 // pred_region
          %315 = dma.done [#allocation7], 16384
        $region48: #{tpu_custom_call.1} parent=35 // pred_fallthru
          _
        // Predicated region
        $region49: #{tpu_custom_call.1} parent=35 // pred_check
          %p316 = pneg %p127
        $region50: #{tpu_custom_call.1} parent=35 // pred_check_branch
          %318 = sbr.rel (%p316) target = $region52
        $region51: #{tpu_custom_call.1} parent=35 // pred_region
          %319 = dma.done [#allocation10], 16384
        $region52: #{tpu_custom_call.1} parent=35 // pred_fallthru
          _
        %s320 = sand.u32 %s51, 1
        %s321 = scalar_lea.sflag [#allocation4], %s320
        %s322 = sand.u32 %s51, 1
        %s323 = smul.addr %s322, 64
        %s324 = scalar_lea.vmem [#allocation3], %s323
        %p325 = pneg %p64
        %p326 = pneg %p61
        %p327 = pneg %p85
        %p328 = pneg %p82
        %p329 = pneg %p106
        %p330 = pneg %p103
        %p331 = pneg %p127
        %p332 = pneg %p124
        %p333 = pneg %p155
        %p334 = pneg %p152
        %s335 = sand.u32 %s142, 1
        %s336 = scalar_lea.sflag [#allocation5], %s335
        %s337 = sand.u32 %s142, 1
        %s338 = smul.addr %s337, 64
        %s339 = scalar_lea.vmem [#allocation11], %s338
        %p340 = pneg %p183
        %p341 = pneg %p180
        %s342 = sand.u32 %s170, 1
        %s343 = scalar_lea.sflag [#allocation13], %s342
        %s344 = sand.u32 %s170, 1
        %s345 = smul.addr %s344, 64
        %s346 = scalar_lea.vmem [#allocation12], %s345
        %p347 = pneg %p211
        %p348 = pneg %p208
        %s349 = smul.u32 8, %s34
        %p350 = scmp.lt.s32.totalorder %s33, 1
        %s351 = scalar_select %p350, %s33, 1
        %p352 = scmp.lt.s32.totalorder %s349, 15
        %s353 = scalar_select %p352, %s349, 15
        %s354 = smul.addr %s351, 16
        %s355 = sadd.s32 %s353, %s354
        %s356 = smul.addr %s355, 8
        %s357 = scalar_lea.vmem %s6, %s356
        %s358 = smul.u32 8, %s34
        %s359 = smul.u32 8, %s34
        %s360 = smul.u32 8, %s34
        %s361 = smul.u32 8, %s34
        %p362 = scmp.lt.s32.totalorder %s33, 1
        %s363 = scalar_select %p362, %s33, 1
        %p364 = scmp.lt.s32.totalorder %s361, 15
        %s365 = scalar_select %p364, %s361, 15
        %s366 = smul.addr %s363, 16
        %s367 = sadd.s32 %s365, %s366
        %s368 = smul.addr %s367, 8
        %s369 = scalar_lea.vmem %s6, %s368
        %s370 = smul.u32 8, %s34
        %p372 = scmp.eq.s32.totalorder %s34, 0
        // Predicated region
        $region53: #{tpu_custom_call.1} parent=35 // pred_check
          %p373 = pneg %p372
        $region54: #{tpu_custom_call.1} parent=35 // pred_check_branch
          %375 = sbr.rel (%p373) target = $region56
        $region55: #{tpu_custom_call.1} parent=35 // pred_region
          %376 = vst [vmem:[#allocation2] sm:$0x1] 0.0
        $region56: #{tpu_custom_call.1} parent=35 // pred_fallthru
          _
        %v377 = vld [vmem:[%s303] sm:$0xff]
        %v378 = vld [vmem:[%s303 + $0x8] sm:$0xff]
        %v379 = vld [vmem:[%s303 + $0x10] sm:$0xff]
        %v380 = vld [vmem:[%s303 + $0x18] sm:$0xff]
        %v381 = vld [vmem:[%s303 + $0x20] sm:$0xff]
        %v382 = vld [vmem:[%s303 + $0x28] sm:$0xff]
        %v383 = vld [vmem:[%s303 + $0x30] sm:$0xff]
        %v384 = vld [vmem:[%s303 + $0x38] sm:$0xff]
        %v385 = vld [vmem:[#allocation6] sm:$0xff]
        %v386 = vld [vmem:[#allocation6 + $0x8] sm:$0xff]
        %v387 = vld [vmem:[#allocation6 + $0x10] sm:$0xff]
        %v388 = vld [vmem:[#allocation6 + $0x18] sm:$0xff]
        %v389 = vld [vmem:[#allocation6 + $0x20] sm:$0xff]
        %v390 = vld [vmem:[#allocation6 + $0x28] sm:$0xff]
        %v391 = vld [vmem:[#allocation6 + $0x30] sm:$0xff]
        %v392 = vld [vmem:[#allocation6 + $0x38] sm:$0xff]
        %v393 = vld [vmem:[#allocation6 + $0x40] sm:$0xff]
        %v394 = vld [vmem:[#allocation6 + $0x48] sm:$0xff]
        %v395 = vld [vmem:[#allocation6 + $0x50] sm:$0xff]
        %v396 = vld [vmem:[#allocation6 + $0x58] sm:$0xff]
        %v397 = vld [vmem:[#allocation6 + $0x60] sm:$0xff]
        %v398 = vld [vmem:[#allocation6 + $0x68] sm:$0xff]
        %v399 = vld [vmem:[#allocation6 + $0x70] sm:$0xff]
        %v400 = vld [vmem:[#allocation6 + $0x78] sm:$0xff]
        %401 = vmatprep.subr.mxu0 0.0
        %402 = vmatpush1.msra.mxu0 %v400
        %403 = vmatprep.subr.mxu0 0.0
        %404 = vmatpush1.msra.mxu0 %v399
        %405 = vmatprep.subr.mxu0 0.0
        %406 = vmatpush1.msra.mxu0 %v398
        %407 = vmatprep.subr.mxu0 0.0
        %408 = vmatpush1.msra.mxu0 %v397
        %409 = vmatprep.subr.mxu0 0.0
        %410 = vmatpush1.msra.mxu0 %v396
        %411 = vmatprep.subr.mxu0 0.0
        %412 = vmatpush1.msra.mxu0 %v395
        %413 = vmatprep.subr.mxu0 0.0
        %414 = vmatpush1.msra.mxu0 %v394
        %415 = vmatprep.subr.mxu0 0.0
        %416 = vmatpush1.msra.mxu0 %v393
        %417 = vmatprep.subr.mxu0 0.0
        %418 = vmatpush1.msra.mxu0 %v392
        %419 = vmatprep.subr.mxu0 0.0
        %420 = vmatpush1.msra.mxu0 %v391
        %421 = vmatprep.subr.mxu0 0.0
        %422 = vmatpush1.msra.mxu0 %v390
        %423 = vmatprep.subr.mxu0 0.0
        %424 = vmatpush1.msra.mxu0 %v389
        %425 = vmatprep.subr.mxu0 0.0
        %426 = vmatpush1.msra.mxu0 %v388
        %427 = vmatprep.subr.mxu0 0.0
        %428 = vmatpush1.msra.mxu0 %v387
        %429 = vmatprep.subr.mxu0 0.0
        %430 = vmatpush1.msra.mxu0 %v386
        %431 = vmatprep.subr.mxu0 0.0
        %432 = vmatpush1.msra.mxu0 %v385
        %433 = vmatprep.subr.mxu0 0.0
        %434 = vmatpush2.msra.mxu0 0.0
        %435 = vmatprep.subr.mxu0 0.0
        %436 = vmatpush2.msra.mxu0 0.0
        %437 = vmatprep.subr.mxu0 0.0
        %438 = vmatpush2.msra.mxu0 0.0
        %439 = vmatprep.subr.mxu0 0.0
        %440 = vmatpush2.msra.mxu0 0.0
        %441 = vmatprep.subr.mxu0 0.0
        %442 = vmatpush2.msra.mxu0 0.0
        %443 = vmatprep.subr.mxu0 0.0
        %444 = vmatpush2.msra.mxu0 0.0
        %445 = vmatprep.subr.mxu0 0.0
        %446 = vmatpush2.msra.mxu0 0.0
        %447 = vmatprep.subr.mxu0 0.0
        %448 = vmatpush2.msra.mxu0 0.0
        %449 = vmatprep.subr.mxu0 0.0
        %450 = vmatpush2.msra.mxu0 0.0
        %451 = vmatprep.subr.mxu0 0.0
        %452 = vmatpush2.msra.mxu0 0.0
        %453 = vmatprep.subr.mxu0 0.0
        %454 = vmatpush2.msra.mxu0 0.0
        %455 = vmatprep.subr.mxu0 0.0
        %456 = vmatpush2.msra.mxu0 0.0
        %457 = vmatprep.subr.mxu0 0.0
        %458 = vmatpush2.msra.mxu0 0.0
        %459 = vmatprep.subr.mxu0 0.0
        %460 = vmatpush2.msra.mxu0 0.0
        %461 = vmatprep.subr.mxu0 0.0
        %462 = vmatpush2.msra.mxu0 0.0
        %463 = vmatprep.subr.mxu0 0.0
        %464 = vmatpush2.msra.mxu0 0.0
        %465 = vmatprep.mubr.f32.mxu0 0.0
        %466 = vmatmul.mubr.f32.gmra.mxu0 %v377
        %v467 = vpop.f32.mrf.mxu0
        %v468 = vadd.f32 0.0, %v467
        %v469 = vpop.f32.mrf.mxu0
        %470 = vmatprep.mubr.f32.mxu0 0.0
        %471 = vmatmul.mubr.f32.gmra.mxu0 %v378
        %v472 = vpop.f32.mrf.mxu0
        %v473 = vadd.f32 0.0, %v472
        %v474 = vpop.f32.mrf.mxu0
        %475 = vmatprep.mubr.f32.mxu0 0.0
        %476 = vmatmul.mubr.f32.gmra.mxu0 %v379
        %v477 = vpop.f32.mrf.mxu0
        %v478 = vadd.f32 0.0, %v477
        %v479 = vpop.f32.mrf.mxu0
        %480 = vmatprep.mubr.f32.mxu0 0.0
        %481 = vmatmul.mubr.f32.gmra.mxu0 %v380
        %v482 = vpop.f32.mrf.mxu0
        %v483 = vadd.f32 0.0, %v482
        %v484 = vpop.f32.mrf.mxu0
        %485 = vmatprep.mubr.f32.mxu0 0.0
        %486 = vmatmul.mubr.f32.gmra.mxu0 %v381
        %v487 = vpop.f32.mrf.mxu0
        %v488 = vadd.f32 0.0, %v487
        %v489 = vpop.f32.mrf.mxu0
        %490 = vmatprep.mubr.f32.mxu0 0.0
        %491 = vmatmul.mubr.f32.gmra.mxu0 %v382
        %v492 = vpop.f32.mrf.mxu0
        %v493 = vadd.f32 0.0, %v492
        %v494 = vpop.f32.mrf.mxu0
        %495 = vmatprep.mubr.f32.mxu0 0.0
        %496 = vmatmul.mubr.f32.gmra.mxu0 %v383
        %v497 = vpop.f32.mrf.mxu0
        %v498 = vadd.f32 0.0, %v497
        %v499 = vpop.f32.mrf.mxu0
        %500 = vmatprep.mubr.f32.mxu0 0.0
        %501 = vmatmul.mubr.f32.gmra.mxu0 %v384
        %v502 = vpop.f32.mrf.mxu0
        %v503 = vadd.f32 0.0, %v502
        %v504 = vpop.f32.mrf.mxu0
        %505 = vdwg.mxu0
        %506 = vst [vmem:[%s346] sm:$0xff] %v468
        %507 = vst [vmem:[%s346 + $0x8] sm:$0xff] %v473
        %508 = vst [vmem:[%s346 + $0x10] sm:$0xff] %v478
        %509 = vst [vmem:[%s346 + $0x18] sm:$0xff] %v483
        %510 = vst [vmem:[%s346 + $0x20] sm:$0xff] %v488
        %511 = vst [vmem:[%s346 + $0x28] sm:$0xff] %v493
        %512 = vst [vmem:[%s346 + $0x30] sm:$0xff] %v498
        %513 = vst [vmem:[%s346 + $0x38] sm:$0xff] %v503
        %v514 = vlaneseq
        %v515 = vand.u32 %v514, 127
        %vm516 = vcmp.lt.s32.totalorder %v515, 8
        %v517 = vsel %vm516, %v468, -inf
        %v518 = vsel %vm516, %v473, -inf
        %v519 = vsel %vm516, %v478, -inf
        %v520 = vsel %vm516, %v483, -inf
        %v521 = vsel %vm516, %v488, -inf
        %v522 = vsel %vm516, %v493, -inf
        %v523 = vsel %vm516, %v498, -inf
        %v524 = vsel %vm516, %v503, -inf
        %525 = vmax.xlane.f32.xlu0 %v517
        %v526 = vpop.xlane.xlu0 %525
        %527 = vmax.xlane.f32.xlu0 %v518
        %v528 = vpop.xlane.xlu0 %527
        %529 = vmax.xlane.f32.xlu0 %v519
        %v530 = vpop.xlane.xlu0 %529
        %531 = vmax.xlane.f32.xlu0 %v520
        %v532 = vpop.xlane.xlu0 %531
        %533 = vmax.xlane.f32.xlu0 %v521
        %v534 = vpop.xlane.xlu0 %533
        %535 = vmax.xlane.f32.xlu0 %v522
        %v536 = vpop.xlane.xlu0 %535
        %537 = vmax.xlane.f32.xlu0 %v523
        %v538 = vpop.xlane.xlu0 %537
        %539 = vmax.xlane.f32.xlu0 %v524
        %v540 = vpop.xlane.xlu0 %539
        %v541 = vsub.f32 %v517, %v526
        %v542 = vsub.f32 %v518, %v528
        %v543 = vsub.f32 %v519, %v530
        %v544 = vsub.f32 %v520, %v532
        %v545 = vsub.f32 %v521, %v534
        %v546 = vsub.f32 %v522, %v536
        %v547 = vsub.f32 %v523, %v538
        %v548 = vsub.f32 %v524, %v540
        %v549 = vmul.f32 %v541, 1.442695
        %v550 = vpow.pop %v549
        %v551 = vmul.f32 %v542, 1.442695
        %v552 = vpow.pop %v551
        %v553 = vmul.f32 %v543, 1.442695
        %v554 = vpow.pop %v553
        %v555 = vmul.f32 %v544, 1.442695
        %v556 = vpow.pop %v555
        %v557 = vmul.f32 %v545, 1.442695
        %v558 = vpow.pop %v557
        %v559 = vmul.f32 %v546, 1.442695
        %v560 = vpow.pop %v559
        %v561 = vmul.f32 %v547, 1.442695
        %v562 = vpow.pop %v561
        %v563 = vmul.f32 %v548, 1.442695
        %v564 = vpow.pop %v563
        %565 = vadd.xlane.f32.xlu0 %v550
        %v566 = vpop.xlane.xlu0 %565
        %567 = vadd.xlane.f32.xlu0 %v552
        %v568 = vpop.xlane.xlu0 %567
        %569 = vadd.xlane.f32.xlu0 %v554
        %v570 = vpop.xlane.xlu0 %569
        %571 = vadd.xlane.f32.xlu0 %v556
        %v572 = vpop.xlane.xlu0 %571
        %573 = vadd.xlane.f32.xlu0 %v558
        %v574 = vpop.xlane.xlu0 %573
        %575 = vadd.xlane.f32.xlu0 %v560
        %v576 = vpop.xlane.xlu0 %575
        %577 = vadd.xlane.f32.xlu0 %v562
        %v578 = vpop.xlane.xlu0 %577
        %579 = vadd.xlane.f32.xlu0 %v564
        %v580 = vpop.xlane.xlu0 %579
        %v581 = vrcp.pop %v566
        %v582 = vrcp.pop %v568
        %v583 = vrcp.pop %v570
        %v584 = vrcp.pop %v572
        %v585 = vrcp.pop %v574
        %v586 = vrcp.pop %v576
        %v587 = vrcp.pop %v578
        %v588 = vrcp.pop %v580
        %v589 = vcvt.s32.f32 %v515
        %vm590 = vcmp.eq.f32.partialorder %v517, %v526
        %vm591 = vcmp.eq.f32.partialorder %v518, %v528
        %vm592 = vcmp.eq.f32.partialorder %v519, %v530
        %vm593 = vcmp.eq.f32.partialorder %v520, %v532
        %vm594 = vcmp.eq.f32.partialorder %v521, %v534
        %vm595 = vcmp.eq.f32.partialorder %v522, %v536
        %vm596 = vcmp.eq.f32.partialorder %v523, %v538
        %vm597 = vcmp.eq.f32.partialorder %v524, %v540
        %v598 = vsel %vm590, %v589, 128.0
        %v599 = vsel %vm591, %v589, 128.0
        %v600 = vsel %vm592, %v589, 128.0
        %v601 = vsel %vm593, %v589, 128.0
        %v602 = vsel %vm594, %v589, 128.0
        %v603 = vsel %vm595, %v589, 128.0
        %v604 = vsel %vm596, %v589, 128.0
        %v605 = vsel %vm597, %v589, 128.0
        %606 = vmin.xlane.f32.xlu0 %v598
        %v607 = vpop.xlane.xlu0 %606
        %608 = vmin.xlane.f32.xlu0 %v599
        %v609 = vpop.xlane.xlu0 %608
        %610 = vmin.xlane.f32.xlu0 %v600
        %v611 = vpop.xlane.xlu0 %610
        %612 = vmin.xlane.f32.xlu0 %v601
        %v613 = vpop.xlane.xlu0 %612
        %614 = vmin.xlane.f32.xlu0 %v602
        %v615 = vpop.xlane.xlu0 %614
        %616 = vmin.xlane.f32.xlu0 %v603
        %v617 = vpop.xlane.xlu0 %616
        %618 = vmin.xlane.f32.xlu0 %v604
        %v619 = vpop.xlane.xlu0 %618
        %620 = vmin.xlane.f32.xlu0 %v605
        %v621 = vpop.xlane.xlu0 %620
        %vm622 = vcmp.eq.f32.partialorder %v589, %v607
        %vm623 = vcmp.eq.f32.partialorder %v589, %v609
        %vm624 = vcmp.eq.f32.partialorder %v589, %v611
        %vm625 = vcmp.eq.f32.partialorder %v589, %v613
        %vm626 = vcmp.eq.f32.partialorder %v589, %v615
        %vm627 = vcmp.eq.f32.partialorder %v589, %v617
        %vm628 = vcmp.eq.f32.partialorder %v589, %v619
        %vm629 = vcmp.eq.f32.partialorder %v589, %v621
        %v630 = vsel %vm622, 1, 0
        %v631 = vsel %vm623, 1, 0
        %v632 = vsel %vm624, 1, 0
        %v633 = vsel %vm625, 1, 0
        %v634 = vsel %vm626, 1, 0
        %v635 = vsel %vm627, 1, 0
        %v636 = vsel %vm628, 1, 0
        %v637 = vsel %vm629, 1, 0
        %v638 = vcvt.s32.f32 %v630
        %v639 = vcvt.s32.f32 %v631
        %v640 = vcvt.s32.f32 %v632
        %v641 = vcvt.s32.f32 %v633
        %v642 = vcvt.s32.f32 %v634
        %v643 = vcvt.s32.f32 %v635
        %v644 = vcvt.s32.f32 %v636
        %v645 = vcvt.s32.f32 %v637
        %v646 = vlaneseq
        %v647 = vshrl.u32 %v646, 7
        %v648 = vadd.s32 %v647, 8
        %v649 = vadd.s32 %v647, 16
        %v650 = vadd.s32 %v647, 24
        %v651 = vadd.s32 %v647, 32
        %v652 = vadd.s32 %v647, 40
        %v653 = vadd.s32 %v647, 48
        %v654 = vadd.s32 %v647, 56
        %vm655 = vcmp.ge.s32.totalorder %v647, %v515
        %vm656 = vcmp.ge.s32.totalorder %v648, %v515
        %vm657 = vcmp.ge.s32.totalorder %v649, %v515
        %vm658 = vcmp.ge.s32.totalorder %v650, %v515
        %vm659 = vcmp.ge.s32.totalorder %v651, %v515
        %vm660 = vcmp.ge.s32.totalorder %v652, %v515
        %vm661 = vcmp.ge.s32.totalorder %v653, %v515
        %vm662 = vcmp.ge.s32.totalorder %v654, %v515
        %v663 = vsel %vm655, 1, 0
        %v664 = vsel %vm656, 1, 0
        %v665 = vsel %vm657, 1, 0
        %v666 = vsel %vm658, 1, 0
        %v667 = vsel %vm659, 1, 0
        %v668 = vsel %vm660, 1, 0
        %v669 = vsel %vm661, 1, 0
        %v670 = vsel %vm662, 1, 0
        %v671 = vcvt.s32.f32 %v663
        %v672 = vcvt.s32.f32 %v664
        %v673 = vcvt.s32.f32 %v665
        %v674 = vcvt.s32.f32 %v666
        %v675 = vcvt.s32.f32 %v667
        %v676 = vcvt.s32.f32 %v668
        %v677 = vcvt.s32.f32 %v669
        %v678 = vcvt.s32.f32 %v670
        %v679 = vpack.c.bf16 %v672, %v671
        %v680 = vpack.c.bf16 %v674, %v673
        %v681 = vpack.c.bf16 %v676, %v675
        %v682 = vpack.c.bf16 %v678, %v677
        %v683 = vpack.c.bf16 %v639, %v638
        %v684 = vpack.c.bf16 %v641, %v640
        %v685 = vpack.c.bf16 %v643, %v642
        %v686 = vpack.c.bf16 %v645, %v644
        %v687 = vld [vmem:[#allocation2] sm:$0x1]
        %v689 = vlaneseq
        %v690 = vshrl.u32 %v689, 7
        %v691 = vsub.s32 0, %v690
        %v692 = vrot.slane %v687, %v691
        %vm694 = vcmask 523264
        %v696 = vsel %vm694, %v679, 0
        %v699 = vsel %vm694, %v680, 0
        %v702 = vsel %vm694, %v681, 0
        %v705 = vsel %vm694, %v682, 0
        %707 = vmatprep.subr.bf16.mxu0 0
        %708 = vmatpush1.bf16.msra.mxu0 0
        %709 = vmatprep.subr.bf16.mxu0 0
        %710 = vmatpush1.bf16.msra.mxu0 0
        %711 = vmatprep.subr.bf16.mxu0 0
        %712 = vmatpush1.bf16.msra.mxu0 0
        %713 = vmatprep.subr.bf16.mxu0 0
        %714 = vmatpush1.bf16.msra.mxu0 0
        %715 = vmatprep.subr.bf16.mxu0 0
        %716 = vmatpush1.bf16.msra.mxu0 %v686
        %717 = vmatprep.subr.bf16.mxu0 0
        %718 = vmatpush1.bf16.msra.mxu0 %v685
        %719 = vmatprep.subr.bf16.mxu0 0
        %720 = vmatpush1.bf16.msra.mxu0 %v684
        %721 = vmatprep.subr.bf16.mxu0 0
        %722 = vmatpush1.bf16.msra.mxu0 %v683
        %723 = vmatprep.subr.bf16.mxu0 0
        %724 = vmatpush2.bf16.msra.mxu0 0
        %725 = vmatprep.subr.bf16.mxu0 0
        %726 = vmatpush2.bf16.msra.mxu0 0
        %727 = vmatprep.subr.bf16.mxu0 0
        %728 = vmatpush2.bf16.msra.mxu0 0
        %729 = vmatprep.subr.bf16.mxu0 0
        %730 = vmatpush2.bf16.msra.mxu0 0
        %731 = vmatprep.subr.bf16.mxu0 0
        %732 = vmatpush2.bf16.msra.mxu0 0
        %733 = vmatprep.subr.bf16.mxu0 0
        %734 = vmatpush2.bf16.msra.mxu0 0
        %735 = vmatprep.subr.bf16.mxu0 0
        %736 = vmatpush2.bf16.msra.mxu0 0
        %737 = vmatprep.subr.bf16.mxu0 0
        %738 = vmatpush2.bf16.msra.mxu0 0
        %739 = vmatprep.mubr.bf16.mxu0 0
        %740 = vmatmul.mubr.bf16.gmra.mxu0 %v696
        %v741 = vpop.f32.mrf.mxu0
        %v742 = vadd.f32 %v692, %v741
        %v743 = vpop.f32.mrf.mxu0
        %v744 = vpop.f32.mrf.mxu0
        %v745 = vadd.f32 %v692, %v744
        %v746 = vpop.f32.mrf.mxu0
        %747 = vmatprep.mubr.bf16.mxu0 0
        %748 = vmatmul.mubr.bf16.gmra.mxu0 %v699
        %v749 = vpop.f32.mrf.mxu0
        %v750 = vadd.f32 %v692, %v749
        %v751 = vpop.f32.mrf.mxu0
        %v752 = vpop.f32.mrf.mxu0
        %v753 = vadd.f32 %v692, %v752
        %v754 = vpop.f32.mrf.mxu0
        %755 = vmatprep.mubr.bf16.mxu0 0
        %756 = vmatmul.mubr.bf16.gmra.mxu0 %v702
        %v757 = vpop.f32.mrf.mxu0
        %v758 = vadd.f32 %v692, %v757
        %v759 = vpop.f32.mrf.mxu0
        %v760 = vpop.f32.mrf.mxu0
        %v761 = vadd.f32 %v692, %v760
        %v762 = vpop.f32.mrf.mxu0
        %763 = vmatprep.mubr.bf16.mxu0 0
        %764 = vmatmul.mubr.bf16.gmra.mxu0 %v705
        %v765 = vpop.f32.mrf.mxu0
        %v766 = vadd.f32 %v692, %v765
        %v767 = vpop.f32.mrf.mxu0
        %v768 = vpop.f32.mrf.mxu0
        %v769 = vadd.f32 %v692, %v768
        %v770 = vpop.f32.mrf.mxu0
        %771 = vdwg.mxu0
        %v772 = vadd.f32 %v638, %v639
        %v773 = vadd.f32 %v772, %v640
        %v774 = vadd.f32 %v773, %v641
        %v775 = vadd.f32 %v774, %v642
        %v776 = vadd.f32 %v775, %v643
        %v777 = vadd.f32 %v776, %v644
        %v778 = vadd.f32 %v777, %v645
        %v779 = vrot.slane %v778, 4
        %v780 = vadd.f32 %v778, %v779
        %v781 = vrot.slane %v780, 2
        %v782 = vadd.f32 %v780, %v781
        %v783 = vrot.slane %v782, 1
        %v784 = vadd.f32 %v782, %v783
        %v785 = vadd.f32 %v687, %v784
        %786 = vst [vmem:[#allocation2] sm:$0x1] %v785
        %vm787 = vcmp.le.f32.partialorder %v742, 12.0
        %vm788 = vcmp.le.f32.partialorder %v745, 12.0
        %vm789 = vcmp.le.f32.partialorder %v750, 12.0
        %vm790 = vcmp.le.f32.partialorder %v753, 12.0
        %vm791 = vcmp.le.f32.partialorder %v758, 12.0
        %vm792 = vcmp.le.f32.partialorder %v761, 12.0
        %vm793 = vcmp.le.f32.partialorder %v766, 12.0
        %vm794 = vcmp.le.f32.partialorder %v769, 12.0
        %v795 = vsel %vm787, 1, 0
        %v796 = vsel %vm788, 1, 0
        %v797 = vsel %vm789, 1, 0
        %v798 = vsel %vm790, 1, 0
        %v799 = vsel %vm791, 1, 0
        %v800 = vsel %vm792, 1, 0
        %v801 = vsel %vm793, 1, 0
        %v802 = vsel %vm794, 1, 0
        %v803 = vcvt.s32.f32 %v795
        %v804 = vcvt.s32.f32 %v796
        %v805 = vcvt.s32.f32 %v797
        %v806 = vcvt.s32.f32 %v798
        %v807 = vcvt.s32.f32 %v799
        %v808 = vcvt.s32.f32 %v800
        %v809 = vcvt.s32.f32 %v801
        %v810 = vcvt.s32.f32 %v802
        %v811 = vmul.f32 %v638, %v803
        %v812 = vmul.f32 %v639, %v804
        %v813 = vmul.f32 %v640, %v805
        %v814 = vmul.f32 %v641, %v806
        %v815 = vmul.f32 %v642, %v807
        %v816 = vmul.f32 %v643, %v808
        %v817 = vmul.f32 %v644, %v809
        %v818 = vmul.f32 %v645, %v810
        %819 = vadd.xlane.f32.xlu0 %v811
        %v820 = vpop.xlane.xlu0 %819
        %821 = vadd.xlane.f32.xlu0 %v812
        %v822 = vpop.xlane.xlu0 %821
        %823 = vadd.xlane.f32.xlu0 %v813
        %v824 = vpop.xlane.xlu0 %823
        %825 = vadd.xlane.f32.xlu0 %v814
        %v826 = vpop.xlane.xlu0 %825
        %827 = vadd.xlane.f32.xlu0 %v815
        %v828 = vpop.xlane.xlu0 %827
        %829 = vadd.xlane.f32.xlu0 %v816
        %v830 = vpop.xlane.xlu0 %829
        %831 = vadd.xlane.f32.xlu0 %v817
        %v832 = vpop.xlane.xlu0 %831
        %833 = vadd.xlane.f32.xlu0 %v818
        %v834 = vpop.xlane.xlu0 %833
        %vm835 = vcmp.gt.f32.partialorder %v820, 0.0
        %vm836 = vcmp.gt.f32.partialorder %v822, 0.0
        %vm837 = vcmp.gt.f32.partialorder %v824, 0.0
        %vm838 = vcmp.gt.f32.partialorder %v826, 0.0
        %vm839 = vcmp.gt.f32.partialorder %v828, 0.0
        %vm840 = vcmp.gt.f32.partialorder %v830, 0.0
        %vm841 = vcmp.gt.f32.partialorder %v832, 0.0
        %vm842 = vcmp.gt.f32.partialorder %v834, 0.0
        %v843 = vsel %vm835, %v607, 0.0
        %v844 = vsel %vm836, %v609, 0.0
        %v845 = vsel %vm837, %v611, 0.0
        %v846 = vsel %vm838, %v613, 0.0
        %v847 = vsel %vm839, %v615, 0.0
        %v848 = vsel %vm840, %v617, 0.0
        %v849 = vsel %vm841, %v619, 0.0
        %v850 = vsel %vm842, %v621, 0.0
        %v851 = vcvt.f32.s32.to.zero.pseudo %v843
        %v852 = vcvt.f32.s32.to.zero.pseudo %v844
        %v853 = vcvt.f32.s32.to.zero.pseudo %v845
        %v854 = vcvt.f32.s32.to.zero.pseudo %v846
        %v855 = vcvt.f32.s32.to.zero.pseudo %v847
        %v856 = vcvt.f32.s32.to.zero.pseudo %v848
        %v857 = vcvt.f32.s32.to.zero.pseudo %v849
        %v858 = vcvt.f32.s32.to.zero.pseudo %v850
        %vm859 = vcmask 7168
        %860 = vst.msk [vmem:[%s369] sm:$0xff] %vm859, %v851
        %861 = vst.msk [vmem:[%s369 + $0x8] sm:$0xff] %vm859, %v852
        %862 = vst.msk [vmem:[%s369 + $0x10] sm:$0xff] %vm859, %v853
        %863 = vst.msk [vmem:[%s369 + $0x18] sm:$0xff] %vm859, %v854
        %864 = vst.msk [vmem:[%s369 + $0x20] sm:$0xff] %vm859, %v855
        %865 = vst.msk [vmem:[%s369 + $0x28] sm:$0xff] %vm859, %v856
        %866 = vst.msk [vmem:[%s369 + $0x30] sm:$0xff] %vm859, %v857
        %867 = vst.msk [vmem:[%s369 + $0x38] sm:$0xff] %vm859, %v858
        %v868 = vpack.c.bf16 %v378, %v377
        %v869 = vpack.c.bf16 %v380, %v379
        %v870 = vpack.c.bf16 %v382, %v381
        %v871 = vpack.c.bf16 %v384, %v383
        %872 = vst [vmem:[%s339] sm:$0xff] 0.0
        %873 = vst [vmem:[%s339 + $0x8] sm:$0xff] 0.0
        %874 = vst [vmem:[%s339 + $0x10] sm:$0xff] 0.0
        %875 = vst [vmem:[%s339 + $0x18] sm:$0xff] 0.0
        %876 = vst [vmem:[%s339 + $0x20] sm:$0xff] 0.0
        %877 = vst [vmem:[%s339 + $0x28] sm:$0xff] 0.0
        %878 = vst [vmem:[%s339 + $0x30] sm:$0xff] 0.0
        %879 = vst [vmem:[%s339 + $0x38] sm:$0xff] 0.0
        %v880 = vsel %vm859, %v811, 0.0
        %v881 = vsel %vm859, %v812, 0.0
        %v882 = vadd.f32 %v880, %v881
        %v883 = vsel %vm859, %v813, 0.0
        %v884 = vadd.f32 %v882, %v883
        %v885 = vsel %vm859, %v814, 0.0
        %v886 = vadd.f32 %v884, %v885
        %v887 = vsel %vm859, %v815, 0.0
        %v888 = vadd.f32 %v886, %v887
        %v889 = vsel %vm859, %v816, 0.0
        %v890 = vadd.f32 %v888, %v889
        %v891 = vsel %vm859, %v817, 0.0
        %v892 = vadd.f32 %v890, %v891
        %v893 = vsel %vm859, %v818, 0.0
        %v894 = vadd.f32 %v892, %v893
        %895 = vadd.xlane.f32.xlu0 %v894
        %v896 = vpop.xlane.xlu0 %895
        %v897 = vrot.slane %v896, 4
        %v898 = vadd.f32 %v896, %v897
        %v899 = vrot.slane %v898, 2
        %v900 = vadd.f32 %v898, %v899
        %v901 = vrot.slane %v900, 1
        %v902 = vadd.f32 %v900, %v901
        %s903 = vtos %v902
        %p904 = scmp.gt.f32.partialorder %s903, 0.0
        // Predicated region
        $region57: #{tpu_custom_call.1} parent=35 // pred_check
          %p905 = pneg %p904
        $region58: #{tpu_custom_call.1} parent=35 // pred_check_branch
          %907 = sbr.rel (%p905) target = $region60
        $region59: #{tpu_custom_call.1} parent=35 // pred_region
          %v908 = vld [vmem:[#allocation8] sm:$0xff]
          %v909 = vld [vmem:[#allocation8 + $0x8] sm:$0xff]
          %v910 = vld [vmem:[#allocation8 + $0x10] sm:$0xff]
          %v911 = vld [vmem:[#allocation8 + $0x18] sm:$0xff]
          %v912 = vld [vmem:[#allocation8 + $0x20] sm:$0xff]
          %v913 = vld [vmem:[#allocation8 + $0x28] sm:$0xff]
          %v914 = vld [vmem:[#allocation8 + $0x30] sm:$0xff]
          %v915 = vld [vmem:[#allocation8 + $0x38] sm:$0xff]
          %v916 = vld [vmem:[#allocation8 + $0x40] sm:$0xff]
          %v917 = vld [vmem:[#allocation8 + $0x48] sm:$0xff]
          %v918 = vld [vmem:[#allocation8 + $0x50] sm:$0xff]
          %v919 = vld [vmem:[#allocation8 + $0x58] sm:$0xff]
          %v920 = vld [vmem:[#allocation8 + $0x60] sm:$0xff]
          %v921 = vld [vmem:[#allocation8 + $0x68] sm:$0xff]
          %v922 = vld [vmem:[#allocation8 + $0x70] sm:$0xff]
          %v923 = vld [vmem:[#allocation8 + $0x78] sm:$0xff]
          %v940 = vunpack.c.l.b16 %v908
          %v941 = vunpack.c.h.b16 %v908
          %v942 = vunpack.c.l.b16 %v909
          %v943 = vunpack.c.h.b16 %v909
          %v944 = vunpack.c.l.b16 %v910
          %v945 = vunpack.c.h.b16 %v910
          %v946 = vunpack.c.l.b16 %v911
          %v947 = vunpack.c.h.b16 %v911
          %v948 = vunpack.c.l.b16 %v912
          %v949 = vunpack.c.h.b16 %v912
          %v950 = vunpack.c.l.b16 %v913
          %v951 = vunpack.c.h.b16 %v913
          %v952 = vunpack.c.l.b16 %v914
          %v953 = vunpack.c.h.b16 %v914
          %v954 = vunpack.c.l.b16 %v915
          %v955 = vunpack.c.h.b16 %v915
          %v956 = vunpack.c.l.b16 %v916
          %v957 = vunpack.c.h.b16 %v916
          %v958 = vunpack.c.l.b16 %v917
          %v959 = vunpack.c.h.b16 %v917
          %v960 = vunpack.c.l.b16 %v918
          %v961 = vunpack.c.h.b16 %v918
          %v962 = vunpack.c.l.b16 %v919
          %v963 = vunpack.c.h.b16 %v919
          %v964 = vunpack.c.l.b16 %v920
          %v965 = vunpack.c.h.b16 %v920
          %v966 = vunpack.c.l.b16 %v921
          %v967 = vunpack.c.h.b16 %v921
          %v968 = vunpack.c.l.b16 %v922
          %v969 = vunpack.c.h.b16 %v922
          %v970 = vunpack.c.l.b16 %v923
          %v971 = vunpack.c.h.b16 %v923
          %v972 = vpack.c.b16 %v942, %v940
          %v973 = vpack.c.b16 %v943, %v941
          %v974 = vpack.c.b16 %v946, %v944
          %v975 = vpack.c.b16 %v947, %v945
          %v976 = vpack.c.b16 %v950, %v948
          %v977 = vpack.c.b16 %v951, %v949
          %v978 = vpack.c.b16 %v954, %v952
          %v979 = vpack.c.b16 %v955, %v953
          %v980 = vpack.c.b16 %v958, %v956
          %v981 = vpack.c.b16 %v959, %v957
          %v982 = vpack.c.b16 %v962, %v960
          %v983 = vpack.c.b16 %v963, %v961
          %v984 = vpack.c.b16 %v966, %v964
          %v985 = vpack.c.b16 %v967, %v965
          %v986 = vpack.c.b16 %v970, %v968
          %v987 = vpack.c.b16 %v971, %v969
          %1004 = vmatprep.subr.bf16.mxu0 %v987
          %1005 = vmatpush1.bf16.msra.mxu0 %v986
          %1006 = vmatprep.subr.bf16.mxu0 %v985
          %1007 = vmatpush1.bf16.msra.mxu0 %v984
          %1008 = vmatprep.subr.bf16.mxu0 %v983
          %1009 = vmatpush1.bf16.msra.mxu0 %v982
          %1010 = vmatprep.subr.bf16.mxu0 %v981
          %1011 = vmatpush1.bf16.msra.mxu0 %v980
          %1012 = vmatprep.subr.bf16.mxu0 %v979
          %1013 = vmatpush1.bf16.msra.mxu0 %v978
          %1014 = vmatprep.subr.bf16.mxu0 %v977
          %1015 = vmatpush1.bf16.msra.mxu0 %v976
          %1016 = vmatprep.subr.bf16.mxu0 %v975
          %1017 = vmatpush1.bf16.msra.mxu0 %v974
          %1018 = vmatprep.subr.bf16.mxu0 %v973
          %1019 = vmatpush1.bf16.msra.mxu0 %v972
          %1020 = vmatprep.subr.bf16.mxu0 0
          %1021 = vmatpush2.bf16.msra.mxu0 0
          %1022 = vmatprep.subr.bf16.mxu0 0
          %1023 = vmatpush2.bf16.msra.mxu0 0
          %1024 = vmatprep.subr.bf16.mxu0 0
          %1025 = vmatpush2.bf16.msra.mxu0 0
          %1026 = vmatprep.subr.bf16.mxu0 0
          %1027 = vmatpush2.bf16.msra.mxu0 0
          %1028 = vmatprep.subr.bf16.mxu0 0
          %1029 = vmatpush2.bf16.msra.mxu0 0
          %1030 = vmatprep.subr.bf16.mxu0 0
          %1031 = vmatpush2.bf16.msra.mxu0 0
          %1032 = vmatprep.subr.bf16.mxu0 0
          %1033 = vmatpush2.bf16.msra.mxu0 0
          %1034 = vmatprep.subr.bf16.mxu0 0
          %1035 = vmatpush2.bf16.msra.mxu0 0
          %1036 = vmatprep.mubr.bf16.mxu0 0
          %1037 = vmatmul.mubr.bf16.gmra.mxu0 %v868
          %v1038 = vpop.f32.mrf.mxu0
          %v1039 = vadd.f32 0.0, %v1038
          %v1040 = vpop.f32.mrf.mxu0
          %v1041 = vadd.f32 0.0, %v1040
          %v1042 = vpop.f32.mrf.mxu0
          %v1043 = vadd.f32 0.0, %v1042
          %v1044 = vpop.f32.mrf.mxu0
          %v1045 = vadd.f32 0.0, %v1044
          %1046 = vmatprep.mubr.bf16.mxu0 0
          %1047 = vmatmul.mubr.bf16.gmra.mxu0 %v869
          %v1048 = vpop.f32.mrf.mxu0
          %v1049 = vadd.f32 0.0, %v1048
          %v1050 = vpop.f32.mrf.mxu0
          %v1051 = vadd.f32 0.0, %v1050
          %v1052 = vpop.f32.mrf.mxu0
          %v1053 = vadd.f32 0.0, %v1052
          %v1054 = vpop.f32.mrf.mxu0
          %v1055 = vadd.f32 0.0, %v1054
          %1056 = vmatprep.mubr.bf16.mxu0 0
          %1057 = vmatmul.mubr.bf16.gmra.mxu0 %v870
          %v1058 = vpop.f32.mrf.mxu0
          %v1059 = vadd.f32 0.0, %v1058
          %v1060 = vpop.f32.mrf.mxu0
          %v1061 = vadd.f32 0.0, %v1060
          %v1062 = vpop.f32.mrf.mxu0
          %v1063 = vadd.f32 0.0, %v1062
          %v1064 = vpop.f32.mrf.mxu0
          %v1065 = vadd.f32 0.0, %v1064
          %1066 = vmatprep.mubr.bf16.mxu0 0
          %1067 = vmatmul.mubr.bf16.gmra.mxu0 %v871
          %v1068 = vpop.f32.mrf.mxu0
          %v1069 = vadd.f32 0.0, %v1068
          %v1070 = vpop.f32.mrf.mxu0
          %v1071 = vadd.f32 0.0, %v1070
          %v1072 = vpop.f32.mrf.mxu0
          %v1073 = vadd.f32 0.0, %v1072
          %v1074 = vpop.f32.mrf.mxu0
          %v1075 = vadd.f32 0.0, %v1074
          %1076 = vdwg.mxu0
          %v1077 = vxor.u32 %v1039, 2147483648
          %v1078 = vxor.u32 %v1041, 2147483648
          %v1079 = vxor.u32 %v1043, 2147483648
          %v1080 = vxor.u32 %v1045, 2147483648
          %v1081 = vxor.u32 %v1049, 2147483648
          %v1082 = vxor.u32 %v1051, 2147483648
          %v1083 = vxor.u32 %v1053, 2147483648
          %v1084 = vxor.u32 %v1055, 2147483648
          %v1085 = vxor.u32 %v1059, 2147483648
          %v1086 = vxor.u32 %v1061, 2147483648
          %v1087 = vxor.u32 %v1063, 2147483648
          %v1088 = vxor.u32 %v1065, 2147483648
          %v1089 = vxor.u32 %v1069, 2147483648
          %v1090 = vxor.u32 %v1071, 2147483648
          %v1091 = vxor.u32 %v1073, 2147483648
          %v1092 = vxor.u32 %v1075, 2147483648
          %v1093 = vmul.f32 %v1077, 1.442695
          %v1094 = vpow.pop %v1093
          %v1095 = vmul.f32 %v1078, 1.442695
          %v1096 = vpow.pop %v1095
          %v1097 = vmul.f32 %v1079, 1.442695
          %v1098 = vpow.pop %v1097
          %v1099 = vmul.f32 %v1080, 1.442695
          %v1100 = vpow.pop %v1099
          %v1101 = vmul.f32 %v1081, 1.442695
          %v1102 = vpow.pop %v1101
          %v1103 = vmul.f32 %v1082, 1.442695
          %v1104 = vpow.pop %v1103
          %v1105 = vmul.f32 %v1083, 1.442695
          %v1106 = vpow.pop %v1105
          %v1107 = vmul.f32 %v1084, 1.442695
          %v1108 = vpow.pop %v1107
          %v1109 = vmul.f32 %v1085, 1.442695
          %v1110 = vpow.pop %v1109
          %v1111 = vmul.f32 %v1086, 1.442695
          %v1112 = vpow.pop %v1111
          %v1113 = vmul.f32 %v1087, 1.442695
          %v1114 = vpow.pop %v1113
          %v1115 = vmul.f32 %v1088, 1.442695
          %v1116 = vpow.pop %v1115
          %v1117 = vmul.f32 %v1089, 1.442695
          %v1118 = vpow.pop %v1117
          %v1119 = vmul.f32 %v1090, 1.442695
          %v1120 = vpow.pop %v1119
          %v1121 = vmul.f32 %v1091, 1.442695
          %v1122 = vpow.pop %v1121
          %v1123 = vmul.f32 %v1092, 1.442695
          %v1124 = vpow.pop %v1123
          %v1125 = vadd.f32 %v1094, 1.0
          %v1126 = vadd.f32 %v1096, 1.0
          %v1127 = vadd.f32 %v1098, 1.0
          %v1128 = vadd.f32 %v1100, 1.0
          %v1129 = vadd.f32 %v1102, 1.0
          %v1130 = vadd.f32 %v1104, 1.0
          %v1131 = vadd.f32 %v1106, 1.0
          %v1132 = vadd.f32 %v1108, 1.0
          %v1133 = vadd.f32 %v1110, 1.0
          %v1134 = vadd.f32 %v1112, 1.0
          %v1135 = vadd.f32 %v1114, 1.0
          %v1136 = vadd.f32 %v1116, 1.0
          %v1137 = vadd.f32 %v1118, 1.0
          %v1138 = vadd.f32 %v1120, 1.0
          %v1139 = vadd.f32 %v1122, 1.0
          %v1140 = vadd.f32 %v1124, 1.0
          %v1141 = vrcp.pop %v1125
          %v1142 = vmul.f32 1.0, %v1141
          %v1143 = vrcp.pop %v1126
          %v1144 = vmul.f32 1.0, %v1143
          %v1145 = vrcp.pop %v1127
          %v1146 = vmul.f32 1.0, %v1145
          %v1147 = vrcp.pop %v1128
          %v1148 = vmul.f32 1.0, %v1147
          %v1149 = vrcp.pop %v1129
          %v1150 = vmul.f32 1.0, %v1149
          %v1151 = vrcp.pop %v1130
          %v1152 = vmul.f32 1.0, %v1151
          %v1153 = vrcp.pop %v1131
          %v1154 = vmul.f32 1.0, %v1153
          %v1155 = vrcp.pop %v1132
          %v1156 = vmul.f32 1.0, %v1155
          %v1157 = vrcp.pop %v1133
          %v1158 = vmul.f32 1.0, %v1157
          %v1159 = vrcp.pop %v1134
          %v1160 = vmul.f32 1.0, %v1159
          %v1161 = vrcp.pop %v1135
          %v1162 = vmul.f32 1.0, %v1161
          %v1163 = vrcp.pop %v1136
          %v1164 = vmul.f32 1.0, %v1163
          %v1165 = vrcp.pop %v1137
          %v1166 = vmul.f32 1.0, %v1165
          %v1167 = vrcp.pop %v1138
          %v1168 = vmul.f32 1.0, %v1167
          %v1169 = vrcp.pop %v1139
          %v1170 = vmul.f32 1.0, %v1169
          %v1171 = vrcp.pop %v1140
          %v1172 = vmul.f32 1.0, %v1171
          %v1173 = vmul.f32 %v1039, %v1142
          %v1174 = vmul.f32 %v1041, %v1144
          %v1175 = vmul.f32 %v1043, %v1146
          %v1176 = vmul.f32 %v1045, %v1148
          %v1177 = vmul.f32 %v1049, %v1150
          %v1178 = vmul.f32 %v1051, %v1152
          %v1179 = vmul.f32 %v1053, %v1154
          %v1180 = vmul.f32 %v1055, %v1156
          %v1181 = vmul.f32 %v1059, %v1158
          %v1182 = vmul.f32 %v1061, %v1160
          %v1183 = vmul.f32 %v1063, %v1162
          %v1184 = vmul.f32 %v1065, %v1164
          %v1185 = vmul.f32 %v1069, %v1166
          %v1186 = vmul.f32 %v1071, %v1168
          %v1187 = vmul.f32 %v1073, %v1170
          %v1188 = vmul.f32 %v1075, %v1172
          %v1189 = vpack.c.bf16 %v1175, %v1173
          %v1190 = vpack.c.bf16 %v1176, %v1174
          %v1191 = vpack.c.bf16 %v1179, %v1177
          %v1192 = vpack.c.bf16 %v1180, %v1178
          %v1193 = vpack.c.bf16 %v1183, %v1181
          %v1194 = vpack.c.bf16 %v1184, %v1182
          %v1195 = vpack.c.bf16 %v1187, %v1185
          %v1196 = vpack.c.bf16 %v1188, %v1186
          %v1197 = vld [vmem:[#allocation9] sm:$0xf]
          %v1198 = vld [vmem:[#allocation9 + $0x4] sm:$0xf]
          %v1199 = vld [vmem:[#allocation9 + $0x8] sm:$0xf]
          %v1200 = vld [vmem:[#allocation9 + $0xc] sm:$0xf]
          %v1201 = vld [vmem:[#allocation9 + $0x10] sm:$0xf]
          %v1202 = vld [vmem:[#allocation9 + $0x14] sm:$0xf]
          %v1203 = vld [vmem:[#allocation9 + $0x18] sm:$0xf]
          %v1204 = vld [vmem:[#allocation9 + $0x1c] sm:$0xf]
          %v1205 = vld [vmem:[#allocation9 + $0x20] sm:$0xf]
          %v1206 = vld [vmem:[#allocation9 + $0x24] sm:$0xf]
          %v1207 = vld [vmem:[#allocation9 + $0x28] sm:$0xf]
          %v1208 = vld [vmem:[#allocation9 + $0x2c] sm:$0xf]
          %v1209 = vld [vmem:[#allocation9 + $0x30] sm:$0xf]
          %v1210 = vld [vmem:[#allocation9 + $0x34] sm:$0xf]
          %v1211 = vld [vmem:[#allocation9 + $0x38] sm:$0xf]
          %v1212 = vld [vmem:[#allocation9 + $0x3c] sm:$0xf]
          %v1213 = vld [vmem:[#allocation9 + $0x40] sm:$0xf]
          %v1214 = vld [vmem:[#allocation9 + $0x44] sm:$0xf]
          %v1215 = vld [vmem:[#allocation9 + $0x48] sm:$0xf]
          %v1216 = vld [vmem:[#allocation9 + $0x4c] sm:$0xf]
          %v1217 = vld [vmem:[#allocation9 + $0x50] sm:$0xf]
          %v1218 = vld [vmem:[#allocation9 + $0x54] sm:$0xf]
          %v1219 = vld [vmem:[#allocation9 + $0x58] sm:$0xf]
          %v1220 = vld [vmem:[#allocation9 + $0x5c] sm:$0xf]
          %v1221 = vld [vmem:[#allocation9 + $0x60] sm:$0xf]
          %v1222 = vld [vmem:[#allocation9 + $0x64] sm:$0xf]
          %v1223 = vld [vmem:[#allocation9 + $0x68] sm:$0xf]
          %v1224 = vld [vmem:[#allocation9 + $0x6c] sm:$0xf]
          %v1225 = vld [vmem:[#allocation9 + $0x70] sm:$0xf]
          %v1226 = vld [vmem:[#allocation9 + $0x74] sm:$0xf]
          %v1227 = vld [vmem:[#allocation9 + $0x78] sm:$0xf]
          %v1228 = vld [vmem:[#allocation9 + $0x7c] sm:$0xf]
          %v1261 = vunpack.c.l.b16 %v1197
          %v1262 = vunpack.c.l.b16 %v1198
          %v1263 = vunpack.c.l.b16 %v1199
          %v1264 = vunpack.c.l.b16 %v1200
          %v1265 = vunpack.c.l.b16 %v1201
          %v1266 = vunpack.c.l.b16 %v1202
          %v1267 = vunpack.c.l.b16 %v1203
          %v1268 = vunpack.c.l.b16 %v1204
          %v1269 = vunpack.c.l.b16 %v1205
          %v1270 = vunpack.c.l.b16 %v1206
          %v1271 = vunpack.c.l.b16 %v1207
          %v1272 = vunpack.c.l.b16 %v1208
          %v1273 = vunpack.c.l.b16 %v1209
          %v1274 = vunpack.c.l.b16 %v1210
          %v1275 = vunpack.c.l.b16 %v1211
          %v1276 = vunpack.c.l.b16 %v1212
          %v1277 = vunpack.c.l.b16 %v1213
          %v1278 = vunpack.c.l.b16 %v1214
          %v1279 = vunpack.c.l.b16 %v1215
          %v1280 = vunpack.c.l.b16 %v1216
          %v1281 = vunpack.c.l.b16 %v1217
          %v1282 = vunpack.c.l.b16 %v1218
          %v1283 = vunpack.c.l.b16 %v1219
          %v1284 = vunpack.c.l.b16 %v1220
          %v1285 = vunpack.c.l.b16 %v1221
          %v1286 = vunpack.c.l.b16 %v1222
          %v1287 = vunpack.c.l.b16 %v1223
          %v1288 = vunpack.c.l.b16 %v1224
          %v1289 = vunpack.c.l.b16 %v1225
          %v1290 = vunpack.c.l.b16 %v1226
          %v1291 = vunpack.c.l.b16 %v1227
          %v1292 = vunpack.c.l.b16 %v1228
          %v1293 = vpack.c.b16 %v1262, %v1261
          %v1294 = vpack.c.b16 %v1264, %v1263
          %v1295 = vpack.c.b16 %v1266, %v1265
          %v1296 = vpack.c.b16 %v1268, %v1267
          %v1297 = vpack.c.b16 %v1270, %v1269
          %v1298 = vpack.c.b16 %v1272, %v1271
          %v1299 = vpack.c.b16 %v1274, %v1273
          %v1300 = vpack.c.b16 %v1276, %v1275
          %v1301 = vpack.c.b16 %v1278, %v1277
          %v1302 = vpack.c.b16 %v1280, %v1279
          %v1303 = vpack.c.b16 %v1282, %v1281
          %v1304 = vpack.c.b16 %v1284, %v1283
          %v1305 = vpack.c.b16 %v1286, %v1285
          %v1306 = vpack.c.b16 %v1288, %v1287
          %v1307 = vpack.c.b16 %v1290, %v1289
          %v1308 = vpack.c.b16 %v1292, %v1291
          %1325 = vmatprep.subr.bf16.mxu0 0
          %1326 = vmatpush1.bf16.msra.mxu0 %v1300
          %1327 = vmatprep.subr.bf16.mxu0 0
          %1328 = vmatpush1.bf16.msra.mxu0 %v1299
          %1329 = vmatprep.subr.bf16.mxu0 0
          %1330 = vmatpush1.bf16.msra.mxu0 %v1298
          %1331 = vmatprep.subr.bf16.mxu0 0
          %1332 = vmatpush1.bf16.msra.mxu0 %v1297
          %1333 = vmatprep.subr.bf16.mxu0 0
          %1334 = vmatpush1.bf16.msra.mxu0 %v1296
          %1335 = vmatprep.subr.bf16.mxu0 0
          %1336 = vmatpush1.bf16.msra.mxu0 %v1295
          %1337 = vmatprep.subr.bf16.mxu0 0
          %1338 = vmatpush1.bf16.msra.mxu0 %v1294
          %1339 = vmatprep.subr.bf16.mxu0 0
          %1340 = vmatpush1.bf16.msra.mxu0 %v1293
          %1341 = vmatprep.subr.bf16.mxu0 0
          %1342 = vmatpush2.bf16.msra.mxu0 %v1308
          %1343 = vmatprep.subr.bf16.mxu0 0
          %1344 = vmatpush2.bf16.msra.mxu0 %v1307
          %1345 = vmatprep.subr.bf16.mxu0 0
          %1346 = vmatpush2.bf16.msra.mxu0 %v1306
          %1347 = vmatprep.subr.bf16.mxu0 0
          %1348 = vmatpush2.bf16.msra.mxu0 %v1305
          %1349 = vmatprep.subr.bf16.mxu0 0
          %1350 = vmatpush2.bf16.msra.mxu0 %v1304
          %1351 = vmatprep.subr.bf16.mxu0 0
          %1352 = vmatpush2.bf16.msra.mxu0 %v1303
          %1353 = vmatprep.subr.bf16.mxu0 0
          %1354 = vmatpush2.bf16.msra.mxu0 %v1302
          %1355 = vmatprep.subr.bf16.mxu0 0
          %1356 = vmatpush2.bf16.msra.mxu0 %v1301
          %1357 = vmatprep.mubr.bf16.mxu0 %v1190
          %1358 = vmatmul.mubr.bf16.gmra.mxu0 %v1189
          %v1359 = vpop.f32.mrf.mxu0
          %v1360 = vadd.f32 0.0, %v1359
          %v1361 = vpop.f32.mrf.mxu0
          %v1362 = vpop.f32.mrf.mxu0
          %v1363 = vadd.f32 0.0, %v1362
          %v1364 = vpop.f32.mrf.mxu0
          %1365 = vmatprep.mubr.bf16.mxu0 %v1192
          %1366 = vmatmul.mubr.bf16.gmra.mxu0 %v1191
          %v1367 = vpop.f32.mrf.mxu0
          %v1368 = vadd.f32 0.0, %v1367
          %v1369 = vpop.f32.mrf.mxu0
          %v1370 = vpop.f32.mrf.mxu0
          %v1371 = vadd.f32 0.0, %v1370
          %v1372 = vpop.f32.mrf.mxu0
          %1373 = vmatprep.mubr.bf16.mxu0 %v1194
          %1374 = vmatmul.mubr.bf16.gmra.mxu0 %v1193
          %v1375 = vpop.f32.mrf.mxu0
          %v1376 = vadd.f32 0.0, %v1375
          %v1377 = vpop.f32.mrf.mxu0
          %v1378 = vpop.f32.mrf.mxu0
          %v1379 = vadd.f32 0.0, %v1378
          %v1380 = vpop.f32.mrf.mxu0
          %1381 = vmatprep.mubr.bf16.mxu0 %v1196
          %1382 = vmatmul.mubr.bf16.gmra.mxu0 %v1195
          %v1383 = vpop.f32.mrf.mxu0
          %v1384 = vadd.f32 0.0, %v1383
          %v1385 = vpop.f32.mrf.mxu0
          %v1386 = vpop.f32.mrf.mxu0
          %v1387 = vadd.f32 0.0, %v1386
          %v1388 = vpop.f32.mrf.mxu0
          %1389 = vdwg.mxu0
          %v1390 = vld [vmem:[%s339] sm:$0xff]
          %v1391 = vld [vmem:[%s339 + $0x8] sm:$0xff]
          %v1392 = vld [vmem:[%s339 + $0x10] sm:$0xff]
          %v1393 = vld [vmem:[%s339 + $0x18] sm:$0xff]
          %v1394 = vld [vmem:[%s339 + $0x20] sm:$0xff]
          %v1395 = vld [vmem:[%s339 + $0x28] sm:$0xff]
          %v1396 = vld [vmem:[%s339 + $0x30] sm:$0xff]
          %v1397 = vld [vmem:[%s339 + $0x38] sm:$0xff]
          %1399 = vset.pattern.permute.xlu0 0
          %1400 = vperm.xlu0 %1399, %v811
          %v1401 = vpop.permute.xlu0 %1400
          %1404 = vset.pattern.permute.xlu0 0
          %1405 = vperm.xlu0 %1404, %v812
          %v1406 = vpop.permute.xlu0 %1405
          %1409 = vset.pattern.permute.xlu0 0
          %1410 = vperm.xlu0 %1409, %v813
          %v1411 = vpop.permute.xlu0 %1410
          %1414 = vset.pattern.permute.xlu0 0
          %1415 = vperm.xlu0 %1414, %v814
          %v1416 = vpop.permute.xlu0 %1415
          %1419 = vset.pattern.permute.xlu0 0
          %1420 = vperm.xlu0 %1419, %v815
          %v1421 = vpop.permute.xlu0 %1420
          %1424 = vset.pattern.permute.xlu0 0
          %1425 = vperm.xlu0 %1424, %v816
          %v1426 = vpop.permute.xlu0 %1425
          %1429 = vset.pattern.permute.xlu0 0
          %1430 = vperm.xlu0 %1429, %v817
          %v1431 = vpop.permute.xlu0 %1430
          %1434 = vset.pattern.permute.xlu0 0
          %1435 = vperm.xlu0 %1434, %v818
          %v1436 = vpop.permute.xlu0 %1435
          %v1438 = vmul.f32 %v1401, %v1360
          %v1439 = vmul.f32 %v1406, %v1363
          %v1440 = vmul.f32 %v1411, %v1368
          %v1441 = vmul.f32 %v1416, %v1371
          %v1442 = vmul.f32 %v1421, %v1376
          %v1443 = vmul.f32 %v1426, %v1379
          %v1444 = vmul.f32 %v1431, %v1384
          %v1445 = vmul.f32 %v1436, %v1387
          %v1446 = vadd.f32 %v1390, %v1438
          %v1447 = vadd.f32 %v1391, %v1439
          %v1448 = vadd.f32 %v1392, %v1440
          %v1449 = vadd.f32 %v1393, %v1441
          %v1450 = vadd.f32 %v1394, %v1442
          %v1451 = vadd.f32 %v1395, %v1443
          %v1452 = vadd.f32 %v1396, %v1444
          %v1453 = vadd.f32 %v1397, %v1445
          %1454 = vst [vmem:[%s339] sm:$0xff] %v1446
          %1455 = vst [vmem:[%s339 + $0x8] sm:$0xff] %v1447
          %1456 = vst [vmem:[%s339 + $0x10] sm:$0xff] %v1448
          %1457 = vst [vmem:[%s339 + $0x18] sm:$0xff] %v1449
          %1458 = vst [vmem:[%s339 + $0x20] sm:$0xff] %v1450
          %1459 = vst [vmem:[%s339 + $0x28] sm:$0xff] %v1451
          %1460 = vst [vmem:[%s339 + $0x30] sm:$0xff] %v1452
          %1461 = vst [vmem:[%s339 + $0x38] sm:$0xff] %v1453
        $region60: #{tpu_custom_call.1} parent=35 // pred_fallthru
          _
        %1470 = vrot.lane.b32.xlu0 %v811, 127
        %v1471 = vpop.permute.xlu0 %1470
        %1472 = vrot.lane.b32.xlu0 %v812, 127
        %v1473 = vpop.permute.xlu0 %1472
        %1474 = vrot.lane.b32.xlu0 %v813, 127
        %v1475 = vpop.permute.xlu0 %1474
        %1476 = vrot.lane.b32.xlu0 %v814, 127
        %v1477 = vpop.permute.xlu0 %1476
        %1478 = vrot.lane.b32.xlu0 %v815, 127
        %v1479 = vpop.permute.xlu0 %1478
        %1480 = vrot.lane.b32.xlu0 %v816, 127
        %v1481 = vpop.permute.xlu0 %1480
        %1482 = vrot.lane.b32.xlu0 %v817, 127
        %v1483 = vpop.permute.xlu0 %1482
        %1484 = vrot.lane.b32.xlu0 %v818, 127
        %v1485 = vpop.permute.xlu0 %1484
        %v1494 = vsel %vm859, %v1471, 0.0
        %v1495 = vsel %vm859, %v1473, 0.0
        %v1496 = vadd.f32 %v1494, %v1495
        %v1497 = vsel %vm859, %v1475, 0.0
        %v1498 = vadd.f32 %v1496, %v1497
        %v1499 = vsel %vm859, %v1477, 0.0
        %v1500 = vadd.f32 %v1498, %v1499
        %v1501 = vsel %vm859, %v1479, 0.0
        %v1502 = vadd.f32 %v1500, %v1501
        %v1503 = vsel %vm859, %v1481, 0.0
        %v1504 = vadd.f32 %v1502, %v1503
        %v1505 = vsel %vm859, %v1483, 0.0
        %v1506 = vadd.f32 %v1504, %v1505
        %v1507 = vsel %vm859, %v1485, 0.0
        %v1508 = vadd.f32 %v1506, %v1507
        %1509 = vadd.xlane.f32.xlu0 %v1508
        %v1510 = vpop.xlane.xlu0 %1509
        %v1511 = vrot.slane %v1510, 4
        %v1512 = vadd.f32 %v1510, %v1511
        %v1513 = vrot.slane %v1512, 2
        %v1514 = vadd.f32 %v1512, %v1513
        %v1515 = vrot.slane %v1514, 1
        %v1516 = vadd.f32 %v1514, %v1515
        %s1517 = vtos %v1516
        %p1518 = scmp.gt.f32.partialorder %s1517, 0.0
        // Predicated region
        $region61: #{tpu_custom_call.1} parent=35 // pred_check
          %p1519 = pneg %p1518
        $region62: #{tpu_custom_call.1} parent=35 // pred_check_branch
          %1521 = sbr.rel (%p1519) target = $region64
        $region63: #{tpu_custom_call.1} parent=35 // pred_region
          %s1522 = scalar_lea.vmem [#allocation8], 128
          %v1523 = vld [vmem:[%s1522] sm:$0xff]
          %v1524 = vld [vmem:[%s1522 + $0x8] sm:$0xff]
          %v1525 = vld [vmem:[%s1522 + $0x10] sm:$0xff]
          %v1526 = vld [vmem:[%s1522 + $0x18] sm:$0xff]
          %v1527 = vld [vmem:[%s1522 + $0x20] sm:$0xff]
          %v1528 = vld [vmem:[%s1522 + $0x28] sm:$0xff]
          %v1529 = vld [vmem:[%s1522 + $0x30] sm:$0xff]
          %v1530 = vld [vmem:[%s1522 + $0x38] sm:$0xff]
          %v1531 = vld [vmem:[%s1522 + $0x40] sm:$0xff]
          %v1532 = vld [vmem:[%s1522 + $0x48] sm:$0xff]
          %v1533 = vld [vmem:[%s1522 + $0x50] sm:$0xff]
          %v1534 = vld [vmem:[%s1522 + $0x58] sm:$0xff]
          %v1535 = vld [vmem:[%s1522 + $0x60] sm:$0xff]
          %v1536 = vld [vmem:[%s1522 + $0x68] sm:$0xff]
          %v1537 = vld [vmem:[%s1522 + $0x70] sm:$0xff]
          %v1538 = vld [vmem:[%s1522 + $0x78] sm:$0xff]
          %v1555 = vunpack.c.l.b16 %v1523
          %v1556 = vunpack.c.h.b16 %v1523
          %v1557 = vunpack.c.l.b16 %v1524
          %v1558 = vunpack.c.h.b16 %v1524
          %v1559 = vunpack.c.l.b16 %v1525
          %v1560 = vunpack.c.h.b16 %v1525
          %v1561 = vunpack.c.l.b16 %v1526
          %v1562 = vunpack.c.h.b16 %v1526
          %v1563 = vunpack.c.l.b16 %v1527
          %v1564 = vunpack.c.h.b16 %v1527
          %v1565 = vunpack.c.l.b16 %v1528
          %v1566 = vunpack.c.h.b16 %v1528
          %v1567 = vunpack.c.l.b16 %v1529
          %v1568 = vunpack.c.h.b16 %v1529
          %v1569 = vunpack.c.l.b16 %v1530
          %v1570 = vunpack.c.h.b16 %v1530
          %v1571 = vunpack.c.l.b16 %v1531
          %v1572 = vunpack.c.h.b16 %v1531
          %v1573 = vunpack.c.l.b16 %v1532
          %v1574 = vunpack.c.h.b16 %v1532
          %v1575 = vunpack.c.l.b16 %v1533
          %v1576 = vunpack.c.h.b16 %v1533
          %v1577 = vunpack.c.l.b16 %v1534
          %v1578 = vunpack.c.h.b16 %v1534
          %v1579 = vunpack.c.l.b16 %v1535
          %v1580 = vunpack.c.h.b16 %v1535
          %v1581 = vunpack.c.l.b16 %v1536
          %v1582 = vunpack.c.h.b16 %v1536
          %v1583 = vunpack.c.l.b16 %v1537
          %v1584 = vunpack.c.h.b16 %v1537
          %v1585 = vunpack.c.l.b16 %v1538
          %v1586 = vunpack.c.h.b16 %v1538
          %v1587 = vpack.c.b16 %v1557, %v1555
          %v1588 = vpack.c.b16 %v1558, %v1556
          %v1589 = vpack.c.b16 %v1561, %v1559
          %v1590 = vpack.c.b16 %v1562, %v1560
          %v1591 = vpack.c.b16 %v1565, %v1563
          %v1592 = vpack.c.b16 %v1566, %v1564
          %v1593 = vpack.c.b16 %v1569, %v1567
          %v1594 = vpack.c.b16 %v1570, %v1568
          %v1595 = vpack.c.b16 %v1573, %v1571
          %v1596 = vpack.c.b16 %v1574, %v1572
          %v1597 = vpack.c.b16 %v1577, %v1575
          %v1598 = vpack.c.b16 %v1578, %v1576
          %v1599 = vpack.c.b16 %v1581, %v1579
          %v1600 = vpack.c.b16 %v1582, %v1580
          %v1601 = vpack.c.b16 %v1585, %v1583
          %v1602 = vpack.c.b16 %v1586, %v1584
          %1619 = vmatprep.subr.bf16.mxu0 %v1602
          %1620 = vmatpush1.bf16.msra.mxu0 %v1601
          %1621 = vmatprep.subr.bf16.mxu0 %v1600
          %1622 = vmatpush1.bf16.msra.mxu0 %v1599
          %1623 = vmatprep.subr.bf16.mxu0 %v1598
          %1624 = vmatpush1.bf16.msra.mxu0 %v1597
          %1625 = vmatprep.subr.bf16.mxu0 %v1596
          %1626 = vmatpush1.bf16.msra.mxu0 %v1595
          %1627 = vmatprep.subr.bf16.mxu0 %v1594
          %1628 = vmatpush1.bf16.msra.mxu0 %v1593
          %1629 = vmatprep.subr.bf16.mxu0 %v1592
          %1630 = vmatpush1.bf16.msra.mxu0 %v1591
          %1631 = vmatprep.subr.bf16.mxu0 %v1590
          %1632 = vmatpush1.bf16.msra.mxu0 %v1589
          %1633 = vmatprep.subr.bf16.mxu0 %v1588
          %1634 = vmatpush1.bf16.msra.mxu0 %v1587
          %1635 = vmatprep.subr.bf16.mxu0 0
          %1636 = vmatpush2.bf16.msra.mxu0 0
          %1637 = vmatprep.subr.bf16.mxu0 0
          %1638 = vmatpush2.bf16.msra.mxu0 0
          %1639 = vmatprep.subr.bf16.mxu0 0
          %1640 = vmatpush2.bf16.msra.mxu0 0
          %1641 = vmatprep.subr.bf16.mxu0 0
          %1642 = vmatpush2.bf16.msra.mxu0 0
          %1643 = vmatprep.subr.bf16.mxu0 0
          %1644 = vmatpush2.bf16.msra.mxu0 0
          %1645 = vmatprep.subr.bf16.mxu0 0
          %1646 = vmatpush2.bf16.msra.mxu0 0
          %1647 = vmatprep.subr.bf16.mxu0 0
          %1648 = vmatpush2.bf16.msra.mxu0 0
          %1649 = vmatprep.subr.bf16.mxu0 0
          %1650 = vmatpush2.bf16.msra.mxu0 0
          %1651 = vmatprep.mubr.bf16.mxu0 0
          %1652 = vmatmul.mubr.bf16.gmra.mxu0 %v868
          %v1653 = vpop.f32.mrf.mxu0
          %v1654 = vadd.f32 0.0, %v1653
          %v1655 = vpop.f32.mrf.mxu0
          %v1656 = vadd.f32 0.0, %v1655
          %v1657 = vpop.f32.mrf.mxu0
          %v1658 = vadd.f32 0.0, %v1657
          %v1659 = vpop.f32.mrf.mxu0
          %v1660 = vadd.f32 0.0, %v1659
          %1661 = vmatprep.mubr.bf16.mxu0 0
          %1662 = vmatmul.mubr.bf16.gmra.mxu0 %v869
          %v1663 = vpop.f32.mrf.mxu0
          %v1664 = vadd.f32 0.0, %v1663
          %v1665 = vpop.f32.mrf.mxu0
          %v1666 = vadd.f32 0.0, %v1665
          %v1667 = vpop.f32.mrf.mxu0
          %v1668 = vadd.f32 0.0, %v1667
          %v1669 = vpop.f32.mrf.mxu0
          %v1670 = vadd.f32 0.0, %v1669
          %1671 = vmatprep.mubr.bf16.mxu0 0
          %1672 = vmatmul.mubr.bf16.gmra.mxu0 %v870
          %v1673 = vpop.f32.mrf.mxu0
          %v1674 = vadd.f32 0.0, %v1673
          %v1675 = vpop.f32.mrf.mxu0
          %v1676 = vadd.f32 0.0, %v1675
          %v1677 = vpop.f32.mrf.mxu0
          %v1678 = vadd.f32 0.0, %v1677
          %v1679 = vpop.f32.mrf.mxu0
          %v1680 = vadd.f32 0.0, %v1679
          %1681 = vmatprep.mubr.bf16.mxu0 0
          %1682 = vmatmul.mubr.bf16.gmra.mxu0 %v871
          %v1683 = vpop.f32.mrf.mxu0
          %v1684 = vadd.f32 0.0, %v1683
          %v1685 = vpop.f32.mrf.mxu0
          %v1686 = vadd.f32 0.0, %v1685
          %v1687 = vpop.f32.mrf.mxu0
          %v1688 = vadd.f32 0.0, %v1687
          %v1689 = vpop.f32.mrf.mxu0
          %v1690 = vadd.f32 0.0, %v1689
          %1691 = vdwg.mxu0
          %v1692 = vxor.u32 %v1654, 2147483648
          %v1693 = vxor.u32 %v1656, 2147483648
          %v1694 = vxor.u32 %v1658, 2147483648
          %v1695 = vxor.u32 %v1660, 2147483648
          %v1696 = vxor.u32 %v1664, 2147483648
          %v1697 = vxor.u32 %v1666, 2147483648
          %v1698 = vxor.u32 %v1668, 2147483648
          %v1699 = vxor.u32 %v1670, 2147483648
          %v1700 = vxor.u32 %v1674, 2147483648
          %v1701 = vxor.u32 %v1676, 2147483648
          %v1702 = vxor.u32 %v1678, 2147483648
          %v1703 = vxor.u32 %v1680, 2147483648
          %v1704 = vxor.u32 %v1684, 2147483648
          %v1705 = vxor.u32 %v1686, 2147483648
          %v1706 = vxor.u32 %v1688, 2147483648
          %v1707 = vxor.u32 %v1690, 2147483648
          %v1708 = vmul.f32 %v1692, 1.442695
          %v1709 = vpow.pop %v1708
          %v1710 = vmul.f32 %v1693, 1.442695
          %v1711 = vpow.pop %v1710
          %v1712 = vmul.f32 %v1694, 1.442695
          %v1713 = vpow.pop %v1712
          %v1714 = vmul.f32 %v1695, 1.442695
          %v1715 = vpow.pop %v1714
          %v1716 = vmul.f32 %v1696, 1.442695
          %v1717 = vpow.pop %v1716
          %v1718 = vmul.f32 %v1697, 1.442695
          %v1719 = vpow.pop %v1718
          %v1720 = vmul.f32 %v1698, 1.442695
          %v1721 = vpow.pop %v1720
          %v1722 = vmul.f32 %v1699, 1.442695
          %v1723 = vpow.pop %v1722
          %v1724 = vmul.f32 %v1700, 1.442695
          %v1725 = vpow.pop %v1724
          %v1726 = vmul.f32 %v1701, 1.442695
          %v1727 = vpow.pop %v1726
          %v1728 = vmul.f32 %v1702, 1.442695
          %v1729 = vpow.pop %v1728
          %v1730 = vmul.f32 %v1703, 1.442695
          %v1731 = vpow.pop %v1730
          %v1732 = vmul.f32 %v1704, 1.442695
          %v1733 = vpow.pop %v1732
          %v1734 = vmul.f32 %v1705, 1.442695
          %v1735 = vpow.pop %v1734
          %v1736 = vmul.f32 %v1706, 1.442695
          %v1737 = vpow.pop %v1736
          %v1738 = vmul.f32 %v1707, 1.442695
          %v1739 = vpow.pop %v1738
          %v1740 = vadd.f32 %v1709, 1.0
          %v1741 = vadd.f32 %v1711, 1.0
          %v1742 = vadd.f32 %v1713, 1.0
          %v1743 = vadd.f32 %v1715, 1.0
          %v1744 = vadd.f32 %v1717, 1.0
          %v1745 = vadd.f32 %v1719, 1.0
          %v1746 = vadd.f32 %v1721, 1.0
          %v1747 = vadd.f32 %v1723, 1.0
          %v1748 = vadd.f32 %v1725, 1.0
          %v1749 = vadd.f32 %v1727, 1.0
          %v1750 = vadd.f32 %v1729, 1.0
          %v1751 = vadd.f32 %v1731, 1.0
          %v1752 = vadd.f32 %v1733, 1.0
          %v1753 = vadd.f32 %v1735, 1.0
          %v1754 = vadd.f32 %v1737, 1.0
          %v1755 = vadd.f32 %v1739, 1.0
          %v1756 = vrcp.pop %v1740
          %v1757 = vmul.f32 1.0, %v1756
          %v1758 = vrcp.pop %v1741
          %v1759 = vmul.f32 1.0, %v1758
          %v1760 = vrcp.pop %v1742
          %v1761 = vmul.f32 1.0, %v1760
          %v1762 = vrcp.pop %v1743
          %v1763 = vmul.f32 1.0, %v1762
          %v1764 = vrcp.pop %v1744
          %v1765 = vmul.f32 1.0, %v1764
          %v1766 = vrcp.pop %v1745
          %v1767 = vmul.f32 1.0, %v1766
          %v1768 = vrcp.pop %v1746
          %v1769 = vmul.f32 1.0, %v1768
          %v1770 = vrcp.pop %v1747
          %v1771 = vmul.f32 1.0, %v1770
          %v1772 = vrcp.pop %v1748
          %v1773 = vmul.f32 1.0, %v1772
          %v1774 = vrcp.pop %v1749
          %v1775 = vmul.f32 1.0, %v1774
          %v1776 = vrcp.pop %v1750
          %v1777 = vmul.f32 1.0, %v1776
          %v1778 = vrcp.pop %v1751
          %v1779 = vmul.f32 1.0, %v1778
          %v1780 = vrcp.pop %v1752
          %v1781 = vmul.f32 1.0, %v1780
          %v1782 = vrcp.pop %v1753
          %v1783 = vmul.f32 1.0, %v1782
          %v1784 = vrcp.pop %v1754
          %v1785 = vmul.f32 1.0, %v1784
          %v1786 = vrcp.pop %v1755
          %v1787 = vmul.f32 1.0, %v1786
          %v1788 = vmul.f32 %v1654, %v1757
          %v1789 = vmul.f32 %v1656, %v1759
          %v1790 = vmul.f32 %v1658, %v1761
          %v1791 = vmul.f32 %v1660, %v1763
          %v1792 = vmul.f32 %v1664, %v1765
          %v1793 = vmul.f32 %v1666, %v1767
          %v1794 = vmul.f32 %v1668, %v1769
          %v1795 = vmul.f32 %v1670, %v1771
          %v1796 = vmul.f32 %v1674, %v1773
          %v1797 = vmul.f32 %v1676, %v1775
          %v1798 = vmul.f32 %v1678, %v1777
          %v1799 = vmul.f32 %v1680, %v1779
          %v1800 = vmul.f32 %v1684, %v1781
          %v1801 = vmul.f32 %v1686, %v1783
          %v1802 = vmul.f32 %v1688, %v1785
          %v1803 = vmul.f32 %v1690, %v1787
          %v1804 = vpack.c.bf16 %v1790, %v1788
          %v1805 = vpack.c.bf16 %v1791, %v1789
          %v1806 = vpack.c.bf16 %v1794, %v1792
          %v1807 = vpack.c.bf16 %v1795, %v1793
          %v1808 = vpack.c.bf16 %v1798, %v1796
          %v1809 = vpack.c.bf16 %v1799, %v1797
          %v1810 = vpack.c.bf16 %v1802, %v1800
          %v1811 = vpack.c.bf16 %v1803, %v1801
          %s1812 = scalar_lea.vmem [#allocation9], 128
          %v1813 = vld [vmem:[%s1812] sm:$0xf]
          %v1814 = vld [vmem:[%s1812 + $0x4] sm:$0xf]
          %v1815 = vld [vmem:[%s1812 + $0x8] sm:$0xf]
          %v1816 = vld [vmem:[%s1812 + $0xc] sm:$0xf]
          %v1817 = vld [vmem:[%s1812 + $0x10] sm:$0xf]
          %v1818 = vld [vmem:[%s1812 + $0x14] sm:$0xf]
          %v1819 = vld [vmem:[%s1812 + $0x18] sm:$0xf]
          %v1820 = vld [vmem:[%s1812 + $0x1c] sm:$0xf]
          %v1821 = vld [vmem:[%s1812 + $0x20] sm:$0xf]
          %v1822 = vld [vmem:[%s1812 + $0x24] sm:$0xf]
          %v1823 = vld [vmem:[%s1812 + $0x28] sm:$0xf]
          %v1824 = vld [vmem:[%s1812 + $0x2c] sm:$0xf]
          %v1825 = vld [vmem:[%s1812 + $0x30] sm:$0xf]
          %v1826 = vld [vmem:[%s1812 + $0x34] sm:$0xf]
          %v1827 = vld [vmem:[%s1812 + $0x38] sm:$0xf]
          %v1828 = vld [vmem:[%s1812 + $0x3c] sm:$0xf]
          %v1829 = vld [vmem:[%s1812 + $0x40] sm:$0xf]
          %v1830 = vld [vmem:[%s1812 + $0x44] sm:$0xf]
          %v1831 = vld [vmem:[%s1812 + $0x48] sm:$0xf]
          %v1832 = vld [vmem:[%s1812 + $0x4c] sm:$0xf]
          %v1833 = vld [vmem:[%s1812 + $0x50] sm:$0xf]
          %v1834 = vld [vmem:[%s1812 + $0x54] sm:$0xf]
          %v1835 = vld [vmem:[%s1812 + $0x58] sm:$0xf]
          %v1836 = vld [vmem:[%s1812 + $0x5c] sm:$0xf]
          %v1837 = vld [vmem:[%s1812 + $0x60] sm:$0xf]
          %v1838 = vld [vmem:[%s1812 + $0x64] sm:$0xf]
          %v1839 = vld [vmem:[%s1812 + $0x68] sm:$0xf]
          %v1840 = vld [vmem:[%s1812 + $0x6c] sm:$0xf]
          %v1841 = vld [vmem:[%s1812 + $0x70] sm:$0xf]
          %v1842 = vld [vmem:[%s1812 + $0x74] sm:$0xf]
          %v1843 = vld [vmem:[%s1812 + $0x78] sm:$0xf]
          %v1844 = vld [vmem:[%s1812 + $0x7c] sm:$0xf]
          %v1877 = vunpack.c.l.b16 %v1813
          %v1878 = vunpack.c.l.b16 %v1814
          %v1879 = vunpack.c.l.b16 %v1815
          %v1880 = vunpack.c.l.b16 %v1816
          %v1881 = vunpack.c.l.b16 %v1817
          %v1882 = vunpack.c.l.b16 %v1818
          %v1883 = vunpack.c.l.b16 %v1819
          %v1884 = vunpack.c.l.b16 %v1820
          %v1885 = vunpack.c.l.b16 %v1821
          %v1886 = vunpack.c.l.b16 %v1822
          %v1887 = vunpack.c.l.b16 %v1823
          %v1888 = vunpack.c.l.b16 %v1824
          %v1889 = vunpack.c.l.b16 %v1825
          %v1890 = vunpack.c.l.b16 %v1826
          %v1891 = vunpack.c.l.b16 %v1827
          %v1892 = vunpack.c.l.b16 %v1828
          %v1893 = vunpack.c.l.b16 %v1829
          %v1894 = vunpack.c.l.b16 %v1830
          %v1895 = vunpack.c.l.b16 %v1831
          %v1896 = vunpack.c.l.b16 %v1832
          %v1897 = vunpack.c.l.b16 %v1833
          %v1898 = vunpack.c.l.b16 %v1834
          %v1899 = vunpack.c.l.b16 %v1835
          %v1900 = vunpack.c.l.b16 %v1836
          %v1901 = vunpack.c.l.b16 %v1837
          %v1902 = vunpack.c.l.b16 %v1838
          %v1903 = vunpack.c.l.b16 %v1839
          %v1904 = vunpack.c.l.b16 %v1840
          %v1905 = vunpack.c.l.b16 %v1841
          %v1906 = vunpack.c.l.b16 %v1842
          %v1907 = vunpack.c.l.b16 %v1843
          %v1908 = vunpack.c.l.b16 %v1844
          %v1909 = vpack.c.b16 %v1878, %v1877
          %v1910 = vpack.c.b16 %v1880, %v1879
          %v1911 = vpack.c.b16 %v1882, %v1881
          %v1912 = vpack.c.b16 %v1884, %v1883
          %v1913 = vpack.c.b16 %v1886, %v1885
          %v1914 = vpack.c.b16 %v1888, %v1887
          %v1915 = vpack.c.b16 %v1890, %v1889
          %v1916 = vpack.c.b16 %v1892, %v1891
          %v1917 = vpack.c.b16 %v1894, %v1893
          %v1918 = vpack.c.b16 %v1896, %v1895
          %v1919 = vpack.c.b16 %v1898, %v1897
          %v1920 = vpack.c.b16 %v1900, %v1899
          %v1921 = vpack.c.b16 %v1902, %v1901
          %v1922 = vpack.c.b16 %v1904, %v1903
          %v1923 = vpack.c.b16 %v1906, %v1905
          %v1924 = vpack.c.b16 %v1908, %v1907
          %1941 = vmatprep.subr.bf16.mxu0 0
          %1942 = vmatpush1.bf16.msra.mxu0 %v1916
          %1943 = vmatprep.subr.bf16.mxu0 0
          %1944 = vmatpush1.bf16.msra.mxu0 %v1915
          %1945 = vmatprep.subr.bf16.mxu0 0
          %1946 = vmatpush1.bf16.msra.mxu0 %v1914
          %1947 = vmatprep.subr.bf16.mxu0 0
          %1948 = vmatpush1.bf16.msra.mxu0 %v1913
          %1949 = vmatprep.subr.bf16.mxu0 0
          %1950 = vmatpush1.bf16.msra.mxu0 %v1912
          %1951 = vmatprep.subr.bf16.mxu0 0
          %1952 = vmatpush1.bf16.msra.mxu0 %v1911
          %1953 = vmatprep.subr.bf16.mxu0 0
          %1954 = vmatpush1.bf16.msra.mxu0 %v1910
          %1955 = vmatprep.subr.bf16.mxu0 0
          %1956 = vmatpush1.bf16.msra.mxu0 %v1909
          %1957 = vmatprep.subr.bf16.mxu0 0
          %1958 = vmatpush2.bf16.msra.mxu0 %v1924
          %1959 = vmatprep.subr.bf16.mxu0 0
          %1960 = vmatpush2.bf16.msra.mxu0 %v1923
          %1961 = vmatprep.subr.bf16.mxu0 0
          %1962 = vmatpush2.bf16.msra.mxu0 %v1922
          %1963 = vmatprep.subr.bf16.mxu0 0
          %1964 = vmatpush2.bf16.msra.mxu0 %v1921
          %1965 = vmatprep.subr.bf16.mxu0 0
          %1966 = vmatpush2.bf16.msra.mxu0 %v1920
          %1967 = vmatprep.subr.bf16.mxu0 0
          %1968 = vmatpush2.bf16.msra.mxu0 %v1919
          %1969 = vmatprep.subr.bf16.mxu0 0
          %1970 = vmatpush2.bf16.msra.mxu0 %v1918
          %1971 = vmatprep.subr.bf16.mxu0 0
          %1972 = vmatpush2.bf16.msra.mxu0 %v1917
          %1973 = vmatprep.mubr.bf16.mxu0 %v1805
          %1974 = vmatmul.mubr.bf16.gmra.mxu0 %v1804
          %v1975 = vpop.f32.mrf.mxu0
          %v1976 = vadd.f32 0.0, %v1975
          %v1977 = vpop.f32.mrf.mxu0
          %v1978 = vpop.f32.mrf.mxu0
          %v1979 = vadd.f32 0.0, %v1978
          %v1980 = vpop.f32.mrf.mxu0
          %1981 = vmatprep.mubr.bf16.mxu0 %v1807
          %1982 = vmatmul.mubr.bf16.gmra.mxu0 %v1806
          %v1983 = vpop.f32.mrf.mxu0
          %v1984 = vadd.f32 0.0, %v1983
          %v1985 = vpop.f32.mrf.mxu0
          %v1986 = vpop.f32.mrf.mxu0
          %v1987 = vadd.f32 0.0, %v1986
          %v1988 = vpop.f32.mrf.mxu0
          %1989 = vmatprep.mubr.bf16.mxu0 %v1809
          %1990 = vmatmul.mubr.bf16.gmra.mxu0 %v1808
          %v1991 = vpop.f32.mrf.mxu0
          %v1992 = vadd.f32 0.0, %v1991
          %v1993 = vpop.f32.mrf.mxu0
          %v1994 = vpop.f32.mrf.mxu0
          %v1995 = vadd.f32 0.0, %v1994
          %v1996 = vpop.f32.mrf.mxu0
          %1997 = vmatprep.mubr.bf16.mxu0 %v1811
          %1998 = vmatmul.mubr.bf16.gmra.mxu0 %v1810
          %v1999 = vpop.f32.mrf.mxu0
          %v2000 = vadd.f32 0.0, %v1999
          %v2001 = vpop.f32.mrf.mxu0
          %v2002 = vpop.f32.mrf.mxu0
          %v2003 = vadd.f32 0.0, %v2002
          %v2004 = vpop.f32.mrf.mxu0
          %2005 = vdwg.mxu0
          %v2006 = vld [vmem:[%s339] sm:$0xff]
          %v2007 = vld [vmem:[%s339 + $0x8] sm:$0xff]
          %v2008 = vld [vmem:[%s339 + $0x10] sm:$0xff]
          %v2009 = vld [vmem:[%s339 + $0x18] sm:$0xff]
          %v2010 = vld [vmem:[%s339 + $0x20] sm:$0xff]
          %v2011 = vld [vmem:[%s339 + $0x28] sm:$0xff]
          %v2012 = vld [vmem:[%s339 + $0x30] sm:$0xff]
          %v2013 = vld [vmem:[%s339 + $0x38] sm:$0xff]
          %2014 = vset.pattern.permute.xlu0 1
          %2015 = vperm.xlu0 %2014, %v811
          %v2016 = vpop.permute.xlu0 %2015
          %2018 = vset.pattern.permute.xlu0 1
          %2019 = vperm.xlu0 %2018, %v812
          %v2020 = vpop.permute.xlu0 %2019
          %2022 = vset.pattern.permute.xlu0 1
          %2023 = vperm.xlu0 %2022, %v813
          %v2024 = vpop.permute.xlu0 %2023
          %2026 = vset.pattern.permute.xlu0 1
          %2027 = vperm.xlu0 %2026, %v814
          %v2028 = vpop.permute.xlu0 %2027
          %2030 = vset.pattern.permute.xlu0 1
          %2031 = vperm.xlu0 %2030, %v815
          %v2032 = vpop.permute.xlu0 %2031
          %2034 = vset.pattern.permute.xlu0 1
          %2035 = vperm.xlu0 %2034, %v816
          %v2036 = vpop.permute.xlu0 %2035
          %2038 = vset.pattern.permute.xlu0 1
          %2039 = vperm.xlu0 %2038, %v817
          %v2040 = vpop.permute.xlu0 %2039
          %2042 = vset.pattern.permute.xlu0 1
          %2043 = vperm.xlu0 %2042, %v818
          %v2044 = vpop.permute.xlu0 %2043
          %v2046 = vmul.f32 %v2016, %v1976
          %v2047 = vmul.f32 %v2020, %v1979
          %v2048 = vmul.f32 %v2024, %v1984
          %v2049 = vmul.f32 %v2028, %v1987
          %v2050 = vmul.f32 %v2032, %v1992
          %v2051 = vmul.f32 %v2036, %v1995
          %v2052 = vmul.f32 %v2040, %v2000
          %v2053 = vmul.f32 %v2044, %v2003
          %v2054 = vadd.f32 %v2006, %v2046
          %v2055 = vadd.f32 %v2007, %v2047
          %v2056 = vadd.f32 %v2008, %v2048
          %v2057 = vadd.f32 %v2009, %v2049
          %v2058 = vadd.f32 %v2010, %v2050
          %v2059 = vadd.f32 %v2011, %v2051
          %v2060 = vadd.f32 %v2012, %v2052
          %v2061 = vadd.f32 %v2013, %v2053
          %2062 = vst [vmem:[%s339] sm:$0xff] %v2054
          %2063 = vst [vmem:[%s339 + $0x8] sm:$0xff] %v2055
          %2064 = vst [vmem:[%s339 + $0x10] sm:$0xff] %v2056
          %2065 = vst [vmem:[%s339 + $0x18] sm:$0xff] %v2057
          %2066 = vst [vmem:[%s339 + $0x20] sm:$0xff] %v2058
          %2067 = vst [vmem:[%s339 + $0x28] sm:$0xff] %v2059
          %2068 = vst [vmem:[%s339 + $0x30] sm:$0xff] %v2060
          %2069 = vst [vmem:[%s339 + $0x38] sm:$0xff] %v2061
        $region64: #{tpu_custom_call.1} parent=35 // pred_fallthru
          _
        %2070 = vrot.lane.b32.xlu0 %v811, 126
        %v2071 = vpop.permute.xlu0 %2070
        %2072 = vrot.lane.b32.xlu0 %v812, 126
        %v2073 = vpop.permute.xlu0 %2072
        %2074 = vrot.lane.b32.xlu0 %v813, 126
        %v2075 = vpop.permute.xlu0 %2074
        %2076 = vrot.lane.b32.xlu0 %v814, 126
        %v2077 = vpop.permute.xlu0 %2076
        %2078 = vrot.lane.b32.xlu0 %v815, 126
        %v2079 = vpop.permute.xlu0 %2078
        %2080 = vrot.lane.b32.xlu0 %v816, 126
        %v2081 = vpop.permute.xlu0 %2080
        %2082 = vrot.lane.b32.xlu0 %v817, 126
        %v2083 = vpop.permute.xlu0 %2082
        %2084 = vrot.lane.b32.xlu0 %v818, 126
        %v2085 = vpop.permute.xlu0 %2084
        %v2094 = vsel %vm859, %v2071, 0.0
        %v2095 = vsel %vm859, %v2073, 0.0
        %v2096 = vadd.f32 %v2094, %v2095
        %v2097 = vsel %vm859, %v2075, 0.0
        %v2098 = vadd.f32 %v2096, %v2097
        %v2099 = vsel %vm859, %v2077, 0.0
        %v2100 = vadd.f32 %v2098, %v2099
        %v2101 = vsel %vm859, %v2079, 0.0
        %v2102 = vadd.f32 %v2100, %v2101
        %v2103 = vsel %vm859, %v2081, 0.0
        %v2104 = vadd.f32 %v2102, %v2103
        %v2105 = vsel %vm859, %v2083, 0.0
        %v2106 = vadd.f32 %v2104, %v2105
        %v2107 = vsel %vm859, %v2085, 0.0
        %v2108 = vadd.f32 %v2106, %v2107
        %2109 = vadd.xlane.f32.xlu0 %v2108
        %v2110 = vpop.xlane.xlu0 %2109
        %v2111 = vrot.slane %v2110, 4
        %v2112 = vadd.f32 %v2110, %v2111
        %v2113 = vrot.slane %v2112, 2
        %v2114 = vadd.f32 %v2112, %v2113
        %v2115 = vrot.slane %v2114, 1
        %v2116 = vadd.f32 %v2114, %v2115
        %s2117 = vtos %v2116
        %p2118 = scmp.gt.f32.partialorder %s2117, 0.0
        // Predicated region
        $region65: #{tpu_custom_call.1} parent=35 // pred_check
          %p2119 = pneg %p2118
        $region66: #{tpu_custom_call.1} parent=35 // pred_check_branch
          %2121 = sbr.rel (%p2119) target = $region68
        $region67: #{tpu_custom_call.1} parent=35 // pred_region
          %s2122 = scalar_lea.vmem [#allocation8], 256
          %v2123 = vld [vmem:[%s2122] sm:$0xff]
          %v2124 = vld [vmem:[%s2122 + $0x8] sm:$0xff]
          %v2125 = vld [vmem:[%s2122 + $0x10] sm:$0xff]
          %v2126 = vld [vmem:[%s2122 + $0x18] sm:$0xff]
          %v2127 = vld [vmem:[%s2122 + $0x20] sm:$0xff]
          %v2128 = vld [vmem:[%s2122 + $0x28] sm:$0xff]
          %v2129 = vld [vmem:[%s2122 + $0x30] sm:$0xff]
          %v2130 = vld [vmem:[%s2122 + $0x38] sm:$0xff]
          %v2131 = vld [vmem:[%s2122 + $0x40] sm:$0xff]
          %v2132 = vld [vmem:[%s2122 + $0x48] sm:$0xff]
          %v2133 = vld [vmem:[%s2122 + $0x50] sm:$0xff]
          %v2134 = vld [vmem:[%s2122 + $0x58] sm:$0xff]
          %v2135 = vld [vmem:[%s2122 + $0x60] sm:$0xff]
          %v2136 = vld [vmem:[%s2122 + $0x68] sm:$0xff]
          %v2137 = vld [vmem:[%s2122 + $0x70] sm:$0xff]
          %v2138 = vld [vmem:[%s2122 + $0x78] sm:$0xff]
          %v2155 = vunpack.c.l.b16 %v2123
          %v2156 = vunpack.c.h.b16 %v2123
          %v2157 = vunpack.c.l.b16 %v2124
          %v2158 = vunpack.c.h.b16 %v2124
          %v2159 = vunpack.c.l.b16 %v2125
          %v2160 = vunpack.c.h.b16 %v2125
          %v2161 = vunpack.c.l.b16 %v2126
          %v2162 = vunpack.c.h.b16 %v2126
          %v2163 = vunpack.c.l.b16 %v2127
          %v2164 = vunpack.c.h.b16 %v2127
          %v2165 = vunpack.c.l.b16 %v2128
          %v2166 = vunpack.c.h.b16 %v2128
          %v2167 = vunpack.c.l.b16 %v2129
          %v2168 = vunpack.c.h.b16 %v2129
          %v2169 = vunpack.c.l.b16 %v2130
          %v2170 = vunpack.c.h.b16 %v2130
          %v2171 = vunpack.c.l.b16 %v2131
          %v2172 = vunpack.c.h.b16 %v2131
          %v2173 = vunpack.c.l.b16 %v2132
          %v2174 = vunpack.c.h.b16 %v2132
          %v2175 = vunpack.c.l.b16 %v2133
          %v2176 = vunpack.c.h.b16 %v2133
          %v2177 = vunpack.c.l.b16 %v2134
          %v2178 = vunpack.c.h.b16 %v2134
          %v2179 = vunpack.c.l.b16 %v2135
          %v2180 = vunpack.c.h.b16 %v2135
          %v2181 = vunpack.c.l.b16 %v2136
          %v2182 = vunpack.c.h.b16 %v2136
          %v2183 = vunpack.c.l.b16 %v2137
          %v2184 = vunpack.c.h.b16 %v2137
          %v2185 = vunpack.c.l.b16 %v2138
          %v2186 = vunpack.c.h.b16 %v2138
          %v2187 = vpack.c.b16 %v2157, %v2155
          %v2188 = vpack.c.b16 %v2158, %v2156
          %v2189 = vpack.c.b16 %v2161, %v2159
          %v2190 = vpack.c.b16 %v2162, %v2160
          %v2191 = vpack.c.b16 %v2165, %v2163
          %v2192 = vpack.c.b16 %v2166, %v2164
          %v2193 = vpack.c.b16 %v2169, %v2167
          %v2194 = vpack.c.b16 %v2170, %v2168
          %v2195 = vpack.c.b16 %v2173, %v2171
          %v2196 = vpack.c.b16 %v2174, %v2172
          %v2197 = vpack.c.b16 %v2177, %v2175
          %v2198 = vpack.c.b16 %v2178, %v2176
          %v2199 = vpack.c.b16 %v2181, %v2179
          %v2200 = vpack.c.b16 %v2182, %v2180
          %v2201 = vpack.c.b16 %v2185, %v2183
          %v2202 = vpack.c.b16 %v2186, %v2184
          %2219 = vmatprep.subr.bf16.mxu0 %v2202
          %2220 = vmatpush1.bf16.msra.mxu0 %v2201
          %2221 = vmatprep.subr.bf16.mxu0 %v2200
          %2222 = vmatpush1.bf16.msra.mxu0 %v2199
          %2223 = vmatprep.subr.bf16.mxu0 %v2198
          %2224 = vmatpush1.bf16.msra.mxu0 %v2197
          %2225 = vmatprep.subr.bf16.mxu0 %v2196
          %2226 = vmatpush1.bf16.msra.mxu0 %v2195
          %2227 = vmatprep.subr.bf16.mxu0 %v2194
          %2228 = vmatpush1.bf16.msra.mxu0 %v2193
          %2229 = vmatprep.subr.bf16.mxu0 %v2192
          %2230 = vmatpush1.bf16.msra.mxu0 %v2191
          %2231 = vmatprep.subr.bf16.mxu0 %v2190
          %2232 = vmatpush1.bf16.msra.mxu0 %v2189
          %2233 = vmatprep.subr.bf16.mxu0 %v2188
          %2234 = vmatpush1.bf16.msra.mxu0 %v2187
          %2235 = vmatprep.subr.bf16.mxu0 0
          %2236 = vmatpush2.bf16.msra.mxu0 0
          %2237 = vmatprep.subr.bf16.mxu0 0
          %2238 = vmatpush2.bf16.msra.mxu0 0
          %2239 = vmatprep.subr.bf16.mxu0 0
          %2240 = vmatpush2.bf16.msra.mxu0 0
          %2241 = vmatprep.subr.bf16.mxu0 0
          %2242 = vmatpush2.bf16.msra.mxu0 0
          %2243 = vmatprep.subr.bf16.mxu0 0
          %2244 = vmatpush2.bf16.msra.mxu0 0
          %2245 = vmatprep.subr.bf16.mxu0 0
          %2246 = vmatpush2.bf16.msra.mxu0 0
          %2247 = vmatprep.subr.bf16.mxu0 0
          %2248 = vmatpush2.bf16.msra.mxu0 0
          %2249 = vmatprep.subr.bf16.mxu0 0
          %2250 = vmatpush2.bf16.msra.mxu0 0
          %2251 = vmatprep.mubr.bf16.mxu0 0
          %2252 = vmatmul.mubr.bf16.gmra.mxu0 %v868
          %v2253 = vpop.f32.mrf.mxu0
          %v2254 = vadd.f32 0.0, %v2253
          %v2255 = vpop.f32.mrf.mxu0
          %v2256 = vadd.f32 0.0, %v2255
          %v2257 = vpop.f32.mrf.mxu0
          %v2258 = vadd.f32 0.0, %v2257
          %v2259 = vpop.f32.mrf.mxu0
          %v2260 = vadd.f32 0.0, %v2259
          %2261 = vmatprep.mubr.bf16.mxu0 0
          %2262 = vmatmul.mubr.bf16.gmra.mxu0 %v869
          %v2263 = vpop.f32.mrf.mxu0
          %v2264 = vadd.f32 0.0, %v2263
          %v2265 = vpop.f32.mrf.mxu0
          %v2266 = vadd.f32 0.0, %v2265
          %v2267 = vpop.f32.mrf.mxu0
          %v2268 = vadd.f32 0.0, %v2267
          %v2269 = vpop.f32.mrf.mxu0
          %v2270 = vadd.f32 0.0, %v2269
          %2271 = vmatprep.mubr.bf16.mxu0 0
          %2272 = vmatmul.mubr.bf16.gmra.mxu0 %v870
          %v2273 = vpop.f32.mrf.mxu0
          %v2274 = vadd.f32 0.0, %v2273
          %v2275 = vpop.f32.mrf.mxu0
          %v2276 = vadd.f32 0.0, %v2275
          %v2277 = vpop.f32.mrf.mxu0
          %v2278 = vadd.f32 0.0, %v2277
          %v2279 = vpop.f32.mrf.mxu0
          %v2280 = vadd.f32 0.0, %v2279
          %2281 = vmatprep.mubr.bf16.mxu0 0
          %2282 = vmatmul.mubr.bf16.gmra.mxu0 %v871
          %v2283 = vpop.f32.mrf.mxu0
          %v2284 = vadd.f32 0.0, %v2283
          %v2285 = vpop.f32.mrf.mxu0
          %v2286 = vadd.f32 0.0, %v2285
          %v2287 = vpop.f32.mrf.mxu0
          %v2288 = vadd.f32 0.0, %v2287
          %v2289 = vpop.f32.mrf.mxu0
          %v2290 = vadd.f32 0.0, %v2289
          %2291 = vdwg.mxu0
          %v2292 = vxor.u32 %v2254, 2147483648
          %v2293 = vxor.u32 %v2256, 2147483648
          %v2294 = vxor.u32 %v2258, 2147483648
          %v2295 = vxor.u32 %v2260, 2147483648
          %v2296 = vxor.u32 %v2264, 2147483648
          %v2297 = vxor.u32 %v2266, 2147483648
          %v2298 = vxor.u32 %v2268, 2147483648
          %v2299 = vxor.u32 %v2270, 2147483648
          %v2300 = vxor.u32 %v2274, 2147483648
          %v2301 = vxor.u32 %v2276, 2147483648
          %v2302 = vxor.u32 %v2278, 2147483648
          %v2303 = vxor.u32 %v2280, 2147483648
          %v2304 = vxor.u32 %v2284, 2147483648
          %v2305 = vxor.u32 %v2286, 2147483648
          %v2306 = vxor.u32 %v2288, 2147483648
          %v2307 = vxor.u32 %v2290, 2147483648
          %v2308 = vmul.f32 %v2292, 1.442695
          %v2309 = vpow.pop %v2308
          %v2310 = vmul.f32 %v2293, 1.442695
          %v2311 = vpow.pop %v2310
          %v2312 = vmul.f32 %v2294, 1.442695
          %v2313 = vpow.pop %v2312
          %v2314 = vmul.f32 %v2295, 1.442695
          %v2315 = vpow.pop %v2314
          %v2316 = vmul.f32 %v2296, 1.442695
          %v2317 = vpow.pop %v2316
          %v2318 = vmul.f32 %v2297, 1.442695
          %v2319 = vpow.pop %v2318
          %v2320 = vmul.f32 %v2298, 1.442695
          %v2321 = vpow.pop %v2320
          %v2322 = vmul.f32 %v2299, 1.442695
          %v2323 = vpow.pop %v2322
          %v2324 = vmul.f32 %v2300, 1.442695
          %v2325 = vpow.pop %v2324
          %v2326 = vmul.f32 %v2301, 1.442695
          %v2327 = vpow.pop %v2326
          %v2328 = vmul.f32 %v2302, 1.442695
          %v2329 = vpow.pop %v2328
          %v2330 = vmul.f32 %v2303, 1.442695
          %v2331 = vpow.pop %v2330
          %v2332 = vmul.f32 %v2304, 1.442695
          %v2333 = vpow.pop %v2332
          %v2334 = vmul.f32 %v2305, 1.442695
          %v2335 = vpow.pop %v2334
          %v2336 = vmul.f32 %v2306, 1.442695
          %v2337 = vpow.pop %v2336
          %v2338 = vmul.f32 %v2307, 1.442695
          %v2339 = vpow.pop %v2338
          %v2340 = vadd.f32 %v2309, 1.0
          %v2341 = vadd.f32 %v2311, 1.0
          %v2342 = vadd.f32 %v2313, 1.0
          %v2343 = vadd.f32 %v2315, 1.0
          %v2344 = vadd.f32 %v2317, 1.0
          %v2345 = vadd.f32 %v2319, 1.0
          %v2346 = vadd.f32 %v2321, 1.0
          %v2347 = vadd.f32 %v2323, 1.0
          %v2348 = vadd.f32 %v2325, 1.0
          %v2349 = vadd.f32 %v2327, 1.0
          %v2350 = vadd.f32 %v2329, 1.0
          %v2351 = vadd.f32 %v2331, 1.0
          %v2352 = vadd.f32 %v2333, 1.0
          %v2353 = vadd.f32 %v2335, 1.0
          %v2354 = vadd.f32 %v2337, 1.0
          %v2355 = vadd.f32 %v2339, 1.0
          %v2356 = vrcp.pop %v2340
          %v2357 = vmul.f32 1.0, %v2356
          %v2358 = vrcp.pop %v2341
          %v2359 = vmul.f32 1.0, %v2358
          %v2360 = vrcp.pop %v2342
          %v2361 = vmul.f32 1.0, %v2360
          %v2362 = vrcp.pop %v2343
          %v2363 = vmul.f32 1.0, %v2362
          %v2364 = vrcp.pop %v2344
          %v2365 = vmul.f32 1.0, %v2364
          %v2366 = vrcp.pop %v2345
          %v2367 = vmul.f32 1.0, %v2366
          %v2368 = vrcp.pop %v2346
          %v2369 = vmul.f32 1.0, %v2368
          %v2370 = vrcp.pop %v2347
          %v2371 = vmul.f32 1.0, %v2370
          %v2372 = vrcp.pop %v2348
          %v2373 = vmul.f32 1.0, %v2372
          %v2374 = vrcp.pop %v2349
          %v2375 = vmul.f32 1.0, %v2374
          %v2376 = vrcp.pop %v2350
          %v2377 = vmul.f32 1.0, %v2376
          %v2378 = vrcp.pop %v2351
          %v2379 = vmul.f32 1.0, %v2378
          %v2380 = vrcp.pop %v2352
          %v2381 = vmul.f32 1.0, %v2380
          %v2382 = vrcp.pop %v2353
          %v2383 = vmul.f32 1.0, %v2382
          %v2384 = vrcp.pop %v2354
          %v2385 = vmul.f32 1.0, %v2384
          %v2386 = vrcp.pop %v2355
          %v2387 = vmul.f32 1.0, %v2386
          %v2388 = vmul.f32 %v2254, %v2357
          %v2389 = vmul.f32 %v2256, %v2359
          %v2390 = vmul.f32 %v2258, %v2361
          %v2391 = vmul.f32 %v2260, %v2363
          %v2392 = vmul.f32 %v2264, %v2365
          %v2393 = vmul.f32 %v2266, %v2367
          %v2394 = vmul.f32 %v2268, %v2369
          %v2395 = vmul.f32 %v2270, %v2371
          %v2396 = vmul.f32 %v2274, %v2373
          %v2397 = vmul.f32 %v2276, %v2375
          %v2398 = vmul.f32 %v2278, %v2377
          %v2399 = vmul.f32 %v2280, %v2379
          %v2400 = vmul.f32 %v2284, %v2381
          %v2401 = vmul.f32 %v2286, %v2383
          %v2402 = vmul.f32 %v2288, %v2385
          %v2403 = vmul.f32 %v2290, %v2387
          %v2404 = vpack.c.bf16 %v2390, %v2388
          %v2405 = vpack.c.bf16 %v2391, %v2389
          %v2406 = vpack.c.bf16 %v2394, %v2392
          %v2407 = vpack.c.bf16 %v2395, %v2393
          %v2408 = vpack.c.bf16 %v2398, %v2396
          %v2409 = vpack.c.bf16 %v2399, %v2397
          %v2410 = vpack.c.bf16 %v2402, %v2400
          %v2411 = vpack.c.bf16 %v2403, %v2401
          %s2412 = scalar_lea.vmem [#allocation9], 256
          %v2413 = vld [vmem:[%s2412] sm:$0xf]
          %v2414 = vld [vmem:[%s2412 + $0x4] sm:$0xf]
          %v2415 = vld [vmem:[%s2412 + $0x8] sm:$0xf]
          %v2416 = vld [vmem:[%s2412 + $0xc] sm:$0xf]
          %v2417 = vld [vmem:[%s2412 + $0x10] sm:$0xf]
          %v2418 = vld [vmem:[%s2412 + $0x14] sm:$0xf]
          %v2419 = vld [vmem:[%s2412 + $0x18] sm:$0xf]
          %v2420 = vld [vmem:[%s2412 + $0x1c] sm:$0xf]
          %v2421 = vld [vmem:[%s2412 + $0x20] sm:$0xf]
          %v2422 = vld [vmem:[%s2412 + $0x24] sm:$0xf]
          %v2423 = vld [vmem:[%s2412 + $0x28] sm:$0xf]
          %v2424 = vld [vmem:[%s2412 + $0x2c] sm:$0xf]
          %v2425 = vld [vmem:[%s2412 + $0x30] sm:$0xf]
          %v2426 = vld [vmem:[%s2412 + $0x34] sm:$0xf]
          %v2427 = vld [vmem:[%s2412 + $0x38] sm:$0xf]
          %v2428 = vld [vmem:[%s2412 + $0x3c] sm:$0xf]
          %v2429 = vld [vmem:[%s2412 + $0x40] sm:$0xf]
          %v2430 = vld [vmem:[%s2412 + $0x44] sm:$0xf]
          %v2431 = vld [vmem:[%s2412 + $0x48] sm:$0xf]
          %v2432 = vld [vmem:[%s2412 + $0x4c] sm:$0xf]
          %v2433 = vld [vmem:[%s2412 + $0x50] sm:$0xf]
          %v2434 = vld [vmem:[%s2412 + $0x54] sm:$0xf]
          %v2435 = vld [vmem:[%s2412 + $0x58] sm:$0xf]
          %v2436 = vld [vmem:[%s2412 + $0x5c] sm:$0xf]
          %v2437 = vld [vmem:[%s2412 + $0x60] sm:$0xf]
          %v2438 = vld [vmem:[%s2412 + $0x64] sm:$0xf]
          %v2439 = vld [vmem:[%s2412 + $0x68] sm:$0xf]
          %v2440 = vld [vmem:[%s2412 + $0x6c] sm:$0xf]
          %v2441 = vld [vmem:[%s2412 + $0x70] sm:$0xf]
          %v2442 = vld [vmem:[%s2412 + $0x74] sm:$0xf]
          %v2443 = vld [vmem:[%s2412 + $0x78] sm:$0xf]
          %v2444 = vld [vmem:[%s2412 + $0x7c] sm:$0xf]
          %v2477 = vunpack.c.l.b16 %v2413
          %v2478 = vunpack.c.l.b16 %v2414
          %v2479 = vunpack.c.l.b16 %v2415
          %v2480 = vunpack.c.l.b16 %v2416
          %v2481 = vunpack.c.l.b16 %v2417
          %v2482 = vunpack.c.l.b16 %v2418
          %v2483 = vunpack.c.l.b16 %v2419
          %v2484 = vunpack.c.l.b16 %v2420
          %v2485 = vunpack.c.l.b16 %v2421
          %v2486 = vunpack.c.l.b16 %v2422
          %v2487 = vunpack.c.l.b16 %v2423
          %v2488 = vunpack.c.l.b16 %v2424
          %v2489 = vunpack.c.l.b16 %v2425
          %v2490 = vunpack.c.l.b16 %v2426
          %v2491 = vunpack.c.l.b16 %v2427
          %v2492 = vunpack.c.l.b16 %v2428
          %v2493 = vunpack.c.l.b16 %v2429
          %v2494 = vunpack.c.l.b16 %v2430
          %v2495 = vunpack.c.l.b16 %v2431
          %v2496 = vunpack.c.l.b16 %v2432
          %v2497 = vunpack.c.l.b16 %v2433
          %v2498 = vunpack.c.l.b16 %v2434
          %v2499 = vunpack.c.l.b16 %v2435
          %v2500 = vunpack.c.l.b16 %v2436
          %v2501 = vunpack.c.l.b16 %v2437
          %v2502 = vunpack.c.l.b16 %v2438
          %v2503 = vunpack.c.l.b16 %v2439
          %v2504 = vunpack.c.l.b16 %v2440
          %v2505 = vunpack.c.l.b16 %v2441
          %v2506 = vunpack.c.l.b16 %v2442
          %v2507 = vunpack.c.l.b16 %v2443
          %v2508 = vunpack.c.l.b16 %v2444
          %v2509 = vpack.c.b16 %v2478, %v2477
          %v2510 = vpack.c.b16 %v2480, %v2479
          %v2511 = vpack.c.b16 %v2482, %v2481
          %v2512 = vpack.c.b16 %v2484, %v2483
          %v2513 = vpack.c.b16 %v2486, %v2485
          %v2514 = vpack.c.b16 %v2488, %v2487
          %v2515 = vpack.c.b16 %v2490, %v2489
          %v2516 = vpack.c.b16 %v2492, %v2491
          %v2517 = vpack.c.b16 %v2494, %v2493
          %v2518 = vpack.c.b16 %v2496, %v2495
          %v2519 = vpack.c.b16 %v2498, %v2497
          %v2520 = vpack.c.b16 %v2500, %v2499
          %v2521 = vpack.c.b16 %v2502, %v2501
          %v2522 = vpack.c.b16 %v2504, %v2503
          %v2523 = vpack.c.b16 %v2506, %v2505
          %v2524 = vpack.c.b16 %v2508, %v2507
          %2541 = vmatprep.subr.bf16.mxu0 0
          %2542 = vmatpush1.bf16.msra.mxu0 %v2516
          %2543 = vmatprep.subr.bf16.mxu0 0
          %2544 = vmatpush1.bf16.msra.mxu0 %v2515
          %2545 = vmatprep.subr.bf16.mxu0 0
          %2546 = vmatpush1.bf16.msra.mxu0 %v2514
          %2547 = vmatprep.subr.bf16.mxu0 0
          %2548 = vmatpush1.bf16.msra.mxu0 %v2513
          %2549 = vmatprep.subr.bf16.mxu0 0
          %2550 = vmatpush1.bf16.msra.mxu0 %v2512
          %2551 = vmatprep.subr.bf16.mxu0 0
          %2552 = vmatpush1.bf16.msra.mxu0 %v2511
          %2553 = vmatprep.subr.bf16.mxu0 0
          %2554 = vmatpush1.bf16.msra.mxu0 %v2510
          %2555 = vmatprep.subr.bf16.mxu0 0
          %2556 = vmatpush1.bf16.msra.mxu0 %v2509
          %2557 = vmatprep.subr.bf16.mxu0 0
          %2558 = vmatpush2.bf16.msra.mxu0 %v2524
          %2559 = vmatprep.subr.bf16.mxu0 0
          %2560 = vmatpush2.bf16.msra.mxu0 %v2523
          %2561 = vmatprep.subr.bf16.mxu0 0
          %2562 = vmatpush2.bf16.msra.mxu0 %v2522
          %2563 = vmatprep.subr.bf16.mxu0 0
          %2564 = vmatpush2.bf16.msra.mxu0 %v2521
          %2565 = vmatprep.subr.bf16.mxu0 0
          %2566 = vmatpush2.bf16.msra.mxu0 %v2520
          %2567 = vmatprep.subr.bf16.mxu0 0
          %2568 = vmatpush2.bf16.msra.mxu0 %v2519
          %2569 = vmatprep.subr.bf16.mxu0 0
          %2570 = vmatpush2.bf16.msra.mxu0 %v2518
          %2571 = vmatprep.subr.bf16.mxu0 0
          %2572 = vmatpush2.bf16.msra.mxu0 %v2517
          %2573 = vmatprep.mubr.bf16.mxu0 %v2405
          %2574 = vmatmul.mubr.bf16.gmra.mxu0 %v2404
          %v2575 = vpop.f32.mrf.mxu0
          %v2576 = vadd.f32 0.0, %v2575
          %v2577 = vpop.f32.mrf.mxu0
          %v2578 = vpop.f32.mrf.mxu0
          %v2579 = vadd.f32 0.0, %v2578
          %v2580 = vpop.f32.mrf.mxu0
          %2581 = vmatprep.mubr.bf16.mxu0 %v2407
          %2582 = vmatmul.mubr.bf16.gmra.mxu0 %v2406
          %v2583 = vpop.f32.mrf.mxu0
          %v2584 = vadd.f32 0.0, %v2583
          %v2585 = vpop.f32.mrf.mxu0
          %v2586 = vpop.f32.mrf.mxu0
          %v2587 = vadd.f32 0.0, %v2586
          %v2588 = vpop.f32.mrf.mxu0
          %2589 = vmatprep.mubr.bf16.mxu0 %v2409
          %2590 = vmatmul.mubr.bf16.gmra.mxu0 %v2408
          %v2591 = vpop.f32.mrf.mxu0
          %v2592 = vadd.f32 0.0, %v2591
          %v2593 = vpop.f32.mrf.mxu0
          %v2594 = vpop.f32.mrf.mxu0
          %v2595 = vadd.f32 0.0, %v2594
          %v2596 = vpop.f32.mrf.mxu0
          %2597 = vmatprep.mubr.bf16.mxu0 %v2411
          %2598 = vmatmul.mubr.bf16.gmra.mxu0 %v2410
          %v2599 = vpop.f32.mrf.mxu0
          %v2600 = vadd.f32 0.0, %v2599
          %v2601 = vpop.f32.mrf.mxu0
          %v2602 = vpop.f32.mrf.mxu0
          %v2603 = vadd.f32 0.0, %v2602
          %v2604 = vpop.f32.mrf.mxu0
          %2605 = vdwg.mxu0
          %v2606 = vld [vmem:[%s339] sm:$0xff]
          %v2607 = vld [vmem:[%s339 + $0x8] sm:$0xff]
          %v2608 = vld [vmem:[%s339 + $0x10] sm:$0xff]
          %v2609 = vld [vmem:[%s339 + $0x18] sm:$0xff]
          %v2610 = vld [vmem:[%s339 + $0x20] sm:$0xff]
          %v2611 = vld [vmem:[%s339 + $0x28] sm:$0xff]
          %v2612 = vld [vmem:[%s339 + $0x30] sm:$0xff]
          %v2613 = vld [vmem:[%s339 + $0x38] sm:$0xff]
          %2614 = vset.pattern.permute.xlu0 2
          %2615 = vperm.xlu0 %2614, %v811
          %v2616 = vpop.permute.xlu0 %2615
          %2618 = vset.pattern.permute.xlu0 2
          %2619 = vperm.xlu0 %2618, %v812
          %v2620 = vpop.permute.xlu0 %2619
          %2622 = vset.pattern.permute.xlu0 2
          %2623 = vperm.xlu0 %2622, %v813
          %v2624 = vpop.permute.xlu0 %2623
          %2626 = vset.pattern.permute.xlu0 2
          %2627 = vperm.xlu0 %2626, %v814
          %v2628 = vpop.permute.xlu0 %2627
          %2630 = vset.pattern.permute.xlu0 2
          %2631 = vperm.xlu0 %2630, %v815
          %v2632 = vpop.permute.xlu0 %2631
          %2634 = vset.pattern.permute.xlu0 2
          %2635 = vperm.xlu0 %2634, %v816
          %v2636 = vpop.permute.xlu0 %2635
          %2638 = vset.pattern.permute.xlu0 2
          %2639 = vperm.xlu0 %2638, %v817
          %v2640 = vpop.permute.xlu0 %2639
          %2642 = vset.pattern.permute.xlu0 2
          %2643 = vperm.xlu0 %2642, %v818
          %v2644 = vpop.permute.xlu0 %2643
          %v2646 = vmul.f32 %v2616, %v2576
          %v2647 = vmul.f32 %v2620, %v2579
          %v2648 = vmul.f32 %v2624, %v2584
          %v2649 = vmul.f32 %v2628, %v2587
          %v2650 = vmul.f32 %v2632, %v2592
          %v2651 = vmul.f32 %v2636, %v2595
          %v2652 = vmul.f32 %v2640, %v2600
          %v2653 = vmul.f32 %v2644, %v2603
          %v2654 = vadd.f32 %v2606, %v2646
          %v2655 = vadd.f32 %v2607, %v2647
          %v2656 = vadd.f32 %v2608, %v2648
          %v2657 = vadd.f32 %v2609, %v2649
          %v2658 = vadd.f32 %v2610, %v2650
          %v2659 = vadd.f32 %v2611, %v2651
          %v2660 = vadd.f32 %v2612, %v2652
          %v2661 = vadd.f32 %v2613, %v2653
          %2662 = vst [vmem:[%s339] sm:$0xff] %v2654
          %2663 = vst [vmem:[%s339 + $0x8] sm:$0xff] %v2655
          %2664 = vst [vmem:[%s339 + $0x10] sm:$0xff] %v2656
          %2665 = vst [vmem:[%s339 + $0x18] sm:$0xff] %v2657
          %2666 = vst [vmem:[%s339 + $0x20] sm:$0xff] %v2658
          %2667 = vst [vmem:[%s339 + $0x28] sm:$0xff] %v2659
          %2668 = vst [vmem:[%s339 + $0x30] sm:$0xff] %v2660
          %2669 = vst [vmem:[%s339 + $0x38] sm:$0xff] %v2661
        $region68: #{tpu_custom_call.1} parent=35 // pred_fallthru
          _
        %2670 = vrot.lane.b32.xlu0 %v811, 125
        %v2671 = vpop.permute.xlu0 %2670
        %2672 = vrot.lane.b32.xlu0 %v812, 125
        %v2673 = vpop.permute.xlu0 %2672
        %2674 = vrot.lane.b32.xlu0 %v813, 125
        %v2675 = vpop.permute.xlu0 %2674
        %2676 = vrot.lane.b32.xlu0 %v814, 125
        %v2677 = vpop.permute.xlu0 %2676
        %2678 = vrot.lane.b32.xlu0 %v815, 125
        %v2679 = vpop.permute.xlu0 %2678
        %2680 = vrot.lane.b32.xlu0 %v816, 125
        %v2681 = vpop.permute.xlu0 %2680
        %2682 = vrot.lane.b32.xlu0 %v817, 125
        %v2683 = vpop.permute.xlu0 %2682
        %2684 = vrot.lane.b32.xlu0 %v818, 125
        %v2685 = vpop.permute.xlu0 %2684
        %v2694 = vsel %vm859, %v2671, 0.0
        %v2695 = vsel %vm859, %v2673, 0.0
        %v2696 = vadd.f32 %v2694, %v2695
        %v2697 = vsel %vm859, %v2675, 0.0
        %v2698 = vadd.f32 %v2696, %v2697
        %v2699 = vsel %vm859, %v2677, 0.0
        %v2700 = vadd.f32 %v2698, %v2699
        %v2701 = vsel %vm859, %v2679, 0.0
        %v2702 = vadd.f32 %v2700, %v2701
        %v2703 = vsel %vm859, %v2681, 0.0
        %v2704 = vadd.f32 %v2702, %v2703
        %v2705 = vsel %vm859, %v2683, 0.0
        %v2706 = vadd.f32 %v2704, %v2705
        %v2707 = vsel %vm859, %v2685, 0.0
        %v2708 = vadd.f32 %v2706, %v2707
        %2709 = vadd.xlane.f32.xlu0 %v2708
        %v2710 = vpop.xlane.xlu0 %2709
        %v2711 = vrot.slane %v2710, 4
        %v2712 = vadd.f32 %v2710, %v2711
        %v2713 = vrot.slane %v2712, 2
        %v2714 = vadd.f32 %v2712, %v2713
        %v2715 = vrot.slane %v2714, 1
        %v2716 = vadd.f32 %v2714, %v2715
        %s2717 = vtos %v2716
        %p2718 = scmp.gt.f32.partialorder %s2717, 0.0
        // Predicated region
        $region69: #{tpu_custom_call.1} parent=35 // pred_check
          %p2719 = pneg %p2718
        $region70: #{tpu_custom_call.1} parent=35 // pred_check_branch
          %2721 = sbr.rel (%p2719) target = $region72
        $region71: #{tpu_custom_call.1} parent=35 // pred_region
          %s2722 = scalar_lea.vmem [#allocation8], 384
          %v2723 = vld [vmem:[%s2722] sm:$0xff]
          %v2724 = vld [vmem:[%s2722 + $0x8] sm:$0xff]
          %v2725 = vld [vmem:[%s2722 + $0x10] sm:$0xff]
          %v2726 = vld [vmem:[%s2722 + $0x18] sm:$0xff]
          %v2727 = vld [vmem:[%s2722 + $0x20] sm:$0xff]
          %v2728 = vld [vmem:[%s2722 + $0x28] sm:$0xff]
          %v2729 = vld [vmem:[%s2722 + $0x30] sm:$0xff]
          %v2730 = vld [vmem:[%s2722 + $0x38] sm:$0xff]
          %v2731 = vld [vmem:[%s2722 + $0x40] sm:$0xff]
          %v2732 = vld [vmem:[%s2722 + $0x48] sm:$0xff]
          %v2733 = vld [vmem:[%s2722 + $0x50] sm:$0xff]
          %v2734 = vld [vmem:[%s2722 + $0x58] sm:$0xff]
          %v2735 = vld [vmem:[%s2722 + $0x60] sm:$0xff]
          %v2736 = vld [vmem:[%s2722 + $0x68] sm:$0xff]
          %v2737 = vld [vmem:[%s2722 + $0x70] sm:$0xff]
          %v2738 = vld [vmem:[%s2722 + $0x78] sm:$0xff]
          %v2755 = vunpack.c.l.b16 %v2723
          %v2756 = vunpack.c.h.b16 %v2723
          %v2757 = vunpack.c.l.b16 %v2724
          %v2758 = vunpack.c.h.b16 %v2724
          %v2759 = vunpack.c.l.b16 %v2725
          %v2760 = vunpack.c.h.b16 %v2725
          %v2761 = vunpack.c.l.b16 %v2726
          %v2762 = vunpack.c.h.b16 %v2726
          %v2763 = vunpack.c.l.b16 %v2727
          %v2764 = vunpack.c.h.b16 %v2727
          %v2765 = vunpack.c.l.b16 %v2728
          %v2766 = vunpack.c.h.b16 %v2728
          %v2767 = vunpack.c.l.b16 %v2729
          %v2768 = vunpack.c.h.b16 %v2729
          %v2769 = vunpack.c.l.b16 %v2730
          %v2770 = vunpack.c.h.b16 %v2730
          %v2771 = vunpack.c.l.b16 %v2731
          %v2772 = vunpack.c.h.b16 %v2731
          %v2773 = vunpack.c.l.b16 %v2732
          %v2774 = vunpack.c.h.b16 %v2732
          %v2775 = vunpack.c.l.b16 %v2733
          %v2776 = vunpack.c.h.b16 %v2733
          %v2777 = vunpack.c.l.b16 %v2734
          %v2778 = vunpack.c.h.b16 %v2734
          %v2779 = vunpack.c.l.b16 %v2735
          %v2780 = vunpack.c.h.b16 %v2735
          %v2781 = vunpack.c.l.b16 %v2736
          %v2782 = vunpack.c.h.b16 %v2736
          %v2783 = vunpack.c.l.b16 %v2737
          %v2784 = vunpack.c.h.b16 %v2737
          %v2785 = vunpack.c.l.b16 %v2738
          %v2786 = vunpack.c.h.b16 %v2738
          %v2787 = vpack.c.b16 %v2757, %v2755
          %v2788 = vpack.c.b16 %v2758, %v2756
          %v2789 = vpack.c.b16 %v2761, %v2759
          %v2790 = vpack.c.b16 %v2762, %v2760
          %v2791 = vpack.c.b16 %v2765, %v2763
          %v2792 = vpack.c.b16 %v2766, %v2764
          %v2793 = vpack.c.b16 %v2769, %v2767
          %v2794 = vpack.c.b16 %v2770, %v2768
          %v2795 = vpack.c.b16 %v2773, %v2771
          %v2796 = vpack.c.b16 %v2774, %v2772
          %v2797 = vpack.c.b16 %v2777, %v2775
          %v2798 = vpack.c.b16 %v2778, %v2776
          %v2799 = vpack.c.b16 %v2781, %v2779
          %v2800 = vpack.c.b16 %v2782, %v2780
          %v2801 = vpack.c.b16 %v2785, %v2783
          %v2802 = vpack.c.b16 %v2786, %v2784
          %2819 = vmatprep.subr.bf16.mxu0 %v2802
          %2820 = vmatpush1.bf16.msra.mxu0 %v2801
          %2821 = vmatprep.subr.bf16.mxu0 %v2800
          %2822 = vmatpush1.bf16.msra.mxu0 %v2799
          %2823 = vmatprep.subr.bf16.mxu0 %v2798
          %2824 = vmatpush1.bf16.msra.mxu0 %v2797
          %2825 = vmatprep.subr.bf16.mxu0 %v2796
          %2826 = vmatpush1.bf16.msra.mxu0 %v2795
          %2827 = vmatprep.subr.bf16.mxu0 %v2794
          %2828 = vmatpush1.bf16.msra.mxu0 %v2793
          %2829 = vmatprep.subr.bf16.mxu0 %v2792
          %2830 = vmatpush1.bf16.msra.mxu0 %v2791
          %2831 = vmatprep.subr.bf16.mxu0 %v2790
          %2832 = vmatpush1.bf16.msra.mxu0 %v2789
          %2833 = vmatprep.subr.bf16.mxu0 %v2788
          %2834 = vmatpush1.bf16.msra.mxu0 %v2787
          %2835 = vmatprep.subr.bf16.mxu0 0
          %2836 = vmatpush2.bf16.msra.mxu0 0
          %2837 = vmatprep.subr.bf16.mxu0 0
          %2838 = vmatpush2.bf16.msra.mxu0 0
          %2839 = vmatprep.subr.bf16.mxu0 0
          %2840 = vmatpush2.bf16.msra.mxu0 0
          %2841 = vmatprep.subr.bf16.mxu0 0
          %2842 = vmatpush2.bf16.msra.mxu0 0
          %2843 = vmatprep.subr.bf16.mxu0 0
          %2844 = vmatpush2.bf16.msra.mxu0 0
          %2845 = vmatprep.subr.bf16.mxu0 0
          %2846 = vmatpush2.bf16.msra.mxu0 0
          %2847 = vmatprep.subr.bf16.mxu0 0
          %2848 = vmatpush2.bf16.msra.mxu0 0
          %2849 = vmatprep.subr.bf16.mxu0 0
          %2850 = vmatpush2.bf16.msra.mxu0 0
          %2851 = vmatprep.mubr.bf16.mxu0 0
          %2852 = vmatmul.mubr.bf16.gmra.mxu0 %v868
          %v2853 = vpop.f32.mrf.mxu0
          %v2854 = vadd.f32 0.0, %v2853
          %v2855 = vpop.f32.mrf.mxu0
          %v2856 = vadd.f32 0.0, %v2855
          %v2857 = vpop.f32.mrf.mxu0
          %v2858 = vadd.f32 0.0, %v2857
          %v2859 = vpop.f32.mrf.mxu0
          %v2860 = vadd.f32 0.0, %v2859
          %2861 = vmatprep.mubr.bf16.mxu0 0
          %2862 = vmatmul.mubr.bf16.gmra.mxu0 %v869
          %v2863 = vpop.f32.mrf.mxu0
          %v2864 = vadd.f32 0.0, %v2863
          %v2865 = vpop.f32.mrf.mxu0
          %v2866 = vadd.f32 0.0, %v2865
          %v2867 = vpop.f32.mrf.mxu0
          %v2868 = vadd.f32 0.0, %v2867
          %v2869 = vpop.f32.mrf.mxu0
          %v2870 = vadd.f32 0.0, %v2869
          %2871 = vmatprep.mubr.bf16.mxu0 0
          %2872 = vmatmul.mubr.bf16.gmra.mxu0 %v870
          %v2873 = vpop.f32.mrf.mxu0
          %v2874 = vadd.f32 0.0, %v2873
          %v2875 = vpop.f32.mrf.mxu0
          %v2876 = vadd.f32 0.0, %v2875
          %v2877 = vpop.f32.mrf.mxu0
          %v2878 = vadd.f32 0.0, %v2877
          %v2879 = vpop.f32.mrf.mxu0
          %v2880 = vadd.f32 0.0, %v2879
          %2881 = vmatprep.mubr.bf16.mxu0 0
          %2882 = vmatmul.mubr.bf16.gmra.mxu0 %v871
          %v2883 = vpop.f32.mrf.mxu0
          %v2884 = vadd.f32 0.0, %v2883
          %v2885 = vpop.f32.mrf.mxu0
          %v2886 = vadd.f32 0.0, %v2885
          %v2887 = vpop.f32.mrf.mxu0
          %v2888 = vadd.f32 0.0, %v2887
          %v2889 = vpop.f32.mrf.mxu0
          %v2890 = vadd.f32 0.0, %v2889
          %2891 = vdwg.mxu0
          %v2892 = vxor.u32 %v2854, 2147483648
          %v2893 = vxor.u32 %v2856, 2147483648
          %v2894 = vxor.u32 %v2858, 2147483648
          %v2895 = vxor.u32 %v2860, 2147483648
          %v2896 = vxor.u32 %v2864, 2147483648
          %v2897 = vxor.u32 %v2866, 2147483648
          %v2898 = vxor.u32 %v2868, 2147483648
          %v2899 = vxor.u32 %v2870, 2147483648
          %v2900 = vxor.u32 %v2874, 2147483648
          %v2901 = vxor.u32 %v2876, 2147483648
          %v2902 = vxor.u32 %v2878, 2147483648
          %v2903 = vxor.u32 %v2880, 2147483648
          %v2904 = vxor.u32 %v2884, 2147483648
          %v2905 = vxor.u32 %v2886, 2147483648
          %v2906 = vxor.u32 %v2888, 2147483648
          %v2907 = vxor.u32 %v2890, 2147483648
          %v2908 = vmul.f32 %v2892, 1.442695
          %v2909 = vpow.pop %v2908
          %v2910 = vmul.f32 %v2893, 1.442695
          %v2911 = vpow.pop %v2910
          %v2912 = vmul.f32 %v2894, 1.442695
          %v2913 = vpow.pop %v2912
          %v2914 = vmul.f32 %v2895, 1.442695
          %v2915 = vpow.pop %v2914
          %v2916 = vmul.f32 %v2896, 1.442695
          %v2917 = vpow.pop %v2916
          %v2918 = vmul.f32 %v2897, 1.442695
          %v2919 = vpow.pop %v2918
          %v2920 = vmul.f32 %v2898, 1.442695
          %v2921 = vpow.pop %v2920
          %v2922 = vmul.f32 %v2899, 1.442695
          %v2923 = vpow.pop %v2922
          %v2924 = vmul.f32 %v2900, 1.442695
          %v2925 = vpow.pop %v2924
          %v2926 = vmul.f32 %v2901, 1.442695
          %v2927 = vpow.pop %v2926
          %v2928 = vmul.f32 %v2902, 1.442695
          %v2929 = vpow.pop %v2928
          %v2930 = vmul.f32 %v2903, 1.442695
          %v2931 = vpow.pop %v2930
          %v2932 = vmul.f32 %v2904, 1.442695
          %v2933 = vpow.pop %v2932
          %v2934 = vmul.f32 %v2905, 1.442695
          %v2935 = vpow.pop %v2934
          %v2936 = vmul.f32 %v2906, 1.442695
          %v2937 = vpow.pop %v2936
          %v2938 = vmul.f32 %v2907, 1.442695
          %v2939 = vpow.pop %v2938
          %v2940 = vadd.f32 %v2909, 1.0
          %v2941 = vadd.f32 %v2911, 1.0
          %v2942 = vadd.f32 %v2913, 1.0
          %v2943 = vadd.f32 %v2915, 1.0
          %v2944 = vadd.f32 %v2917, 1.0
          %v2945 = vadd.f32 %v2919, 1.0
          %v2946 = vadd.f32 %v2921, 1.0
          %v2947 = vadd.f32 %v2923, 1.0
          %v2948 = vadd.f32 %v2925, 1.0
          %v2949 = vadd.f32 %v2927, 1.0
          %v2950 = vadd.f32 %v2929, 1.0
          %v2951 = vadd.f32 %v2931, 1.0
          %v2952 = vadd.f32 %v2933, 1.0
          %v2953 = vadd.f32 %v2935, 1.0
          %v2954 = vadd.f32 %v2937, 1.0
          %v2955 = vadd.f32 %v2939, 1.0
          %v2956 = vrcp.pop %v2940
          %v2957 = vmul.f32 1.0, %v2956
          %v2958 = vrcp.pop %v2941
          %v2959 = vmul.f32 1.0, %v2958
          %v2960 = vrcp.pop %v2942
          %v2961 = vmul.f32 1.0, %v2960
          %v2962 = vrcp.pop %v2943
          %v2963 = vmul.f32 1.0, %v2962
          %v2964 = vrcp.pop %v2944
          %v2965 = vmul.f32 1.0, %v2964
          %v2966 = vrcp.pop %v2945
          %v2967 = vmul.f32 1.0, %v2966
          %v2968 = vrcp.pop %v2946
          %v2969 = vmul.f32 1.0, %v2968
          %v2970 = vrcp.pop %v2947
          %v2971 = vmul.f32 1.0, %v2970
          %v2972 = vrcp.pop %v2948
          %v2973 = vmul.f32 1.0, %v2972
          %v2974 = vrcp.pop %v2949
          %v2975 = vmul.f32 1.0, %v2974
          %v2976 = vrcp.pop %v2950
          %v2977 = vmul.f32 1.0, %v2976
          %v2978 = vrcp.pop %v2951
          %v2979 = vmul.f32 1.0, %v2978
          %v2980 = vrcp.pop %v2952
          %v2981 = vmul.f32 1.0, %v2980
          %v2982 = vrcp.pop %v2953
          %v2983 = vmul.f32 1.0, %v2982
          %v2984 = vrcp.pop %v2954
          %v2985 = vmul.f32 1.0, %v2984
          %v2986 = vrcp.pop %v2955
          %v2987 = vmul.f32 1.0, %v2986
          %v2988 = vmul.f32 %v2854, %v2957
          %v2989 = vmul.f32 %v2856, %v2959
          %v2990 = vmul.f32 %v2858, %v2961
          %v2991 = vmul.f32 %v2860, %v2963
          %v2992 = vmul.f32 %v2864, %v2965
          %v2993 = vmul.f32 %v2866, %v2967
          %v2994 = vmul.f32 %v2868, %v2969
          %v2995 = vmul.f32 %v2870, %v2971
          %v2996 = vmul.f32 %v2874, %v2973
          %v2997 = vmul.f32 %v2876, %v2975
          %v2998 = vmul.f32 %v2878, %v2977
          %v2999 = vmul.f32 %v2880, %v2979
          %v3000 = vmul.f32 %v2884, %v2981
          %v3001 = vmul.f32 %v2886, %v2983
          %v3002 = vmul.f32 %v2888, %v2985
          %v3003 = vmul.f32 %v2890, %v2987
          %v3004 = vpack.c.bf16 %v2990, %v2988
          %v3005 = vpack.c.bf16 %v2991, %v2989
          %v3006 = vpack.c.bf16 %v2994, %v2992
          %v3007 = vpack.c.bf16 %v2995, %v2993
          %v3008 = vpack.c.bf16 %v2998, %v2996
          %v3009 = vpack.c.bf16 %v2999, %v2997
          %v3010 = vpack.c.bf16 %v3002, %v3000
          %v3011 = vpack.c.bf16 %v3003, %v3001
          %s3012 = scalar_lea.vmem [#allocation9], 384
          %v3013 = vld [vmem:[%s3012] sm:$0xf]
          %v3014 = vld [vmem:[%s3012 + $0x4] sm:$0xf]
          %v3015 = vld [vmem:[%s3012 + $0x8] sm:$0xf]
          %v3016 = vld [vmem:[%s3012 + $0xc] sm:$0xf]
          %v3017 = vld [vmem:[%s3012 + $0x10] sm:$0xf]
          %v3018 = vld [vmem:[%s3012 + $0x14] sm:$0xf]
          %v3019 = vld [vmem:[%s3012 + $0x18] sm:$0xf]
          %v3020 = vld [vmem:[%s3012 + $0x1c] sm:$0xf]
          %v3021 = vld [vmem:[%s3012 + $0x20] sm:$0xf]
          %v3022 = vld [vmem:[%s3012 + $0x24] sm:$0xf]
          %v3023 = vld [vmem:[%s3012 + $0x28] sm:$0xf]
          %v3024 = vld [vmem:[%s3012 + $0x2c] sm:$0xf]
          %v3025 = vld [vmem:[%s3012 + $0x30] sm:$0xf]
          %v3026 = vld [vmem:[%s3012 + $0x34] sm:$0xf]
          %v3027 = vld [vmem:[%s3012 + $0x38] sm:$0xf]
          %v3028 = vld [vmem:[%s3012 + $0x3c] sm:$0xf]
          %v3029 = vld [vmem:[%s3012 + $0x40] sm:$0xf]
          %v3030 = vld [vmem:[%s3012 + $0x44] sm:$0xf]
          %v3031 = vld [vmem:[%s3012 + $0x48] sm:$0xf]
          %v3032 = vld [vmem:[%s3012 + $0x4c] sm:$0xf]
          %v3033 = vld [vmem:[%s3012 + $0x50] sm:$0xf]
          %v3034 = vld [vmem:[%s3012 + $0x54] sm:$0xf]
          %v3035 = vld [vmem:[%s3012 + $0x58] sm:$0xf]
          %v3036 = vld [vmem:[%s3012 + $0x5c] sm:$0xf]
          %v3037 = vld [vmem:[%s3012 + $0x60] sm:$0xf]
          %v3038 = vld [vmem:[%s3012 + $0x64] sm:$0xf]
          %v3039 = vld [vmem:[%s3012 + $0x68] sm:$0xf]
          %v3040 = vld [vmem:[%s3012 + $0x6c] sm:$0xf]
          %v3041 = vld [vmem:[%s3012 + $0x70] sm:$0xf]
          %v3042 = vld [vmem:[%s3012 + $0x74] sm:$0xf]
          %v3043 = vld [vmem:[%s3012 + $0x78] sm:$0xf]
          %v3044 = vld [vmem:[%s3012 + $0x7c] sm:$0xf]
          %v3077 = vunpack.c.l.b16 %v3013
          %v3078 = vunpack.c.l.b16 %v3014
          %v3079 = vunpack.c.l.b16 %v3015
          %v3080 = vunpack.c.l.b16 %v3016
          %v3081 = vunpack.c.l.b16 %v3017
          %v3082 = vunpack.c.l.b16 %v3018
          %v3083 = vunpack.c.l.b16 %v3019
          %v3084 = vunpack.c.l.b16 %v3020
          %v3085 = vunpack.c.l.b16 %v3021
          %v3086 = vunpack.c.l.b16 %v3022
          %v3087 = vunpack.c.l.b16 %v3023
          %v3088 = vunpack.c.l.b16 %v3024
          %v3089 = vunpack.c.l.b16 %v3025
          %v3090 = vunpack.c.l.b16 %v3026
          %v3091 = vunpack.c.l.b16 %v3027
          %v3092 = vunpack.c.l.b16 %v3028
          %v3093 = vunpack.c.l.b16 %v3029
          %v3094 = vunpack.c.l.b16 %v3030
          %v3095 = vunpack.c.l.b16 %v3031
          %v3096 = vunpack.c.l.b16 %v3032
          %v3097 = vunpack.c.l.b16 %v3033
          %v3098 = vunpack.c.l.b16 %v3034
          %v3099 = vunpack.c.l.b16 %v3035
          %v3100 = vunpack.c.l.b16 %v3036
          %v3101 = vunpack.c.l.b16 %v3037
          %v3102 = vunpack.c.l.b16 %v3038
          %v3103 = vunpack.c.l.b16 %v3039
          %v3104 = vunpack.c.l.b16 %v3040
          %v3105 = vunpack.c.l.b16 %v3041
          %v3106 = vunpack.c.l.b16 %v3042
          %v3107 = vunpack.c.l.b16 %v3043
          %v3108 = vunpack.c.l.b16 %v3044
          %v3109 = vpack.c.b16 %v3078, %v3077
          %v3110 = vpack.c.b16 %v3080, %v3079
          %v3111 = vpack.c.b16 %v3082, %v3081
          %v3112 = vpack.c.b16 %v3084, %v3083
          %v3113 = vpack.c.b16 %v3086, %v3085
          %v3114 = vpack.c.b16 %v3088, %v3087
          %v3115 = vpack.c.b16 %v3090, %v3089
          %v3116 = vpack.c.b16 %v3092, %v3091
          %v3117 = vpack.c.b16 %v3094, %v3093
          %v3118 = vpack.c.b16 %v3096, %v3095
          %v3119 = vpack.c.b16 %v3098, %v3097
          %v3120 = vpack.c.b16 %v3100, %v3099
          %v3121 = vpack.c.b16 %v3102, %v3101
          %v3122 = vpack.c.b16 %v3104, %v3103
          %v3123 = vpack.c.b16 %v3106, %v3105
          %v3124 = vpack.c.b16 %v3108, %v3107
          %3141 = vmatprep.subr.bf16.mxu0 0
          %3142 = vmatpush1.bf16.msra.mxu0 %v3116
          %3143 = vmatprep.subr.bf16.mxu0 0
          %3144 = vmatpush1.bf16.msra.mxu0 %v3115
          %3145 = vmatprep.subr.bf16.mxu0 0
          %3146 = vmatpush1.bf16.msra.mxu0 %v3114
          %3147 = vmatprep.subr.bf16.mxu0 0
          %3148 = vmatpush1.bf16.msra.mxu0 %v3113
          %3149 = vmatprep.subr.bf16.mxu0 0
          %3150 = vmatpush1.bf16.msra.mxu0 %v3112
          %3151 = vmatprep.subr.bf16.mxu0 0
          %3152 = vmatpush1.bf16.msra.mxu0 %v3111
          %3153 = vmatprep.subr.bf16.mxu0 0
          %3154 = vmatpush1.bf16.msra.mxu0 %v3110
          %3155 = vmatprep.subr.bf16.mxu0 0
          %3156 = vmatpush1.bf16.msra.mxu0 %v3109
          %3157 = vmatprep.subr.bf16.mxu0 0
          %3158 = vmatpush2.bf16.msra.mxu0 %v3124
          %3159 = vmatprep.subr.bf16.mxu0 0
          %3160 = vmatpush2.bf16.msra.mxu0 %v3123
          %3161 = vmatprep.subr.bf16.mxu0 0
          %3162 = vmatpush2.bf16.msra.mxu0 %v3122
          %3163 = vmatprep.subr.bf16.mxu0 0
          %3164 = vmatpush2.bf16.msra.mxu0 %v3121
          %3165 = vmatprep.subr.bf16.mxu0 0
          %3166 = vmatpush2.bf16.msra.mxu0 %v3120
          %3167 = vmatprep.subr.bf16.mxu0 0
          %3168 = vmatpush2.bf16.msra.mxu0 %v3119
          %3169 = vmatprep.subr.bf16.mxu0 0
          %3170 = vmatpush2.bf16.msra.mxu0 %v3118
          %3171 = vmatprep.subr.bf16.mxu0 0
          %3172 = vmatpush2.bf16.msra.mxu0 %v3117
          %3173 = vmatprep.mubr.bf16.mxu0 %v3005
          %3174 = vmatmul.mubr.bf16.gmra.mxu0 %v3004
          %v3175 = vpop.f32.mrf.mxu0
          %v3176 = vadd.f32 0.0, %v3175
          %v3177 = vpop.f32.mrf.mxu0
          %v3178 = vpop.f32.mrf.mxu0
          %v3179 = vadd.f32 0.0, %v3178
          %v3180 = vpop.f32.mrf.mxu0
          %3181 = vmatprep.mubr.bf16.mxu0 %v3007
          %3182 = vmatmul.mubr.bf16.gmra.mxu0 %v3006
          %v3183 = vpop.f32.mrf.mxu0
          %v3184 = vadd.f32 0.0, %v3183
          %v3185 = vpop.f32.mrf.mxu0
          %v3186 = vpop.f32.mrf.mxu0
          %v3187 = vadd.f32 0.0, %v3186
          %v3188 = vpop.f32.mrf.mxu0
          %3189 = vmatprep.mubr.bf16.mxu0 %v3009
          %3190 = vmatmul.mubr.bf16.gmra.mxu0 %v3008
          %v3191 = vpop.f32.mrf.mxu0
          %v3192 = vadd.f32 0.0, %v3191
          %v3193 = vpop.f32.mrf.mxu0
          %v3194 = vpop.f32.mrf.mxu0
          %v3195 = vadd.f32 0.0, %v3194
          %v3196 = vpop.f32.mrf.mxu0
          %3197 = vmatprep.mubr.bf16.mxu0 %v3011
          %3198 = vmatmul.mubr.bf16.gmra.mxu0 %v3010
          %v3199 = vpop.f32.mrf.mxu0
          %v3200 = vadd.f32 0.0, %v3199
          %v3201 = vpop.f32.mrf.mxu0
          %v3202 = vpop.f32.mrf.mxu0
          %v3203 = vadd.f32 0.0, %v3202
          %v3204 = vpop.f32.mrf.mxu0
          %3205 = vdwg.mxu0
          %v3206 = vld [vmem:[%s339] sm:$0xff]
          %v3207 = vld [vmem:[%s339 + $0x8] sm:$0xff]
          %v3208 = vld [vmem:[%s339 + $0x10] sm:$0xff]
          %v3209 = vld [vmem:[%s339 + $0x18] sm:$0xff]
          %v3210 = vld [vmem:[%s339 + $0x20] sm:$0xff]
          %v3211 = vld [vmem:[%s339 + $0x28] sm:$0xff]
          %v3212 = vld [vmem:[%s339 + $0x30] sm:$0xff]
          %v3213 = vld [vmem:[%s339 + $0x38] sm:$0xff]
          %3214 = vset.pattern.permute.xlu0 3
          %3215 = vperm.xlu0 %3214, %v811
          %v3216 = vpop.permute.xlu0 %3215
          %3218 = vset.pattern.permute.xlu0 3
          %3219 = vperm.xlu0 %3218, %v812
          %v3220 = vpop.permute.xlu0 %3219
          %3222 = vset.pattern.permute.xlu0 3
          %3223 = vperm.xlu0 %3222, %v813
          %v3224 = vpop.permute.xlu0 %3223
          %3226 = vset.pattern.permute.xlu0 3
          %3227 = vperm.xlu0 %3226, %v814
          %v3228 = vpop.permute.xlu0 %3227
          %3230 = vset.pattern.permute.xlu0 3
          %3231 = vperm.xlu0 %3230, %v815
          %v3232 = vpop.permute.xlu0 %3231
          %3234 = vset.pattern.permute.xlu0 3
          %3235 = vperm.xlu0 %3234, %v816
          %v3236 = vpop.permute.xlu0 %3235
          %3238 = vset.pattern.permute.xlu0 3
          %3239 = vperm.xlu0 %3238, %v817
          %v3240 = vpop.permute.xlu0 %3239
          %3242 = vset.pattern.permute.xlu0 3
          %3243 = vperm.xlu0 %3242, %v818
          %v3244 = vpop.permute.xlu0 %3243
          %v3246 = vmul.f32 %v3216, %v3176
          %v3247 = vmul.f32 %v3220, %v3179
          %v3248 = vmul.f32 %v3224, %v3184
          %v3249 = vmul.f32 %v3228, %v3187
          %v3250 = vmul.f32 %v3232, %v3192
          %v3251 = vmul.f32 %v3236, %v3195
          %v3252 = vmul.f32 %v3240, %v3200
          %v3253 = vmul.f32 %v3244, %v3203
          %v3254 = vadd.f32 %v3206, %v3246
          %v3255 = vadd.f32 %v3207, %v3247
          %v3256 = vadd.f32 %v3208, %v3248
          %v3257 = vadd.f32 %v3209, %v3249
          %v3258 = vadd.f32 %v3210, %v3250
          %v3259 = vadd.f32 %v3211, %v3251
          %v3260 = vadd.f32 %v3212, %v3252
          %v3261 = vadd.f32 %v3213, %v3253
          %3262 = vst [vmem:[%s339] sm:$0xff] %v3254
          %3263 = vst [vmem:[%s339 + $0x8] sm:$0xff] %v3255
          %3264 = vst [vmem:[%s339 + $0x10] sm:$0xff] %v3256
          %3265 = vst [vmem:[%s339 + $0x18] sm:$0xff] %v3257
          %3266 = vst [vmem:[%s339 + $0x20] sm:$0xff] %v3258
          %3267 = vst [vmem:[%s339 + $0x28] sm:$0xff] %v3259
          %3268 = vst [vmem:[%s339 + $0x30] sm:$0xff] %v3260
          %3269 = vst [vmem:[%s339 + $0x38] sm:$0xff] %v3261
        $region72: #{tpu_custom_call.1} parent=35 // pred_fallthru
          _
        %3270 = vrot.lane.b32.xlu0 %v811, 124
        %v3271 = vpop.permute.xlu0 %3270
        %3272 = vrot.lane.b32.xlu0 %v812, 124
        %v3273 = vpop.permute.xlu0 %3272
        %3274 = vrot.lane.b32.xlu0 %v813, 124
        %v3275 = vpop.permute.xlu0 %3274
        %3276 = vrot.lane.b32.xlu0 %v814, 124
        %v3277 = vpop.permute.xlu0 %3276
        %3278 = vrot.lane.b32.xlu0 %v815, 124
        %v3279 = vpop.permute.xlu0 %3278
        %3280 = vrot.lane.b32.xlu0 %v816, 124
        %v3281 = vpop.permute.xlu0 %3280
        %3282 = vrot.lane.b32.xlu0 %v817, 124
        %v3283 = vpop.permute.xlu0 %3282
        %3284 = vrot.lane.b32.xlu0 %v818, 124
        %v3285 = vpop.permute.xlu0 %3284
        %v3294 = vsel %vm859, %v3271, 0.0
        %v3295 = vsel %vm859, %v3273, 0.0
        %v3296 = vadd.f32 %v3294, %v3295
        %v3297 = vsel %vm859, %v3275, 0.0
        %v3298 = vadd.f32 %v3296, %v3297
        %v3299 = vsel %vm859, %v3277, 0.0
        %v3300 = vadd.f32 %v3298, %v3299
        %v3301 = vsel %vm859, %v3279, 0.0
        %v3302 = vadd.f32 %v3300, %v3301
        %v3303 = vsel %vm859, %v3281, 0.0
        %v3304 = vadd.f32 %v3302, %v3303
        %v3305 = vsel %vm859, %v3283, 0.0
        %v3306 = vadd.f32 %v3304, %v3305
        %v3307 = vsel %vm859, %v3285, 0.0
        %v3308 = vadd.f32 %v3306, %v3307
        %3309 = vadd.xlane.f32.xlu0 %v3308
        %v3310 = vpop.xlane.xlu0 %3309
        %v3311 = vrot.slane %v3310, 4
        %v3312 = vadd.f32 %v3310, %v3311
        %v3313 = vrot.slane %v3312, 2
        %v3314 = vadd.f32 %v3312, %v3313
        %v3315 = vrot.slane %v3314, 1
        %v3316 = vadd.f32 %v3314, %v3315
        %s3317 = vtos %v3316
        %p3318 = scmp.gt.f32.partialorder %s3317, 0.0
        // Predicated region
        $region73: #{tpu_custom_call.1} parent=35 // pred_check
          %p3319 = pneg %p3318
        $region74: #{tpu_custom_call.1} parent=35 // pred_check_branch
          %3321 = sbr.rel (%p3319) target = $region76
        $region75: #{tpu_custom_call.1} parent=35 // pred_region
          %s3322 = scalar_lea.vmem [#allocation8], 512
          %v3323 = vld [vmem:[%s3322] sm:$0xff]
          %v3324 = vld [vmem:[%s3322 + $0x8] sm:$0xff]
          %v3325 = vld [vmem:[%s3322 + $0x10] sm:$0xff]
          %v3326 = vld [vmem:[%s3322 + $0x18] sm:$0xff]
          %v3327 = vld [vmem:[%s3322 + $0x20] sm:$0xff]
          %v3328 = vld [vmem:[%s3322 + $0x28] sm:$0xff]
          %v3329 = vld [vmem:[%s3322 + $0x30] sm:$0xff]
          %v3330 = vld [vmem:[%s3322 + $0x38] sm:$0xff]
          %v3331 = vld [vmem:[%s3322 + $0x40] sm:$0xff]
          %v3332 = vld [vmem:[%s3322 + $0x48] sm:$0xff]
          %v3333 = vld [vmem:[%s3322 + $0x50] sm:$0xff]
          %v3334 = vld [vmem:[%s3322 + $0x58] sm:$0xff]
          %v3335 = vld [vmem:[%s3322 + $0x60] sm:$0xff]
          %v3336 = vld [vmem:[%s3322 + $0x68] sm:$0xff]
          %v3337 = vld [vmem:[%s3322 + $0x70] sm:$0xff]
          %v3338 = vld [vmem:[%s3322 + $0x78] sm:$0xff]
          %v3355 = vunpack.c.l.b16 %v3323
          %v3356 = vunpack.c.h.b16 %v3323
          %v3357 = vunpack.c.l.b16 %v3324
          %v3358 = vunpack.c.h.b16 %v3324
          %v3359 = vunpack.c.l.b16 %v3325
          %v3360 = vunpack.c.h.b16 %v3325
          %v3361 = vunpack.c.l.b16 %v3326
          %v3362 = vunpack.c.h.b16 %v3326
          %v3363 = vunpack.c.l.b16 %v3327
          %v3364 = vunpack.c.h.b16 %v3327
          %v3365 = vunpack.c.l.b16 %v3328
          %v3366 = vunpack.c.h.b16 %v3328
          %v3367 = vunpack.c.l.b16 %v3329
          %v3368 = vunpack.c.h.b16 %v3329
          %v3369 = vunpack.c.l.b16 %v3330
          %v3370 = vunpack.c.h.b16 %v3330
          %v3371 = vunpack.c.l.b16 %v3331
          %v3372 = vunpack.c.h.b16 %v3331
          %v3373 = vunpack.c.l.b16 %v3332
          %v3374 = vunpack.c.h.b16 %v3332
          %v3375 = vunpack.c.l.b16 %v3333
          %v3376 = vunpack.c.h.b16 %v3333
          %v3377 = vunpack.c.l.b16 %v3334
          %v3378 = vunpack.c.h.b16 %v3334
          %v3379 = vunpack.c.l.b16 %v3335
          %v3380 = vunpack.c.h.b16 %v3335
          %v3381 = vunpack.c.l.b16 %v3336
          %v3382 = vunpack.c.h.b16 %v3336
          %v3383 = vunpack.c.l.b16 %v3337
          %v3384 = vunpack.c.h.b16 %v3337
          %v3385 = vunpack.c.l.b16 %v3338
          %v3386 = vunpack.c.h.b16 %v3338
          %v3387 = vpack.c.b16 %v3357, %v3355
          %v3388 = vpack.c.b16 %v3358, %v3356
          %v3389 = vpack.c.b16 %v3361, %v3359
          %v3390 = vpack.c.b16 %v3362, %v3360
          %v3391 = vpack.c.b16 %v3365, %v3363
          %v3392 = vpack.c.b16 %v3366, %v3364
          %v3393 = vpack.c.b16 %v3369, %v3367
          %v3394 = vpack.c.b16 %v3370, %v3368
          %v3395 = vpack.c.b16 %v3373, %v3371
          %v3396 = vpack.c.b16 %v3374, %v3372
          %v3397 = vpack.c.b16 %v3377, %v3375
          %v3398 = vpack.c.b16 %v3378, %v3376
          %v3399 = vpack.c.b16 %v3381, %v3379
          %v3400 = vpack.c.b16 %v3382, %v3380
          %v3401 = vpack.c.b16 %v3385, %v3383
          %v3402 = vpack.c.b16 %v3386, %v3384
          %3419 = vmatprep.subr.bf16.mxu0 %v3402
          %3420 = vmatpush1.bf16.msra.mxu0 %v3401
          %3421 = vmatprep.subr.bf16.mxu0 %v3400
          %3422 = vmatpush1.bf16.msra.mxu0 %v3399
          %3423 = vmatprep.subr.bf16.mxu0 %v3398
          %3424 = vmatpush1.bf16.msra.mxu0 %v3397
          %3425 = vmatprep.subr.bf16.mxu0 %v3396
          %3426 = vmatpush1.bf16.msra.mxu0 %v3395
          %3427 = vmatprep.subr.bf16.mxu0 %v3394
          %3428 = vmatpush1.bf16.msra.mxu0 %v3393
          %3429 = vmatprep.subr.bf16.mxu0 %v3392
          %3430 = vmatpush1.bf16.msra.mxu0 %v3391
          %3431 = vmatprep.subr.bf16.mxu0 %v3390
          %3432 = vmatpush1.bf16.msra.mxu0 %v3389
          %3433 = vmatprep.subr.bf16.mxu0 %v3388
          %3434 = vmatpush1.bf16.msra.mxu0 %v3387
          %3435 = vmatprep.subr.bf16.mxu0 0
          %3436 = vmatpush2.bf16.msra.mxu0 0
          %3437 = vmatprep.subr.bf16.mxu0 0
          %3438 = vmatpush2.bf16.msra.mxu0 0
          %3439 = vmatprep.subr.bf16.mxu0 0
          %3440 = vmatpush2.bf16.msra.mxu0 0
          %3441 = vmatprep.subr.bf16.mxu0 0
          %3442 = vmatpush2.bf16.msra.mxu0 0
          %3443 = vmatprep.subr.bf16.mxu0 0
          %3444 = vmatpush2.bf16.msra.mxu0 0
          %3445 = vmatprep.subr.bf16.mxu0 0
          %3446 = vmatpush2.bf16.msra.mxu0 0
          %3447 = vmatprep.subr.bf16.mxu0 0
          %3448 = vmatpush2.bf16.msra.mxu0 0
          %3449 = vmatprep.subr.bf16.mxu0 0
          %3450 = vmatpush2.bf16.msra.mxu0 0
          %3451 = vmatprep.mubr.bf16.mxu0 0
          %3452 = vmatmul.mubr.bf16.gmra.mxu0 %v868
          %v3453 = vpop.f32.mrf.mxu0
          %v3454 = vadd.f32 0.0, %v3453
          %v3455 = vpop.f32.mrf.mxu0
          %v3456 = vadd.f32 0.0, %v3455
          %v3457 = vpop.f32.mrf.mxu0
          %v3458 = vadd.f32 0.0, %v3457
          %v3459 = vpop.f32.mrf.mxu0
          %v3460 = vadd.f32 0.0, %v3459
          %3461 = vmatprep.mubr.bf16.mxu0 0
          %3462 = vmatmul.mubr.bf16.gmra.mxu0 %v869
          %v3463 = vpop.f32.mrf.mxu0
          %v3464 = vadd.f32 0.0, %v3463
          %v3465 = vpop.f32.mrf.mxu0
          %v3466 = vadd.f32 0.0, %v3465
          %v3467 = vpop.f32.mrf.mxu0
          %v3468 = vadd.f32 0.0, %v3467
          %v3469 = vpop.f32.mrf.mxu0
          %v3470 = vadd.f32 0.0, %v3469
          %3471 = vmatprep.mubr.bf16.mxu0 0
          %3472 = vmatmul.mubr.bf16.gmra.mxu0 %v870
          %v3473 = vpop.f32.mrf.mxu0
          %v3474 = vadd.f32 0.0, %v3473
          %v3475 = vpop.f32.mrf.mxu0
          %v3476 = vadd.f32 0.0, %v3475
          %v3477 = vpop.f32.mrf.mxu0
          %v3478 = vadd.f32 0.0, %v3477
          %v3479 = vpop.f32.mrf.mxu0
          %v3480 = vadd.f32 0.0, %v3479
          %3481 = vmatprep.mubr.bf16.mxu0 0
          %3482 = vmatmul.mubr.bf16.gmra.mxu0 %v871
          %v3483 = vpop.f32.mrf.mxu0
          %v3484 = vadd.f32 0.0, %v3483
          %v3485 = vpop.f32.mrf.mxu0
          %v3486 = vadd.f32 0.0, %v3485
          %v3487 = vpop.f32.mrf.mxu0
          %v3488 = vadd.f32 0.0, %v3487
          %v3489 = vpop.f32.mrf.mxu0
          %v3490 = vadd.f32 0.0, %v3489
          %3491 = vdwg.mxu0
          %v3492 = vxor.u32 %v3454, 2147483648
          %v3493 = vxor.u32 %v3456, 2147483648
          %v3494 = vxor.u32 %v3458, 2147483648
          %v3495 = vxor.u32 %v3460, 2147483648
          %v3496 = vxor.u32 %v3464, 2147483648
          %v3497 = vxor.u32 %v3466, 2147483648
          %v3498 = vxor.u32 %v3468, 2147483648
          %v3499 = vxor.u32 %v3470, 2147483648
          %v3500 = vxor.u32 %v3474, 2147483648
          %v3501 = vxor.u32 %v3476, 2147483648
          %v3502 = vxor.u32 %v3478, 2147483648
          %v3503 = vxor.u32 %v3480, 2147483648
          %v3504 = vxor.u32 %v3484, 2147483648
          %v3505 = vxor.u32 %v3486, 2147483648
          %v3506 = vxor.u32 %v3488, 2147483648
          %v3507 = vxor.u32 %v3490, 2147483648
          %v3508 = vmul.f32 %v3492, 1.442695
          %v3509 = vpow.pop %v3508
          %v3510 = vmul.f32 %v3493, 1.442695
          %v3511 = vpow.pop %v3510
          %v3512 = vmul.f32 %v3494, 1.442695
          %v3513 = vpow.pop %v3512
          %v3514 = vmul.f32 %v3495, 1.442695
          %v3515 = vpow.pop %v3514
          %v3516 = vmul.f32 %v3496, 1.442695
          %v3517 = vpow.pop %v3516
          %v3518 = vmul.f32 %v3497, 1.442695
          %v3519 = vpow.pop %v3518
          %v3520 = vmul.f32 %v3498, 1.442695
          %v3521 = vpow.pop %v3520
          %v3522 = vmul.f32 %v3499, 1.442695
          %v3523 = vpow.pop %v3522
          %v3524 = vmul.f32 %v3500, 1.442695
          %v3525 = vpow.pop %v3524
          %v3526 = vmul.f32 %v3501, 1.442695
          %v3527 = vpow.pop %v3526
          %v3528 = vmul.f32 %v3502, 1.442695
          %v3529 = vpow.pop %v3528
          %v3530 = vmul.f32 %v3503, 1.442695
          %v3531 = vpow.pop %v3530
          %v3532 = vmul.f32 %v3504, 1.442695
          %v3533 = vpow.pop %v3532
          %v3534 = vmul.f32 %v3505, 1.442695
          %v3535 = vpow.pop %v3534
          %v3536 = vmul.f32 %v3506, 1.442695
          %v3537 = vpow.pop %v3536
          %v3538 = vmul.f32 %v3507, 1.442695
          %v3539 = vpow.pop %v3538
          %v3540 = vadd.f32 %v3509, 1.0
          %v3541 = vadd.f32 %v3511, 1.0
          %v3542 = vadd.f32 %v3513, 1.0
          %v3543 = vadd.f32 %v3515, 1.0
          %v3544 = vadd.f32 %v3517, 1.0
          %v3545 = vadd.f32 %v3519, 1.0
          %v3546 = vadd.f32 %v3521, 1.0
          %v3547 = vadd.f32 %v3523, 1.0
          %v3548 = vadd.f32 %v3525, 1.0
          %v3549 = vadd.f32 %v3527, 1.0
          %v3550 = vadd.f32 %v3529, 1.0
          %v3551 = vadd.f32 %v3531, 1.0
          %v3552 = vadd.f32 %v3533, 1.0
          %v3553 = vadd.f32 %v3535, 1.0
          %v3554 = vadd.f32 %v3537, 1.0
          %v3555 = vadd.f32 %v3539, 1.0
          %v3556 = vrcp.pop %v3540
          %v3557 = vmul.f32 1.0, %v3556
          %v3558 = vrcp.pop %v3541
          %v3559 = vmul.f32 1.0, %v3558
          %v3560 = vrcp.pop %v3542
          %v3561 = vmul.f32 1.0, %v3560
          %v3562 = vrcp.pop %v3543
          %v3563 = vmul.f32 1.0, %v3562
          %v3564 = vrcp.pop %v3544
          %v3565 = vmul.f32 1.0, %v3564
          %v3566 = vrcp.pop %v3545
          %v3567 = vmul.f32 1.0, %v3566
          %v3568 = vrcp.pop %v3546
          %v3569 = vmul.f32 1.0, %v3568
          %v3570 = vrcp.pop %v3547
          %v3571 = vmul.f32 1.0, %v3570
          %v3572 = vrcp.pop %v3548
          %v3573 = vmul.f32 1.0, %v3572
          %v3574 = vrcp.pop %v3549
          %v3575 = vmul.f32 1.0, %v3574
          %v3576 = vrcp.pop %v3550
          %v3577 = vmul.f32 1.0, %v3576
          %v3578 = vrcp.pop %v3551
          %v3579 = vmul.f32 1.0, %v3578
          %v3580 = vrcp.pop %v3552
          %v3581 = vmul.f32 1.0, %v3580
          %v3582 = vrcp.pop %v3553
          %v3583 = vmul.f32 1.0, %v3582
          %v3584 = vrcp.pop %v3554
          %v3585 = vmul.f32 1.0, %v3584
          %v3586 = vrcp.pop %v3555
          %v3587 = vmul.f32 1.0, %v3586
          %v3588 = vmul.f32 %v3454, %v3557
          %v3589 = vmul.f32 %v3456, %v3559
          %v3590 = vmul.f32 %v3458, %v3561
          %v3591 = vmul.f32 %v3460, %v3563
          %v3592 = vmul.f32 %v3464, %v3565
          %v3593 = vmul.f32 %v3466, %v3567
          %v3594 = vmul.f32 %v3468, %v3569
          %v3595 = vmul.f32 %v3470, %v3571
          %v3596 = vmul.f32 %v3474, %v3573
          %v3597 = vmul.f32 %v3476, %v3575
          %v3598 = vmul.f32 %v3478, %v3577
          %v3599 = vmul.f32 %v3480, %v3579
          %v3600 = vmul.f32 %v3484, %v3581
          %v3601 = vmul.f32 %v3486, %v3583
          %v3602 = vmul.f32 %v3488, %v3585
          %v3603 = vmul.f32 %v3490, %v3587
          %v3604 = vpack.c.bf16 %v3590, %v3588
          %v3605 = vpack.c.bf16 %v3591, %v3589
          %v3606 = vpack.c.bf16 %v3594, %v3592
          %v3607 = vpack.c.bf16 %v3595, %v3593
          %v3608 = vpack.c.bf16 %v3598, %v3596
          %v3609 = vpack.c.bf16 %v3599, %v3597
          %v3610 = vpack.c.bf16 %v3602, %v3600
          %v3611 = vpack.c.bf16 %v3603, %v3601
          %s3612 = scalar_lea.vmem [#allocation9], 512
          %v3613 = vld [vmem:[%s3612] sm:$0xf]
          %v3614 = vld [vmem:[%s3612 + $0x4] sm:$0xf]
          %v3615 = vld [vmem:[%s3612 + $0x8] sm:$0xf]
          %v3616 = vld [vmem:[%s3612 + $0xc] sm:$0xf]
          %v3617 = vld [vmem:[%s3612 + $0x10] sm:$0xf]
          %v3618 = vld [vmem:[%s3612 + $0x14] sm:$0xf]
          %v3619 = vld [vmem:[%s3612 + $0x18] sm:$0xf]
          %v3620 = vld [vmem:[%s3612 + $0x1c] sm:$0xf]
          %v3621 = vld [vmem:[%s3612 + $0x20] sm:$0xf]
          %v3622 = vld [vmem:[%s3612 + $0x24] sm:$0xf]
          %v3623 = vld [vmem:[%s3612 + $0x28] sm:$0xf]
          %v3624 = vld [vmem:[%s3612 + $0x2c] sm:$0xf]
          %v3625 = vld [vmem:[%s3612 + $0x30] sm:$0xf]
          %v3626 = vld [vmem:[%s3612 + $0x34] sm:$0xf]
          %v3627 = vld [vmem:[%s3612 + $0x38] sm:$0xf]
          %v3628 = vld [vmem:[%s3612 + $0x3c] sm:$0xf]
          %v3629 = vld [vmem:[%s3612 + $0x40] sm:$0xf]
          %v3630 = vld [vmem:[%s3612 + $0x44] sm:$0xf]
          %v3631 = vld [vmem:[%s3612 + $0x48] sm:$0xf]
          %v3632 = vld [vmem:[%s3612 + $0x4c] sm:$0xf]
          %v3633 = vld [vmem:[%s3612 + $0x50] sm:$0xf]
          %v3634 = vld [vmem:[%s3612 + $0x54] sm:$0xf]
          %v3635 = vld [vmem:[%s3612 + $0x58] sm:$0xf]
          %v3636 = vld [vmem:[%s3612 + $0x5c] sm:$0xf]
          %v3637 = vld [vmem:[%s3612 + $0x60] sm:$0xf]
          %v3638 = vld [vmem:[%s3612 + $0x64] sm:$0xf]
          %v3639 = vld [vmem:[%s3612 + $0x68] sm:$0xf]
          %v3640 = vld [vmem:[%s3612 + $0x6c] sm:$0xf]
          %v3641 = vld [vmem:[%s3612 + $0x70] sm:$0xf]
          %v3642 = vld [vmem:[%s3612 + $0x74] sm:$0xf]
          %v3643 = vld [vmem:[%s3612 + $0x78] sm:$0xf]
          %v3644 = vld [vmem:[%s3612 + $0x7c] sm:$0xf]
          %v3677 = vunpack.c.l.b16 %v3613
          %v3678 = vunpack.c.l.b16 %v3614
          %v3679 = vunpack.c.l.b16 %v3615
          %v3680 = vunpack.c.l.b16 %v3616
          %v3681 = vunpack.c.l.b16 %v3617
          %v3682 = vunpack.c.l.b16 %v3618
          %v3683 = vunpack.c.l.b16 %v3619
          %v3684 = vunpack.c.l.b16 %v3620
          %v3685 = vunpack.c.l.b16 %v3621
          %v3686 = vunpack.c.l.b16 %v3622
          %v3687 = vunpack.c.l.b16 %v3623
          %v3688 = vunpack.c.l.b16 %v3624
          %v3689 = vunpack.c.l.b16 %v3625
          %v3690 = vunpack.c.l.b16 %v3626
          %v3691 = vunpack.c.l.b16 %v3627
          %v3692 = vunpack.c.l.b16 %v3628
          %v3693 = vunpack.c.l.b16 %v3629
          %v3694 = vunpack.c.l.b16 %v3630
          %v3695 = vunpack.c.l.b16 %v3631
          %v3696 = vunpack.c.l.b16 %v3632
          %v3697 = vunpack.c.l.b16 %v3633
          %v3698 = vunpack.c.l.b16 %v3634
          %v3699 = vunpack.c.l.b16 %v3635
          %v3700 = vunpack.c.l.b16 %v3636
          %v3701 = vunpack.c.l.b16 %v3637
          %v3702 = vunpack.c.l.b16 %v3638
          %v3703 = vunpack.c.l.b16 %v3639
          %v3704 = vunpack.c.l.b16 %v3640
          %v3705 = vunpack.c.l.b16 %v3641
          %v3706 = vunpack.c.l.b16 %v3642
          %v3707 = vunpack.c.l.b16 %v3643
          %v3708 = vunpack.c.l.b16 %v3644
          %v3709 = vpack.c.b16 %v3678, %v3677
          %v3710 = vpack.c.b16 %v3680, %v3679
          %v3711 = vpack.c.b16 %v3682, %v3681
          %v3712 = vpack.c.b16 %v3684, %v3683
          %v3713 = vpack.c.b16 %v3686, %v3685
          %v3714 = vpack.c.b16 %v3688, %v3687
          %v3715 = vpack.c.b16 %v3690, %v3689
          %v3716 = vpack.c.b16 %v3692, %v3691
          %v3717 = vpack.c.b16 %v3694, %v3693
          %v3718 = vpack.c.b16 %v3696, %v3695
          %v3719 = vpack.c.b16 %v3698, %v3697
          %v3720 = vpack.c.b16 %v3700, %v3699
          %v3721 = vpack.c.b16 %v3702, %v3701
          %v3722 = vpack.c.b16 %v3704, %v3703
          %v3723 = vpack.c.b16 %v3706, %v3705
          %v3724 = vpack.c.b16 %v3708, %v3707
          %3741 = vmatprep.subr.bf16.mxu0 0
          %3742 = vmatpush1.bf16.msra.mxu0 %v3716
          %3743 = vmatprep.subr.bf16.mxu0 0
          %3744 = vmatpush1.bf16.msra.mxu0 %v3715
          %3745 = vmatprep.subr.bf16.mxu0 0
          %3746 = vmatpush1.bf16.msra.mxu0 %v3714
          %3747 = vmatprep.subr.bf16.mxu0 0
          %3748 = vmatpush1.bf16.msra.mxu0 %v3713
          %3749 = vmatprep.subr.bf16.mxu0 0
          %3750 = vmatpush1.bf16.msra.mxu0 %v3712
          %3751 = vmatprep.subr.bf16.mxu0 0
          %3752 = vmatpush1.bf16.msra.mxu0 %v3711
          %3753 = vmatprep.subr.bf16.mxu0 0
          %3754 = vmatpush1.bf16.msra.mxu0 %v3710
          %3755 = vmatprep.subr.bf16.mxu0 0
          %3756 = vmatpush1.bf16.msra.mxu0 %v3709
          %3757 = vmatprep.subr.bf16.mxu0 0
          %3758 = vmatpush2.bf16.msra.mxu0 %v3724
          %3759 = vmatprep.subr.bf16.mxu0 0
          %3760 = vmatpush2.bf16.msra.mxu0 %v3723
          %3761 = vmatprep.subr.bf16.mxu0 0
          %3762 = vmatpush2.bf16.msra.mxu0 %v3722
          %3763 = vmatprep.subr.bf16.mxu0 0
          %3764 = vmatpush2.bf16.msra.mxu0 %v3721
          %3765 = vmatprep.subr.bf16.mxu0 0
          %3766 = vmatpush2.bf16.msra.mxu0 %v3720
          %3767 = vmatprep.subr.bf16.mxu0 0
          %3768 = vmatpush2.bf16.msra.mxu0 %v3719
          %3769 = vmatprep.subr.bf16.mxu0 0
          %3770 = vmatpush2.bf16.msra.mxu0 %v3718
          %3771 = vmatprep.subr.bf16.mxu0 0
          %3772 = vmatpush2.bf16.msra.mxu0 %v3717
          %3773 = vmatprep.mubr.bf16.mxu0 %v3605
          %3774 = vmatmul.mubr.bf16.gmra.mxu0 %v3604
          %v3775 = vpop.f32.mrf.mxu0
          %v3776 = vadd.f32 0.0, %v3775
          %v3777 = vpop.f32.mrf.mxu0
          %v3778 = vpop.f32.mrf.mxu0
          %v3779 = vadd.f32 0.0, %v3778
          %v3780 = vpop.f32.mrf.mxu0
          %3781 = vmatprep.mubr.bf16.mxu0 %v3607
          %3782 = vmatmul.mubr.bf16.gmra.mxu0 %v3606
          %v3783 = vpop.f32.mrf.mxu0
          %v3784 = vadd.f32 0.0, %v3783
          %v3785 = vpop.f32.mrf.mxu0
          %v3786 = vpop.f32.mrf.mxu0
          %v3787 = vadd.f32 0.0, %v3786
          %v3788 = vpop.f32.mrf.mxu0
          %3789 = vmatprep.mubr.bf16.mxu0 %v3609
          %3790 = vmatmul.mubr.bf16.gmra.mxu0 %v3608
          %v3791 = vpop.f32.mrf.mxu0
          %v3792 = vadd.f32 0.0, %v3791
          %v3793 = vpop.f32.mrf.mxu0
          %v3794 = vpop.f32.mrf.mxu0
          %v3795 = vadd.f32 0.0, %v3794
          %v3796 = vpop.f32.mrf.mxu0
          %3797 = vmatprep.mubr.bf16.mxu0 %v3611
          %3798 = vmatmul.mubr.bf16.gmra.mxu0 %v3610
          %v3799 = vpop.f32.mrf.mxu0
          %v3800 = vadd.f32 0.0, %v3799
          %v3801 = vpop.f32.mrf.mxu0
          %v3802 = vpop.f32.mrf.mxu0
          %v3803 = vadd.f32 0.0, %v3802
          %v3804 = vpop.f32.mrf.mxu0
          %3805 = vdwg.mxu0
          %v3806 = vld [vmem:[%s339] sm:$0xff]
          %v3807 = vld [vmem:[%s339 + $0x8] sm:$0xff]
          %v3808 = vld [vmem:[%s339 + $0x10] sm:$0xff]
          %v3809 = vld [vmem:[%s339 + $0x18] sm:$0xff]
          %v3810 = vld [vmem:[%s339 + $0x20] sm:$0xff]
          %v3811 = vld [vmem:[%s339 + $0x28] sm:$0xff]
          %v3812 = vld [vmem:[%s339 + $0x30] sm:$0xff]
          %v3813 = vld [vmem:[%s339 + $0x38] sm:$0xff]
          %3814 = vset.pattern.permute.xlu0 4
          %3815 = vperm.xlu0 %3814, %v811
          %v3816 = vpop.permute.xlu0 %3815
          %3818 = vset.pattern.permute.xlu0 4
          %3819 = vperm.xlu0 %3818, %v812
          %v3820 = vpop.permute.xlu0 %3819
          %3822 = vset.pattern.permute.xlu0 4
          %3823 = vperm.xlu0 %3822, %v813
          %v3824 = vpop.permute.xlu0 %3823
          %3826 = vset.pattern.permute.xlu0 4
          %3827 = vperm.xlu0 %3826, %v814
          %v3828 = vpop.permute.xlu0 %3827
          %3830 = vset.pattern.permute.xlu0 4
          %3831 = vperm.xlu0 %3830, %v815
          %v3832 = vpop.permute.xlu0 %3831
          %3834 = vset.pattern.permute.xlu0 4
          %3835 = vperm.xlu0 %3834, %v816
          %v3836 = vpop.permute.xlu0 %3835
          %3838 = vset.pattern.permute.xlu0 4
          %3839 = vperm.xlu0 %3838, %v817
          %v3840 = vpop.permute.xlu0 %3839
          %3842 = vset.pattern.permute.xlu0 4
          %3843 = vperm.xlu0 %3842, %v818
          %v3844 = vpop.permute.xlu0 %3843
          %v3846 = vmul.f32 %v3816, %v3776
          %v3847 = vmul.f32 %v3820, %v3779
          %v3848 = vmul.f32 %v3824, %v3784
          %v3849 = vmul.f32 %v3828, %v3787
          %v3850 = vmul.f32 %v3832, %v3792
          %v3851 = vmul.f32 %v3836, %v3795
          %v3852 = vmul.f32 %v3840, %v3800
          %v3853 = vmul.f32 %v3844, %v3803
          %v3854 = vadd.f32 %v3806, %v3846
          %v3855 = vadd.f32 %v3807, %v3847
          %v3856 = vadd.f32 %v3808, %v3848
          %v3857 = vadd.f32 %v3809, %v3849
          %v3858 = vadd.f32 %v3810, %v3850
          %v3859 = vadd.f32 %v3811, %v3851
          %v3860 = vadd.f32 %v3812, %v3852
          %v3861 = vadd.f32 %v3813, %v3853
          %3862 = vst [vmem:[%s339] sm:$0xff] %v3854
          %3863 = vst [vmem:[%s339 + $0x8] sm:$0xff] %v3855
          %3864 = vst [vmem:[%s339 + $0x10] sm:$0xff] %v3856
          %3865 = vst [vmem:[%s339 + $0x18] sm:$0xff] %v3857
          %3866 = vst [vmem:[%s339 + $0x20] sm:$0xff] %v3858
          %3867 = vst [vmem:[%s339 + $0x28] sm:$0xff] %v3859
          %3868 = vst [vmem:[%s339 + $0x30] sm:$0xff] %v3860
          %3869 = vst [vmem:[%s339 + $0x38] sm:$0xff] %v3861
        $region76: #{tpu_custom_call.1} parent=35 // pred_fallthru
          _
        %3870 = vrot.lane.b32.xlu0 %v811, 123
        %v3871 = vpop.permute.xlu0 %3870
        %3872 = vrot.lane.b32.xlu0 %v812, 123
        %v3873 = vpop.permute.xlu0 %3872
        %3874 = vrot.lane.b32.xlu0 %v813, 123
        %v3875 = vpop.permute.xlu0 %3874
        %3876 = vrot.lane.b32.xlu0 %v814, 123
        %v3877 = vpop.permute.xlu0 %3876
        %3878 = vrot.lane.b32.xlu0 %v815, 123
        %v3879 = vpop.permute.xlu0 %3878
        %3880 = vrot.lane.b32.xlu0 %v816, 123
        %v3881 = vpop.permute.xlu0 %3880
        %3882 = vrot.lane.b32.xlu0 %v817, 123
        %v3883 = vpop.permute.xlu0 %3882
        %3884 = vrot.lane.b32.xlu0 %v818, 123
        %v3885 = vpop.permute.xlu0 %3884
        %v3894 = vsel %vm859, %v3871, 0.0
        %v3895 = vsel %vm859, %v3873, 0.0
        %v3896 = vadd.f32 %v3894, %v3895
        %v3897 = vsel %vm859, %v3875, 0.0
        %v3898 = vadd.f32 %v3896, %v3897
        %v3899 = vsel %vm859, %v3877, 0.0
        %v3900 = vadd.f32 %v3898, %v3899
        %v3901 = vsel %vm859, %v3879, 0.0
        %v3902 = vadd.f32 %v3900, %v3901
        %v3903 = vsel %vm859, %v3881, 0.0
        %v3904 = vadd.f32 %v3902, %v3903
        %v3905 = vsel %vm859, %v3883, 0.0
        %v3906 = vadd.f32 %v3904, %v3905
        %v3907 = vsel %vm859, %v3885, 0.0
        %v3908 = vadd.f32 %v3906, %v3907
        %3909 = vadd.xlane.f32.xlu0 %v3908
        %v3910 = vpop.xlane.xlu0 %3909
        %v3911 = vrot.slane %v3910, 4
        %v3912 = vadd.f32 %v3910, %v3911
        %v3913 = vrot.slane %v3912, 2
        %v3914 = vadd.f32 %v3912, %v3913
        %v3915 = vrot.slane %v3914, 1
        %v3916 = vadd.f32 %v3914, %v3915
        %s3917 = vtos %v3916
        %p3918 = scmp.gt.f32.partialorder %s3917, 0.0
        // Predicated region
        $region77: #{tpu_custom_call.1} parent=35 // pred_check
          %p3919 = pneg %p3918
        $region78: #{tpu_custom_call.1} parent=35 // pred_check_branch
          %3921 = sbr.rel (%p3919) target = $region80
        $region79: #{tpu_custom_call.1} parent=35 // pred_region
          %s3922 = scalar_lea.vmem [#allocation8], 640
          %v3923 = vld [vmem:[%s3922] sm:$0xff]
          %v3924 = vld [vmem:[%s3922 + $0x8] sm:$0xff]
          %v3925 = vld [vmem:[%s3922 + $0x10] sm:$0xff]
          %v3926 = vld [vmem:[%s3922 + $0x18] sm:$0xff]
          %v3927 = vld [vmem:[%s3922 + $0x20] sm:$0xff]
          %v3928 = vld [vmem:[%s3922 + $0x28] sm:$0xff]
          %v3929 = vld [vmem:[%s3922 + $0x30] sm:$0xff]
          %v3930 = vld [vmem:[%s3922 + $0x38] sm:$0xff]
          %v3931 = vld [vmem:[%s3922 + $0x40] sm:$0xff]
          %v3932 = vld [vmem:[%s3922 + $0x48] sm:$0xff]
          %v3933 = vld [vmem:[%s3922 + $0x50] sm:$0xff]
          %v3934 = vld [vmem:[%s3922 + $0x58] sm:$0xff]
          %v3935 = vld [vmem:[%s3922 + $0x60] sm:$0xff]
          %v3936 = vld [vmem:[%s3922 + $0x68] sm:$0xff]
          %v3937 = vld [vmem:[%s3922 + $0x70] sm:$0xff]
          %v3938 = vld [vmem:[%s3922 + $0x78] sm:$0xff]
          %v3955 = vunpack.c.l.b16 %v3923
          %v3956 = vunpack.c.h.b16 %v3923
          %v3957 = vunpack.c.l.b16 %v3924
          %v3958 = vunpack.c.h.b16 %v3924
          %v3959 = vunpack.c.l.b16 %v3925
          %v3960 = vunpack.c.h.b16 %v3925
          %v3961 = vunpack.c.l.b16 %v3926
          %v3962 = vunpack.c.h.b16 %v3926
          %v3963 = vunpack.c.l.b16 %v3927
          %v3964 = vunpack.c.h.b16 %v3927
          %v3965 = vunpack.c.l.b16 %v3928
          %v3966 = vunpack.c.h.b16 %v3928
          %v3967 = vunpack.c.l.b16 %v3929
          %v3968 = vunpack.c.h.b16 %v3929
          %v3969 = vunpack.c.l.b16 %v3930
          %v3970 = vunpack.c.h.b16 %v3930
          %v3971 = vunpack.c.l.b16 %v3931
          %v3972 = vunpack.c.h.b16 %v3931
          %v3973 = vunpack.c.l.b16 %v3932
          %v3974 = vunpack.c.h.b16 %v3932
          %v3975 = vunpack.c.l.b16 %v3933
          %v3976 = vunpack.c.h.b16 %v3933
          %v3977 = vunpack.c.l.b16 %v3934
          %v3978 = vunpack.c.h.b16 %v3934
          %v3979 = vunpack.c.l.b16 %v3935
          %v3980 = vunpack.c.h.b16 %v3935
          %v3981 = vunpack.c.l.b16 %v3936
          %v3982 = vunpack.c.h.b16 %v3936
          %v3983 = vunpack.c.l.b16 %v3937
          %v3984 = vunpack.c.h.b16 %v3937
          %v3985 = vunpack.c.l.b16 %v3938
          %v3986 = vunpack.c.h.b16 %v3938
          %v3987 = vpack.c.b16 %v3957, %v3955
          %v3988 = vpack.c.b16 %v3958, %v3956
          %v3989 = vpack.c.b16 %v3961, %v3959
          %v3990 = vpack.c.b16 %v3962, %v3960
          %v3991 = vpack.c.b16 %v3965, %v3963
          %v3992 = vpack.c.b16 %v3966, %v3964
          %v3993 = vpack.c.b16 %v3969, %v3967
          %v3994 = vpack.c.b16 %v3970, %v3968
          %v3995 = vpack.c.b16 %v3973, %v3971
          %v3996 = vpack.c.b16 %v3974, %v3972
          %v3997 = vpack.c.b16 %v3977, %v3975
          %v3998 = vpack.c.b16 %v3978, %v3976
          %v3999 = vpack.c.b16 %v3981, %v3979
          %v4000 = vpack.c.b16 %v3982, %v3980
          %v4001 = vpack.c.b16 %v3985, %v3983
          %v4002 = vpack.c.b16 %v3986, %v3984
          %4019 = vmatprep.subr.bf16.mxu0 %v4002
          %4020 = vmatpush1.bf16.msra.mxu0 %v4001
          %4021 = vmatprep.subr.bf16.mxu0 %v4000
          %4022 = vmatpush1.bf16.msra.mxu0 %v3999
          %4023 = vmatprep.subr.bf16.mxu0 %v3998
          %4024 = vmatpush1.bf16.msra.mxu0 %v3997
          %4025 = vmatprep.subr.bf16.mxu0 %v3996
          %4026 = vmatpush1.bf16.msra.mxu0 %v3995
          %4027 = vmatprep.subr.bf16.mxu0 %v3994
          %4028 = vmatpush1.bf16.msra.mxu0 %v3993
          %4029 = vmatprep.subr.bf16.mxu0 %v3992
          %4030 = vmatpush1.bf16.msra.mxu0 %v3991
          %4031 = vmatprep.subr.bf16.mxu0 %v3990
          %4032 = vmatpush1.bf16.msra.mxu0 %v3989
          %4033 = vmatprep.subr.bf16.mxu0 %v3988
          %4034 = vmatpush1.bf16.msra.mxu0 %v3987
          %4035 = vmatprep.subr.bf16.mxu0 0
          %4036 = vmatpush2.bf16.msra.mxu0 0
          %4037 = vmatprep.subr.bf16.mxu0 0
          %4038 = vmatpush2.bf16.msra.mxu0 0
          %4039 = vmatprep.subr.bf16.mxu0 0
          %4040 = vmatpush2.bf16.msra.mxu0 0
          %4041 = vmatprep.subr.bf16.mxu0 0
          %4042 = vmatpush2.bf16.msra.mxu0 0
          %4043 = vmatprep.subr.bf16.mxu0 0
          %4044 = vmatpush2.bf16.msra.mxu0 0
          %4045 = vmatprep.subr.bf16.mxu0 0
          %4046 = vmatpush2.bf16.msra.mxu0 0
          %4047 = vmatprep.subr.bf16.mxu0 0
          %4048 = vmatpush2.bf16.msra.mxu0 0
          %4049 = vmatprep.subr.bf16.mxu0 0
          %4050 = vmatpush2.bf16.msra.mxu0 0
          %4051 = vmatprep.mubr.bf16.mxu0 0
          %4052 = vmatmul.mubr.bf16.gmra.mxu0 %v868
          %v4053 = vpop.f32.mrf.mxu0
          %v4054 = vadd.f32 0.0, %v4053
          %v4055 = vpop.f32.mrf.mxu0
          %v4056 = vadd.f32 0.0, %v4055
          %v4057 = vpop.f32.mrf.mxu0
          %v4058 = vadd.f32 0.0, %v4057
          %v4059 = vpop.f32.mrf.mxu0
          %v4060 = vadd.f32 0.0, %v4059
          %4061 = vmatprep.mubr.bf16.mxu0 0
          %4062 = vmatmul.mubr.bf16.gmra.mxu0 %v869
          %v4063 = vpop.f32.mrf.mxu0
          %v4064 = vadd.f32 0.0, %v4063
          %v4065 = vpop.f32.mrf.mxu0
          %v4066 = vadd.f32 0.0, %v4065
          %v4067 = vpop.f32.mrf.mxu0
          %v4068 = vadd.f32 0.0, %v4067
          %v4069 = vpop.f32.mrf.mxu0
          %v4070 = vadd.f32 0.0, %v4069
          %4071 = vmatprep.mubr.bf16.mxu0 0
          %4072 = vmatmul.mubr.bf16.gmra.mxu0 %v870
          %v4073 = vpop.f32.mrf.mxu0
          %v4074 = vadd.f32 0.0, %v4073
          %v4075 = vpop.f32.mrf.mxu0
          %v4076 = vadd.f32 0.0, %v4075
          %v4077 = vpop.f32.mrf.mxu0
          %v4078 = vadd.f32 0.0, %v4077
          %v4079 = vpop.f32.mrf.mxu0
          %v4080 = vadd.f32 0.0, %v4079
          %4081 = vmatprep.mubr.bf16.mxu0 0
          %4082 = vmatmul.mubr.bf16.gmra.mxu0 %v871
          %v4083 = vpop.f32.mrf.mxu0
          %v4084 = vadd.f32 0.0, %v4083
          %v4085 = vpop.f32.mrf.mxu0
          %v4086 = vadd.f32 0.0, %v4085
          %v4087 = vpop.f32.mrf.mxu0
          %v4088 = vadd.f32 0.0, %v4087
          %v4089 = vpop.f32.mrf.mxu0
          %v4090 = vadd.f32 0.0, %v4089
          %4091 = vdwg.mxu0
          %v4092 = vxor.u32 %v4054, 2147483648
          %v4093 = vxor.u32 %v4056, 2147483648
          %v4094 = vxor.u32 %v4058, 2147483648
          %v4095 = vxor.u32 %v4060, 2147483648
          %v4096 = vxor.u32 %v4064, 2147483648
          %v4097 = vxor.u32 %v4066, 2147483648
          %v4098 = vxor.u32 %v4068, 2147483648
          %v4099 = vxor.u32 %v4070, 2147483648
          %v4100 = vxor.u32 %v4074, 2147483648
          %v4101 = vxor.u32 %v4076, 2147483648
          %v4102 = vxor.u32 %v4078, 2147483648
          %v4103 = vxor.u32 %v4080, 2147483648
          %v4104 = vxor.u32 %v4084, 2147483648
          %v4105 = vxor.u32 %v4086, 2147483648
          %v4106 = vxor.u32 %v4088, 2147483648
          %v4107 = vxor.u32 %v4090, 2147483648
          %v4108 = vmul.f32 %v4092, 1.442695
          %v4109 = vpow.pop %v4108
          %v4110 = vmul.f32 %v4093, 1.442695
          %v4111 = vpow.pop %v4110
          %v4112 = vmul.f32 %v4094, 1.442695
          %v4113 = vpow.pop %v4112
          %v4114 = vmul.f32 %v4095, 1.442695
          %v4115 = vpow.pop %v4114
          %v4116 = vmul.f32 %v4096, 1.442695
          %v4117 = vpow.pop %v4116
          %v4118 = vmul.f32 %v4097, 1.442695
          %v4119 = vpow.pop %v4118
          %v4120 = vmul.f32 %v4098, 1.442695
          %v4121 = vpow.pop %v4120
          %v4122 = vmul.f32 %v4099, 1.442695
          %v4123 = vpow.pop %v4122
          %v4124 = vmul.f32 %v4100, 1.442695
          %v4125 = vpow.pop %v4124
          %v4126 = vmul.f32 %v4101, 1.442695
          %v4127 = vpow.pop %v4126
          %v4128 = vmul.f32 %v4102, 1.442695
          %v4129 = vpow.pop %v4128
          %v4130 = vmul.f32 %v4103, 1.442695
          %v4131 = vpow.pop %v4130
          %v4132 = vmul.f32 %v4104, 1.442695
          %v4133 = vpow.pop %v4132
          %v4134 = vmul.f32 %v4105, 1.442695
          %v4135 = vpow.pop %v4134
          %v4136 = vmul.f32 %v4106, 1.442695
          %v4137 = vpow.pop %v4136
          %v4138 = vmul.f32 %v4107, 1.442695
          %v4139 = vpow.pop %v4138
          %v4140 = vadd.f32 %v4109, 1.0
          %v4141 = vadd.f32 %v4111, 1.0
          %v4142 = vadd.f32 %v4113, 1.0
          %v4143 = vadd.f32 %v4115, 1.0
          %v4144 = vadd.f32 %v4117, 1.0
          %v4145 = vadd.f32 %v4119, 1.0
          %v4146 = vadd.f32 %v4121, 1.0
          %v4147 = vadd.f32 %v4123, 1.0
          %v4148 = vadd.f32 %v4125, 1.0
          %v4149 = vadd.f32 %v4127, 1.0
          %v4150 = vadd.f32 %v4129, 1.0
          %v4151 = vadd.f32 %v4131, 1.0
          %v4152 = vadd.f32 %v4133, 1.0
          %v4153 = vadd.f32 %v4135, 1.0
          %v4154 = vadd.f32 %v4137, 1.0
          %v4155 = vadd.f32 %v4139, 1.0
          %v4156 = vrcp.pop %v4140
          %v4157 = vmul.f32 1.0, %v4156
          %v4158 = vrcp.pop %v4141
          %v4159 = vmul.f32 1.0, %v4158
          %v4160 = vrcp.pop %v4142
          %v4161 = vmul.f32 1.0, %v4160
          %v4162 = vrcp.pop %v4143
          %v4163 = vmul.f32 1.0, %v4162
          %v4164 = vrcp.pop %v4144
          %v4165 = vmul.f32 1.0, %v4164
          %v4166 = vrcp.pop %v4145
          %v4167 = vmul.f32 1.0, %v4166
          %v4168 = vrcp.pop %v4146
          %v4169 = vmul.f32 1.0, %v4168
          %v4170 = vrcp.pop %v4147
          %v4171 = vmul.f32 1.0, %v4170
          %v4172 = vrcp.pop %v4148
          %v4173 = vmul.f32 1.0, %v4172
          %v4174 = vrcp.pop %v4149
          %v4175 = vmul.f32 1.0, %v4174
          %v4176 = vrcp.pop %v4150
          %v4177 = vmul.f32 1.0, %v4176
          %v4178 = vrcp.pop %v4151
          %v4179 = vmul.f32 1.0, %v4178
          %v4180 = vrcp.pop %v4152
          %v4181 = vmul.f32 1.0, %v4180
          %v4182 = vrcp.pop %v4153
          %v4183 = vmul.f32 1.0, %v4182
          %v4184 = vrcp.pop %v4154
          %v4185 = vmul.f32 1.0, %v4184
          %v4186 = vrcp.pop %v4155
          %v4187 = vmul.f32 1.0, %v4186
          %v4188 = vmul.f32 %v4054, %v4157
          %v4189 = vmul.f32 %v4056, %v4159
          %v4190 = vmul.f32 %v4058, %v4161
          %v4191 = vmul.f32 %v4060, %v4163
          %v4192 = vmul.f32 %v4064, %v4165
          %v4193 = vmul.f32 %v4066, %v4167
          %v4194 = vmul.f32 %v4068, %v4169
          %v4195 = vmul.f32 %v4070, %v4171
          %v4196 = vmul.f32 %v4074, %v4173
          %v4197 = vmul.f32 %v4076, %v4175
          %v4198 = vmul.f32 %v4078, %v4177
          %v4199 = vmul.f32 %v4080, %v4179
          %v4200 = vmul.f32 %v4084, %v4181
          %v4201 = vmul.f32 %v4086, %v4183
          %v4202 = vmul.f32 %v4088, %v4185
          %v4203 = vmul.f32 %v4090, %v4187
          %v4204 = vpack.c.bf16 %v4190, %v4188
          %v4205 = vpack.c.bf16 %v4191, %v4189
          %v4206 = vpack.c.bf16 %v4194, %v4192
          %v4207 = vpack.c.bf16 %v4195, %v4193
          %v4208 = vpack.c.bf16 %v4198, %v4196
          %v4209 = vpack.c.bf16 %v4199, %v4197
          %v4210 = vpack.c.bf16 %v4202, %v4200
          %v4211 = vpack.c.bf16 %v4203, %v4201
          %s4212 = scalar_lea.vmem [#allocation9], 640
          %v4213 = vld [vmem:[%s4212] sm:$0xf]
          %v4214 = vld [vmem:[%s4212 + $0x4] sm:$0xf]
          %v4215 = vld [vmem:[%s4212 + $0x8] sm:$0xf]
          %v4216 = vld [vmem:[%s4212 + $0xc] sm:$0xf]
          %v4217 = vld [vmem:[%s4212 + $0x10] sm:$0xf]
          %v4218 = vld [vmem:[%s4212 + $0x14] sm:$0xf]
          %v4219 = vld [vmem:[%s4212 + $0x18] sm:$0xf]
          %v4220 = vld [vmem:[%s4212 + $0x1c] sm:$0xf]
          %v4221 = vld [vmem:[%s4212 + $0x20] sm:$0xf]
          %v4222 = vld [vmem:[%s4212 + $0x24] sm:$0xf]
          %v4223 = vld [vmem:[%s4212 + $0x28] sm:$0xf]
          %v4224 = vld [vmem:[%s4212 + $0x2c] sm:$0xf]
          %v4225 = vld [vmem:[%s4212 + $0x30] sm:$0xf]
          %v4226 = vld [vmem:[%s4212 + $0x34] sm:$0xf]
          %v4227 = vld [vmem:[%s4212 + $0x38] sm:$0xf]
          %v4228 = vld [vmem:[%s4212 + $0x3c] sm:$0xf]
          %v4229 = vld [vmem:[%s4212 + $0x40] sm:$0xf]
          %v4230 = vld [vmem:[%s4212 + $0x44] sm:$0xf]
          %v4231 = vld [vmem:[%s4212 + $0x48] sm:$0xf]
          %v4232 = vld [vmem:[%s4212 + $0x4c] sm:$0xf]
          %v4233 = vld [vmem:[%s4212 + $0x50] sm:$0xf]
          %v4234 = vld [vmem:[%s4212 + $0x54] sm:$0xf]
          %v4235 = vld [vmem:[%s4212 + $0x58] sm:$0xf]
          %v4236 = vld [vmem:[%s4212 + $0x5c] sm:$0xf]
          %v4237 = vld [vmem:[%s4212 + $0x60] sm:$0xf]
          %v4238 = vld [vmem:[%s4212 + $0x64] sm:$0xf]
          %v4239 = vld [vmem:[%s4212 + $0x68] sm:$0xf]
          %v4240 = vld [vmem:[%s4212 + $0x6c] sm:$0xf]
          %v4241 = vld [vmem:[%s4212 + $0x70] sm:$0xf]
          %v4242 = vld [vmem:[%s4212 + $0x74] sm:$0xf]
          %v4243 = vld [vmem:[%s4212 + $0x78] sm:$0xf]
          %v4244 = vld [vmem:[%s4212 + $0x7c] sm:$0xf]
          %v4277 = vunpack.c.l.b16 %v4213
          %v4278 = vunpack.c.l.b16 %v4214
          %v4279 = vunpack.c.l.b16 %v4215
          %v4280 = vunpack.c.l.b16 %v4216
          %v4281 = vunpack.c.l.b16 %v4217
          %v4282 = vunpack.c.l.b16 %v4218
          %v4283 = vunpack.c.l.b16 %v4219
          %v4284 = vunpack.c.l.b16 %v4220
          %v4285 = vunpack.c.l.b16 %v4221
          %v4286 = vunpack.c.l.b16 %v4222
          %v4287 = vunpack.c.l.b16 %v4223
          %v4288 = vunpack.c.l.b16 %v4224
          %v4289 = vunpack.c.l.b16 %v4225
          %v4290 = vunpack.c.l.b16 %v4226
          %v4291 = vunpack.c.l.b16 %v4227
          %v4292 = vunpack.c.l.b16 %v4228
          %v4293 = vunpack.c.l.b16 %v4229
          %v4294 = vunpack.c.l.b16 %v4230
          %v4295 = vunpack.c.l.b16 %v4231
          %v4296 = vunpack.c.l.b16 %v4232
          %v4297 = vunpack.c.l.b16 %v4233
          %v4298 = vunpack.c.l.b16 %v4234
          %v4299 = vunpack.c.l.b16 %v4235
          %v4300 = vunpack.c.l.b16 %v4236
          %v4301 = vunpack.c.l.b16 %v4237
          %v4302 = vunpack.c.l.b16 %v4238
          %v4303 = vunpack.c.l.b16 %v4239
          %v4304 = vunpack.c.l.b16 %v4240
          %v4305 = vunpack.c.l.b16 %v4241
          %v4306 = vunpack.c.l.b16 %v4242
          %v4307 = vunpack.c.l.b16 %v4243
          %v4308 = vunpack.c.l.b16 %v4244
          %v4309 = vpack.c.b16 %v4278, %v4277
          %v4310 = vpack.c.b16 %v4280, %v4279
          %v4311 = vpack.c.b16 %v4282, %v4281
          %v4312 = vpack.c.b16 %v4284, %v4283
          %v4313 = vpack.c.b16 %v4286, %v4285
          %v4314 = vpack.c.b16 %v4288, %v4287
          %v4315 = vpack.c.b16 %v4290, %v4289
          %v4316 = vpack.c.b16 %v4292, %v4291
          %v4317 = vpack.c.b16 %v4294, %v4293
          %v4318 = vpack.c.b16 %v4296, %v4295
          %v4319 = vpack.c.b16 %v4298, %v4297
          %v4320 = vpack.c.b16 %v4300, %v4299
          %v4321 = vpack.c.b16 %v4302, %v4301
          %v4322 = vpack.c.b16 %v4304, %v4303
          %v4323 = vpack.c.b16 %v4306, %v4305
          %v4324 = vpack.c.b16 %v4308, %v4307
          %4341 = vmatprep.subr.bf16.mxu0 0
          %4342 = vmatpush1.bf16.msra.mxu0 %v4316
          %4343 = vmatprep.subr.bf16.mxu0 0
          %4344 = vmatpush1.bf16.msra.mxu0 %v4315
          %4345 = vmatprep.subr.bf16.mxu0 0
          %4346 = vmatpush1.bf16.msra.mxu0 %v4314
          %4347 = vmatprep.subr.bf16.mxu0 0
          %4348 = vmatpush1.bf16.msra.mxu0 %v4313
          %4349 = vmatprep.subr.bf16.mxu0 0
          %4350 = vmatpush1.bf16.msra.mxu0 %v4312
          %4351 = vmatprep.subr.bf16.mxu0 0
          %4352 = vmatpush1.bf16.msra.mxu0 %v4311
          %4353 = vmatprep.subr.bf16.mxu0 0
          %4354 = vmatpush1.bf16.msra.mxu0 %v4310
          %4355 = vmatprep.subr.bf16.mxu0 0
          %4356 = vmatpush1.bf16.msra.mxu0 %v4309
          %4357 = vmatprep.subr.bf16.mxu0 0
          %4358 = vmatpush2.bf16.msra.mxu0 %v4324
          %4359 = vmatprep.subr.bf16.mxu0 0
          %4360 = vmatpush2.bf16.msra.mxu0 %v4323
          %4361 = vmatprep.subr.bf16.mxu0 0
          %4362 = vmatpush2.bf16.msra.mxu0 %v4322
          %4363 = vmatprep.subr.bf16.mxu0 0
          %4364 = vmatpush2.bf16.msra.mxu0 %v4321
          %4365 = vmatprep.subr.bf16.mxu0 0
          %4366 = vmatpush2.bf16.msra.mxu0 %v4320
          %4367 = vmatprep.subr.bf16.mxu0 0
          %4368 = vmatpush2.bf16.msra.mxu0 %v4319
          %4369 = vmatprep.subr.bf16.mxu0 0
          %4370 = vmatpush2.bf16.msra.mxu0 %v4318
          %4371 = vmatprep.subr.bf16.mxu0 0
          %4372 = vmatpush2.bf16.msra.mxu0 %v4317
          %4373 = vmatprep.mubr.bf16.mxu0 %v4205
          %4374 = vmatmul.mubr.bf16.gmra.mxu0 %v4204
          %v4375 = vpop.f32.mrf.mxu0
          %v4376 = vadd.f32 0.0, %v4375
          %v4377 = vpop.f32.mrf.mxu0
          %v4378 = vpop.f32.mrf.mxu0
          %v4379 = vadd.f32 0.0, %v4378
          %v4380 = vpop.f32.mrf.mxu0
          %4381 = vmatprep.mubr.bf16.mxu0 %v4207
          %4382 = vmatmul.mubr.bf16.gmra.mxu0 %v4206
          %v4383 = vpop.f32.mrf.mxu0
          %v4384 = vadd.f32 0.0, %v4383
          %v4385 = vpop.f32.mrf.mxu0
          %v4386 = vpop.f32.mrf.mxu0
          %v4387 = vadd.f32 0.0, %v4386
          %v4388 = vpop.f32.mrf.mxu0
          %4389 = vmatprep.mubr.bf16.mxu0 %v4209
          %4390 = vmatmul.mubr.bf16.gmra.mxu0 %v4208
          %v4391 = vpop.f32.mrf.mxu0
          %v4392 = vadd.f32 0.0, %v4391
          %v4393 = vpop.f32.mrf.mxu0
          %v4394 = vpop.f32.mrf.mxu0
          %v4395 = vadd.f32 0.0, %v4394
          %v4396 = vpop.f32.mrf.mxu0
          %4397 = vmatprep.mubr.bf16.mxu0 %v4211
          %4398 = vmatmul.mubr.bf16.gmra.mxu0 %v4210
          %v4399 = vpop.f32.mrf.mxu0
          %v4400 = vadd.f32 0.0, %v4399
          %v4401 = vpop.f32.mrf.mxu0
          %v4402 = vpop.f32.mrf.mxu0
          %v4403 = vadd.f32 0.0, %v4402
          %v4404 = vpop.f32.mrf.mxu0
          %4405 = vdwg.mxu0
          %v4406 = vld [vmem:[%s339] sm:$0xff]
          %v4407 = vld [vmem:[%s339 + $0x8] sm:$0xff]
          %v4408 = vld [vmem:[%s339 + $0x10] sm:$0xff]
          %v4409 = vld [vmem:[%s339 + $0x18] sm:$0xff]
          %v4410 = vld [vmem:[%s339 + $0x20] sm:$0xff]
          %v4411 = vld [vmem:[%s339 + $0x28] sm:$0xff]
          %v4412 = vld [vmem:[%s339 + $0x30] sm:$0xff]
          %v4413 = vld [vmem:[%s339 + $0x38] sm:$0xff]
          %4414 = vset.pattern.permute.xlu0 5
          %4415 = vperm.xlu0 %4414, %v811
          %v4416 = vpop.permute.xlu0 %4415
          %4418 = vset.pattern.permute.xlu0 5
          %4419 = vperm.xlu0 %4418, %v812
          %v4420 = vpop.permute.xlu0 %4419
          %4422 = vset.pattern.permute.xlu0 5
          %4423 = vperm.xlu0 %4422, %v813
          %v4424 = vpop.permute.xlu0 %4423
          %4426 = vset.pattern.permute.xlu0 5
          %4427 = vperm.xlu0 %4426, %v814
          %v4428 = vpop.permute.xlu0 %4427
          %4430 = vset.pattern.permute.xlu0 5
          %4431 = vperm.xlu0 %4430, %v815
          %v4432 = vpop.permute.xlu0 %4431
          %4434 = vset.pattern.permute.xlu0 5
          %4435 = vperm.xlu0 %4434, %v816
          %v4436 = vpop.permute.xlu0 %4435
          %4438 = vset.pattern.permute.xlu0 5
          %4439 = vperm.xlu0 %4438, %v817
          %v4440 = vpop.permute.xlu0 %4439
          %4442 = vset.pattern.permute.xlu0 5
          %4443 = vperm.xlu0 %4442, %v818
          %v4444 = vpop.permute.xlu0 %4443
          %v4446 = vmul.f32 %v4416, %v4376
          %v4447 = vmul.f32 %v4420, %v4379
          %v4448 = vmul.f32 %v4424, %v4384
          %v4449 = vmul.f32 %v4428, %v4387
          %v4450 = vmul.f32 %v4432, %v4392
          %v4451 = vmul.f32 %v4436, %v4395
          %v4452 = vmul.f32 %v4440, %v4400
          %v4453 = vmul.f32 %v4444, %v4403
          %v4454 = vadd.f32 %v4406, %v4446
          %v4455 = vadd.f32 %v4407, %v4447
          %v4456 = vadd.f32 %v4408, %v4448
          %v4457 = vadd.f32 %v4409, %v4449
          %v4458 = vadd.f32 %v4410, %v4450
          %v4459 = vadd.f32 %v4411, %v4451
          %v4460 = vadd.f32 %v4412, %v4452
          %v4461 = vadd.f32 %v4413, %v4453
          %4462 = vst [vmem:[%s339] sm:$0xff] %v4454
          %4463 = vst [vmem:[%s339 + $0x8] sm:$0xff] %v4455
          %4464 = vst [vmem:[%s339 + $0x10] sm:$0xff] %v4456
          %4465 = vst [vmem:[%s339 + $0x18] sm:$0xff] %v4457
          %4466 = vst [vmem:[%s339 + $0x20] sm:$0xff] %v4458
          %4467 = vst [vmem:[%s339 + $0x28] sm:$0xff] %v4459
          %4468 = vst [vmem:[%s339 + $0x30] sm:$0xff] %v4460
          %4469 = vst [vmem:[%s339 + $0x38] sm:$0xff] %v4461
        $region80: #{tpu_custom_call.1} parent=35 // pred_fallthru
          _
        %4470 = vrot.lane.b32.xlu0 %v811, 122
        %v4471 = vpop.permute.xlu0 %4470
        %4472 = vrot.lane.b32.xlu0 %v812, 122
        %v4473 = vpop.permute.xlu0 %4472
        %4474 = vrot.lane.b32.xlu0 %v813, 122
        %v4475 = vpop.permute.xlu0 %4474
        %4476 = vrot.lane.b32.xlu0 %v814, 122
        %v4477 = vpop.permute.xlu0 %4476
        %4478 = vrot.lane.b32.xlu0 %v815, 122
        %v4479 = vpop.permute.xlu0 %4478
        %4480 = vrot.lane.b32.xlu0 %v816, 122
        %v4481 = vpop.permute.xlu0 %4480
        %4482 = vrot.lane.b32.xlu0 %v817, 122
        %v4483 = vpop.permute.xlu0 %4482
        %4484 = vrot.lane.b32.xlu0 %v818, 122
        %v4485 = vpop.permute.xlu0 %4484
        %v4494 = vsel %vm859, %v4471, 0.0
        %v4495 = vsel %vm859, %v4473, 0.0
        %v4496 = vadd.f32 %v4494, %v4495
        %v4497 = vsel %vm859, %v4475, 0.0
        %v4498 = vadd.f32 %v4496, %v4497
        %v4499 = vsel %vm859, %v4477, 0.0
        %v4500 = vadd.f32 %v4498, %v4499
        %v4501 = vsel %vm859, %v4479, 0.0
        %v4502 = vadd.f32 %v4500, %v4501
        %v4503 = vsel %vm859, %v4481, 0.0
        %v4504 = vadd.f32 %v4502, %v4503
        %v4505 = vsel %vm859, %v4483, 0.0
        %v4506 = vadd.f32 %v4504, %v4505
        %v4507 = vsel %vm859, %v4485, 0.0
        %v4508 = vadd.f32 %v4506, %v4507
        %4509 = vadd.xlane.f32.xlu0 %v4508
        %v4510 = vpop.xlane.xlu0 %4509
        %v4511 = vrot.slane %v4510, 4
        %v4512 = vadd.f32 %v4510, %v4511
        %v4513 = vrot.slane %v4512, 2
        %v4514 = vadd.f32 %v4512, %v4513
        %v4515 = vrot.slane %v4514, 1
        %v4516 = vadd.f32 %v4514, %v4515
        %s4517 = vtos %v4516
        %p4518 = scmp.gt.f32.partialorder %s4517, 0.0
        // Predicated region
        $region81: #{tpu_custom_call.1} parent=35 // pred_check
          %p4519 = pneg %p4518
        $region82: #{tpu_custom_call.1} parent=35 // pred_check_branch
          %4521 = sbr.rel (%p4519) target = $region84
        $region83: #{tpu_custom_call.1} parent=35 // pred_region
          %s4522 = scalar_lea.vmem [#allocation8], 768
          %v4523 = vld [vmem:[%s4522] sm:$0xff]
          %v4524 = vld [vmem:[%s4522 + $0x8] sm:$0xff]
          %v4525 = vld [vmem:[%s4522 + $0x10] sm:$0xff]
          %v4526 = vld [vmem:[%s4522 + $0x18] sm:$0xff]
          %v4527 = vld [vmem:[%s4522 + $0x20] sm:$0xff]
          %v4528 = vld [vmem:[%s4522 + $0x28] sm:$0xff]
          %v4529 = vld [vmem:[%s4522 + $0x30] sm:$0xff]
          %v4530 = vld [vmem:[%s4522 + $0x38] sm:$0xff]
          %v4531 = vld [vmem:[%s4522 + $0x40] sm:$0xff]
          %v4532 = vld [vmem:[%s4522 + $0x48] sm:$0xff]
          %v4533 = vld [vmem:[%s4522 + $0x50] sm:$0xff]
          %v4534 = vld [vmem:[%s4522 + $0x58] sm:$0xff]
          %v4535 = vld [vmem:[%s4522 + $0x60] sm:$0xff]
          %v4536 = vld [vmem:[%s4522 + $0x68] sm:$0xff]
          %v4537 = vld [vmem:[%s4522 + $0x70] sm:$0xff]
          %v4538 = vld [vmem:[%s4522 + $0x78] sm:$0xff]
          %v4555 = vunpack.c.l.b16 %v4523
          %v4556 = vunpack.c.h.b16 %v4523
          %v4557 = vunpack.c.l.b16 %v4524
          %v4558 = vunpack.c.h.b16 %v4524
          %v4559 = vunpack.c.l.b16 %v4525
          %v4560 = vunpack.c.h.b16 %v4525
          %v4561 = vunpack.c.l.b16 %v4526
          %v4562 = vunpack.c.h.b16 %v4526
          %v4563 = vunpack.c.l.b16 %v4527
          %v4564 = vunpack.c.h.b16 %v4527
          %v4565 = vunpack.c.l.b16 %v4528
          %v4566 = vunpack.c.h.b16 %v4528
          %v4567 = vunpack.c.l.b16 %v4529
          %v4568 = vunpack.c.h.b16 %v4529
          %v4569 = vunpack.c.l.b16 %v4530
          %v4570 = vunpack.c.h.b16 %v4530
          %v4571 = vunpack.c.l.b16 %v4531
          %v4572 = vunpack.c.h.b16 %v4531
          %v4573 = vunpack.c.l.b16 %v4532
          %v4574 = vunpack.c.h.b16 %v4532
          %v4575 = vunpack.c.l.b16 %v4533
          %v4576 = vunpack.c.h.b16 %v4533
          %v4577 = vunpack.c.l.b16 %v4534
          %v4578 = vunpack.c.h.b16 %v4534
          %v4579 = vunpack.c.l.b16 %v4535
          %v4580 = vunpack.c.h.b16 %v4535
          %v4581 = vunpack.c.l.b16 %v4536
          %v4582 = vunpack.c.h.b16 %v4536
          %v4583 = vunpack.c.l.b16 %v4537
          %v4584 = vunpack.c.h.b16 %v4537
          %v4585 = vunpack.c.l.b16 %v4538
          %v4586 = vunpack.c.h.b16 %v4538
          %v4587 = vpack.c.b16 %v4557, %v4555
          %v4588 = vpack.c.b16 %v4558, %v4556
          %v4589 = vpack.c.b16 %v4561, %v4559
          %v4590 = vpack.c.b16 %v4562, %v4560
          %v4591 = vpack.c.b16 %v4565, %v4563
          %v4592 = vpack.c.b16 %v4566, %v4564
          %v4593 = vpack.c.b16 %v4569, %v4567
          %v4594 = vpack.c.b16 %v4570, %v4568
          %v4595 = vpack.c.b16 %v4573, %v4571
          %v4596 = vpack.c.b16 %v4574, %v4572
          %v4597 = vpack.c.b16 %v4577, %v4575
          %v4598 = vpack.c.b16 %v4578, %v4576
          %v4599 = vpack.c.b16 %v4581, %v4579
          %v4600 = vpack.c.b16 %v4582, %v4580
          %v4601 = vpack.c.b16 %v4585, %v4583
          %v4602 = vpack.c.b16 %v4586, %v4584
          %4619 = vmatprep.subr.bf16.mxu0 %v4602
          %4620 = vmatpush1.bf16.msra.mxu0 %v4601
          %4621 = vmatprep.subr.bf16.mxu0 %v4600
          %4622 = vmatpush1.bf16.msra.mxu0 %v4599
          %4623 = vmatprep.subr.bf16.mxu0 %v4598
          %4624 = vmatpush1.bf16.msra.mxu0 %v4597
          %4625 = vmatprep.subr.bf16.mxu0 %v4596
          %4626 = vmatpush1.bf16.msra.mxu0 %v4595
          %4627 = vmatprep.subr.bf16.mxu0 %v4594
          %4628 = vmatpush1.bf16.msra.mxu0 %v4593
          %4629 = vmatprep.subr.bf16.mxu0 %v4592
          %4630 = vmatpush1.bf16.msra.mxu0 %v4591
          %4631 = vmatprep.subr.bf16.mxu0 %v4590
          %4632 = vmatpush1.bf16.msra.mxu0 %v4589
          %4633 = vmatprep.subr.bf16.mxu0 %v4588
          %4634 = vmatpush1.bf16.msra.mxu0 %v4587
          %4635 = vmatprep.subr.bf16.mxu0 0
          %4636 = vmatpush2.bf16.msra.mxu0 0
          %4637 = vmatprep.subr.bf16.mxu0 0
          %4638 = vmatpush2.bf16.msra.mxu0 0
          %4639 = vmatprep.subr.bf16.mxu0 0
          %4640 = vmatpush2.bf16.msra.mxu0 0
          %4641 = vmatprep.subr.bf16.mxu0 0
          %4642 = vmatpush2.bf16.msra.mxu0 0
          %4643 = vmatprep.subr.bf16.mxu0 0
          %4644 = vmatpush2.bf16.msra.mxu0 0
          %4645 = vmatprep.subr.bf16.mxu0 0
          %4646 = vmatpush2.bf16.msra.mxu0 0
          %4647 = vmatprep.subr.bf16.mxu0 0
          %4648 = vmatpush2.bf16.msra.mxu0 0
          %4649 = vmatprep.subr.bf16.mxu0 0
          %4650 = vmatpush2.bf16.msra.mxu0 0
          %4651 = vmatprep.mubr.bf16.mxu0 0
          %4652 = vmatmul.mubr.bf16.gmra.mxu0 %v868
          %v4653 = vpop.f32.mrf.mxu0
          %v4654 = vadd.f32 0.0, %v4653
          %v4655 = vpop.f32.mrf.mxu0
          %v4656 = vadd.f32 0.0, %v4655
          %v4657 = vpop.f32.mrf.mxu0
          %v4658 = vadd.f32 0.0, %v4657
          %v4659 = vpop.f32.mrf.mxu0
          %v4660 = vadd.f32 0.0, %v4659
          %4661 = vmatprep.mubr.bf16.mxu0 0
          %4662 = vmatmul.mubr.bf16.gmra.mxu0 %v869
          %v4663 = vpop.f32.mrf.mxu0
          %v4664 = vadd.f32 0.0, %v4663
          %v4665 = vpop.f32.mrf.mxu0
          %v4666 = vadd.f32 0.0, %v4665
          %v4667 = vpop.f32.mrf.mxu0
          %v4668 = vadd.f32 0.0, %v4667
          %v4669 = vpop.f32.mrf.mxu0
          %v4670 = vadd.f32 0.0, %v4669
          %4671 = vmatprep.mubr.bf16.mxu0 0
          %4672 = vmatmul.mubr.bf16.gmra.mxu0 %v870
          %v4673 = vpop.f32.mrf.mxu0
          %v4674 = vadd.f32 0.0, %v4673
          %v4675 = vpop.f32.mrf.mxu0
          %v4676 = vadd.f32 0.0, %v4675
          %v4677 = vpop.f32.mrf.mxu0
          %v4678 = vadd.f32 0.0, %v4677
          %v4679 = vpop.f32.mrf.mxu0
          %v4680 = vadd.f32 0.0, %v4679
          %4681 = vmatprep.mubr.bf16.mxu0 0
          %4682 = vmatmul.mubr.bf16.gmra.mxu0 %v871
          %v4683 = vpop.f32.mrf.mxu0
          %v4684 = vadd.f32 0.0, %v4683
          %v4685 = vpop.f32.mrf.mxu0
          %v4686 = vadd.f32 0.0, %v4685
          %v4687 = vpop.f32.mrf.mxu0
          %v4688 = vadd.f32 0.0, %v4687
          %v4689 = vpop.f32.mrf.mxu0
          %v4690 = vadd.f32 0.0, %v4689
          %4691 = vdwg.mxu0
          %v4692 = vxor.u32 %v4654, 2147483648
          %v4693 = vxor.u32 %v4656, 2147483648
          %v4694 = vxor.u32 %v4658, 2147483648
          %v4695 = vxor.u32 %v4660, 2147483648
          %v4696 = vxor.u32 %v4664, 2147483648
          %v4697 = vxor.u32 %v4666, 2147483648
          %v4698 = vxor.u32 %v4668, 2147483648
          %v4699 = vxor.u32 %v4670, 2147483648
          %v4700 = vxor.u32 %v4674, 2147483648
          %v4701 = vxor.u32 %v4676, 2147483648
          %v4702 = vxor.u32 %v4678, 2147483648
          %v4703 = vxor.u32 %v4680, 2147483648
          %v4704 = vxor.u32 %v4684, 2147483648
          %v4705 = vxor.u32 %v4686, 2147483648
          %v4706 = vxor.u32 %v4688, 2147483648
          %v4707 = vxor.u32 %v4690, 2147483648
          %v4708 = vmul.f32 %v4692, 1.442695
          %v4709 = vpow.pop %v4708
          %v4710 = vmul.f32 %v4693, 1.442695
          %v4711 = vpow.pop %v4710
          %v4712 = vmul.f32 %v4694, 1.442695
          %v4713 = vpow.pop %v4712
          %v4714 = vmul.f32 %v4695, 1.442695
          %v4715 = vpow.pop %v4714
          %v4716 = vmul.f32 %v4696, 1.442695
          %v4717 = vpow.pop %v4716
          %v4718 = vmul.f32 %v4697, 1.442695
          %v4719 = vpow.pop %v4718
          %v4720 = vmul.f32 %v4698, 1.442695
          %v4721 = vpow.pop %v4720
          %v4722 = vmul.f32 %v4699, 1.442695
          %v4723 = vpow.pop %v4722
          %v4724 = vmul.f32 %v4700, 1.442695
          %v4725 = vpow.pop %v4724
          %v4726 = vmul.f32 %v4701, 1.442695
          %v4727 = vpow.pop %v4726
          %v4728 = vmul.f32 %v4702, 1.442695
          %v4729 = vpow.pop %v4728
          %v4730 = vmul.f32 %v4703, 1.442695
          %v4731 = vpow.pop %v4730
          %v4732 = vmul.f32 %v4704, 1.442695
          %v4733 = vpow.pop %v4732
          %v4734 = vmul.f32 %v4705, 1.442695
          %v4735 = vpow.pop %v4734
          %v4736 = vmul.f32 %v4706, 1.442695
          %v4737 = vpow.pop %v4736
          %v4738 = vmul.f32 %v4707, 1.442695
          %v4739 = vpow.pop %v4738
          %v4740 = vadd.f32 %v4709, 1.0
          %v4741 = vadd.f32 %v4711, 1.0
          %v4742 = vadd.f32 %v4713, 1.0
          %v4743 = vadd.f32 %v4715, 1.0
          %v4744 = vadd.f32 %v4717, 1.0
          %v4745 = vadd.f32 %v4719, 1.0
          %v4746 = vadd.f32 %v4721, 1.0
          %v4747 = vadd.f32 %v4723, 1.0
          %v4748 = vadd.f32 %v4725, 1.0
          %v4749 = vadd.f32 %v4727, 1.0
          %v4750 = vadd.f32 %v4729, 1.0
          %v4751 = vadd.f32 %v4731, 1.0
          %v4752 = vadd.f32 %v4733, 1.0
          %v4753 = vadd.f32 %v4735, 1.0
          %v4754 = vadd.f32 %v4737, 1.0
          %v4755 = vadd.f32 %v4739, 1.0
          %v4756 = vrcp.pop %v4740
          %v4757 = vmul.f32 1.0, %v4756
          %v4758 = vrcp.pop %v4741
          %v4759 = vmul.f32 1.0, %v4758
          %v4760 = vrcp.pop %v4742
          %v4761 = vmul.f32 1.0, %v4760
          %v4762 = vrcp.pop %v4743
          %v4763 = vmul.f32 1.0, %v4762
          %v4764 = vrcp.pop %v4744
          %v4765 = vmul.f32 1.0, %v4764
          %v4766 = vrcp.pop %v4745
          %v4767 = vmul.f32 1.0, %v4766
          %v4768 = vrcp.pop %v4746
          %v4769 = vmul.f32 1.0, %v4768
          %v4770 = vrcp.pop %v4747
          %v4771 = vmul.f32 1.0, %v4770
          %v4772 = vrcp.pop %v4748
          %v4773 = vmul.f32 1.0, %v4772
          %v4774 = vrcp.pop %v4749
          %v4775 = vmul.f32 1.0, %v4774
          %v4776 = vrcp.pop %v4750
          %v4777 = vmul.f32 1.0, %v4776
          %v4778 = vrcp.pop %v4751
          %v4779 = vmul.f32 1.0, %v4778
          %v4780 = vrcp.pop %v4752
          %v4781 = vmul.f32 1.0, %v4780
          %v4782 = vrcp.pop %v4753
          %v4783 = vmul.f32 1.0, %v4782
          %v4784 = vrcp.pop %v4754
          %v4785 = vmul.f32 1.0, %v4784
          %v4786 = vrcp.pop %v4755
          %v4787 = vmul.f32 1.0, %v4786
          %v4788 = vmul.f32 %v4654, %v4757
          %v4789 = vmul.f32 %v4656, %v4759
          %v4790 = vmul.f32 %v4658, %v4761
          %v4791 = vmul.f32 %v4660, %v4763
          %v4792 = vmul.f32 %v4664, %v4765
          %v4793 = vmul.f32 %v4666, %v4767
          %v4794 = vmul.f32 %v4668, %v4769
          %v4795 = vmul.f32 %v4670, %v4771
          %v4796 = vmul.f32 %v4674, %v4773
          %v4797 = vmul.f32 %v4676, %v4775
          %v4798 = vmul.f32 %v4678, %v4777
          %v4799 = vmul.f32 %v4680, %v4779
          %v4800 = vmul.f32 %v4684, %v4781
          %v4801 = vmul.f32 %v4686, %v4783
          %v4802 = vmul.f32 %v4688, %v4785
          %v4803 = vmul.f32 %v4690, %v4787
          %v4804 = vpack.c.bf16 %v4790, %v4788
          %v4805 = vpack.c.bf16 %v4791, %v4789
          %v4806 = vpack.c.bf16 %v4794, %v4792
          %v4807 = vpack.c.bf16 %v4795, %v4793
          %v4808 = vpack.c.bf16 %v4798, %v4796
          %v4809 = vpack.c.bf16 %v4799, %v4797
          %v4810 = vpack.c.bf16 %v4802, %v4800
          %v4811 = vpack.c.bf16 %v4803, %v4801
          %s4812 = scalar_lea.vmem [#allocation9], 768
          %v4813 = vld [vmem:[%s4812] sm:$0xf]
          %v4814 = vld [vmem:[%s4812 + $0x4] sm:$0xf]
          %v4815 = vld [vmem:[%s4812 + $0x8] sm:$0xf]
          %v4816 = vld [vmem:[%s4812 + $0xc] sm:$0xf]
          %v4817 = vld [vmem:[%s4812 + $0x10] sm:$0xf]
          %v4818 = vld [vmem:[%s4812 + $0x14] sm:$0xf]
          %v4819 = vld [vmem:[%s4812 + $0x18] sm:$0xf]
          %v4820 = vld [vmem:[%s4812 + $0x1c] sm:$0xf]
          %v4821 = vld [vmem:[%s4812 + $0x20] sm:$0xf]
          %v4822 = vld [vmem:[%s4812 + $0x24] sm:$0xf]
          %v4823 = vld [vmem:[%s4812 + $0x28] sm:$0xf]
          %v4824 = vld [vmem:[%s4812 + $0x2c] sm:$0xf]
          %v4825 = vld [vmem:[%s4812 + $0x30] sm:$0xf]
          %v4826 = vld [vmem:[%s4812 + $0x34] sm:$0xf]
          %v4827 = vld [vmem:[%s4812 + $0x38] sm:$0xf]
          %v4828 = vld [vmem:[%s4812 + $0x3c] sm:$0xf]
          %v4829 = vld [vmem:[%s4812 + $0x40] sm:$0xf]
          %v4830 = vld [vmem:[%s4812 + $0x44] sm:$0xf]
          %v4831 = vld [vmem:[%s4812 + $0x48] sm:$0xf]
          %v4832 = vld [vmem:[%s4812 + $0x4c] sm:$0xf]
          %v4833 = vld [vmem:[%s4812 + $0x50] sm:$0xf]
          %v4834 = vld [vmem:[%s4812 + $0x54] sm:$0xf]
          %v4835 = vld [vmem:[%s4812 + $0x58] sm:$0xf]
          %v4836 = vld [vmem:[%s4812 + $0x5c] sm:$0xf]
          %v4837 = vld [vmem:[%s4812 + $0x60] sm:$0xf]
          %v4838 = vld [vmem:[%s4812 + $0x64] sm:$0xf]
          %v4839 = vld [vmem:[%s4812 + $0x68] sm:$0xf]
          %v4840 = vld [vmem:[%s4812 + $0x6c] sm:$0xf]
          %v4841 = vld [vmem:[%s4812 + $0x70] sm:$0xf]
          %v4842 = vld [vmem:[%s4812 + $0x74] sm:$0xf]
          %v4843 = vld [vmem:[%s4812 + $0x78] sm:$0xf]
          %v4844 = vld [vmem:[%s4812 + $0x7c] sm:$0xf]
          %v4877 = vunpack.c.l.b16 %v4813
          %v4878 = vunpack.c.l.b16 %v4814
          %v4879 = vunpack.c.l.b16 %v4815
          %v4880 = vunpack.c.l.b16 %v4816
          %v4881 = vunpack.c.l.b16 %v4817
          %v4882 = vunpack.c.l.b16 %v4818
          %v4883 = vunpack.c.l.b16 %v4819
          %v4884 = vunpack.c.l.b16 %v4820
          %v4885 = vunpack.c.l.b16 %v4821
          %v4886 = vunpack.c.l.b16 %v4822
          %v4887 = vunpack.c.l.b16 %v4823
          %v4888 = vunpack.c.l.b16 %v4824
          %v4889 = vunpack.c.l.b16 %v4825
          %v4890 = vunpack.c.l.b16 %v4826
          %v4891 = vunpack.c.l.b16 %v4827
          %v4892 = vunpack.c.l.b16 %v4828
          %v4893 = vunpack.c.l.b16 %v4829
          %v4894 = vunpack.c.l.b16 %v4830
          %v4895 = vunpack.c.l.b16 %v4831
          %v4896 = vunpack.c.l.b16 %v4832
          %v4897 = vunpack.c.l.b16 %v4833
          %v4898 = vunpack.c.l.b16 %v4834
          %v4899 = vunpack.c.l.b16 %v4835
          %v4900 = vunpack.c.l.b16 %v4836
          %v4901 = vunpack.c.l.b16 %v4837
          %v4902 = vunpack.c.l.b16 %v4838
          %v4903 = vunpack.c.l.b16 %v4839
          %v4904 = vunpack.c.l.b16 %v4840
          %v4905 = vunpack.c.l.b16 %v4841
          %v4906 = vunpack.c.l.b16 %v4842
          %v4907 = vunpack.c.l.b16 %v4843
          %v4908 = vunpack.c.l.b16 %v4844
          %v4909 = vpack.c.b16 %v4878, %v4877
          %v4910 = vpack.c.b16 %v4880, %v4879
          %v4911 = vpack.c.b16 %v4882, %v4881
          %v4912 = vpack.c.b16 %v4884, %v4883
          %v4913 = vpack.c.b16 %v4886, %v4885
          %v4914 = vpack.c.b16 %v4888, %v4887
          %v4915 = vpack.c.b16 %v4890, %v4889
          %v4916 = vpack.c.b16 %v4892, %v4891
          %v4917 = vpack.c.b16 %v4894, %v4893
          %v4918 = vpack.c.b16 %v4896, %v4895
          %v4919 = vpack.c.b16 %v4898, %v4897
          %v4920 = vpack.c.b16 %v4900, %v4899
          %v4921 = vpack.c.b16 %v4902, %v4901
          %v4922 = vpack.c.b16 %v4904, %v4903
          %v4923 = vpack.c.b16 %v4906, %v4905
          %v4924 = vpack.c.b16 %v4908, %v4907
          %4941 = vmatprep.subr.bf16.mxu0 0
          %4942 = vmatpush1.bf16.msra.mxu0 %v4916
          %4943 = vmatprep.subr.bf16.mxu0 0
          %4944 = vmatpush1.bf16.msra.mxu0 %v4915
          %4945 = vmatprep.subr.bf16.mxu0 0
          %4946 = vmatpush1.bf16.msra.mxu0 %v4914
          %4947 = vmatprep.subr.bf16.mxu0 0
          %4948 = vmatpush1.bf16.msra.mxu0 %v4913
          %4949 = vmatprep.subr.bf16.mxu0 0
          %4950 = vmatpush1.bf16.msra.mxu0 %v4912
          %4951 = vmatprep.subr.bf16.mxu0 0
          %4952 = vmatpush1.bf16.msra.mxu0 %v4911
          %4953 = vmatprep.subr.bf16.mxu0 0
          %4954 = vmatpush1.bf16.msra.mxu0 %v4910
          %4955 = vmatprep.subr.bf16.mxu0 0
          %4956 = vmatpush1.bf16.msra.mxu0 %v4909
          %4957 = vmatprep.subr.bf16.mxu0 0
          %4958 = vmatpush2.bf16.msra.mxu0 %v4924
          %4959 = vmatprep.subr.bf16.mxu0 0
          %4960 = vmatpush2.bf16.msra.mxu0 %v4923
          %4961 = vmatprep.subr.bf16.mxu0 0
          %4962 = vmatpush2.bf16.msra.mxu0 %v4922
          %4963 = vmatprep.subr.bf16.mxu0 0
          %4964 = vmatpush2.bf16.msra.mxu0 %v4921
          %4965 = vmatprep.subr.bf16.mxu0 0
          %4966 = vmatpush2.bf16.msra.mxu0 %v4920
          %4967 = vmatprep.subr.bf16.mxu0 0
          %4968 = vmatpush2.bf16.msra.mxu0 %v4919
          %4969 = vmatprep.subr.bf16.mxu0 0
          %4970 = vmatpush2.bf16.msra.mxu0 %v4918
          %4971 = vmatprep.subr.bf16.mxu0 0
          %4972 = vmatpush2.bf16.msra.mxu0 %v4917
          %4973 = vmatprep.mubr.bf16.mxu0 %v4805
          %4974 = vmatmul.mubr.bf16.gmra.mxu0 %v4804
          %v4975 = vpop.f32.mrf.mxu0
          %v4976 = vadd.f32 0.0, %v4975
          %v4977 = vpop.f32.mrf.mxu0
          %v4978 = vpop.f32.mrf.mxu0
          %v4979 = vadd.f32 0.0, %v4978
          %v4980 = vpop.f32.mrf.mxu0
          %4981 = vmatprep.mubr.bf16.mxu0 %v4807
          %4982 = vmatmul.mubr.bf16.gmra.mxu0 %v4806
          %v4983 = vpop.f32.mrf.mxu0
          %v4984 = vadd.f32 0.0, %v4983
          %v4985 = vpop.f32.mrf.mxu0
          %v4986 = vpop.f32.mrf.mxu0
          %v4987 = vadd.f32 0.0, %v4986
          %v4988 = vpop.f32.mrf.mxu0
          %4989 = vmatprep.mubr.bf16.mxu0 %v4809
          %4990 = vmatmul.mubr.bf16.gmra.mxu0 %v4808
          %v4991 = vpop.f32.mrf.mxu0
          %v4992 = vadd.f32 0.0, %v4991
          %v4993 = vpop.f32.mrf.mxu0
          %v4994 = vpop.f32.mrf.mxu0
          %v4995 = vadd.f32 0.0, %v4994
          %v4996 = vpop.f32.mrf.mxu0
          %4997 = vmatprep.mubr.bf16.mxu0 %v4811
          %4998 = vmatmul.mubr.bf16.gmra.mxu0 %v4810
          %v4999 = vpop.f32.mrf.mxu0
          %v5000 = vadd.f32 0.0, %v4999
          %v5001 = vpop.f32.mrf.mxu0
          %v5002 = vpop.f32.mrf.mxu0
          %v5003 = vadd.f32 0.0, %v5002
          %v5004 = vpop.f32.mrf.mxu0
          %5005 = vdwg.mxu0
          %v5006 = vld [vmem:[%s339] sm:$0xff]
          %v5007 = vld [vmem:[%s339 + $0x8] sm:$0xff]
          %v5008 = vld [vmem:[%s339 + $0x10] sm:$0xff]
          %v5009 = vld [vmem:[%s339 + $0x18] sm:$0xff]
          %v5010 = vld [vmem:[%s339 + $0x20] sm:$0xff]
          %v5011 = vld [vmem:[%s339 + $0x28] sm:$0xff]
          %v5012 = vld [vmem:[%s339 + $0x30] sm:$0xff]
          %v5013 = vld [vmem:[%s339 + $0x38] sm:$0xff]
          %5014 = vset.pattern.permute.xlu0 6
          %5015 = vperm.xlu0 %5014, %v811
          %v5016 = vpop.permute.xlu0 %5015
          %5018 = vset.pattern.permute.xlu0 6
          %5019 = vperm.xlu0 %5018, %v812
          %v5020 = vpop.permute.xlu0 %5019
          %5022 = vset.pattern.permute.xlu0 6
          %5023 = vperm.xlu0 %5022, %v813
          %v5024 = vpop.permute.xlu0 %5023
          %5026 = vset.pattern.permute.xlu0 6
          %5027 = vperm.xlu0 %5026, %v814
          %v5028 = vpop.permute.xlu0 %5027
          %5030 = vset.pattern.permute.xlu0 6
          %5031 = vperm.xlu0 %5030, %v815
          %v5032 = vpop.permute.xlu0 %5031
          %5034 = vset.pattern.permute.xlu0 6
          %5035 = vperm.xlu0 %5034, %v816
          %v5036 = vpop.permute.xlu0 %5035
          %5038 = vset.pattern.permute.xlu0 6
          %5039 = vperm.xlu0 %5038, %v817
          %v5040 = vpop.permute.xlu0 %5039
          %5042 = vset.pattern.permute.xlu0 6
          %5043 = vperm.xlu0 %5042, %v818
          %v5044 = vpop.permute.xlu0 %5043
          %v5046 = vmul.f32 %v5016, %v4976
          %v5047 = vmul.f32 %v5020, %v4979
          %v5048 = vmul.f32 %v5024, %v4984
          %v5049 = vmul.f32 %v5028, %v4987
          %v5050 = vmul.f32 %v5032, %v4992
          %v5051 = vmul.f32 %v5036, %v4995
          %v5052 = vmul.f32 %v5040, %v5000
          %v5053 = vmul.f32 %v5044, %v5003
          %v5054 = vadd.f32 %v5006, %v5046
          %v5055 = vadd.f32 %v5007, %v5047
          %v5056 = vadd.f32 %v5008, %v5048
          %v5057 = vadd.f32 %v5009, %v5049
          %v5058 = vadd.f32 %v5010, %v5050
          %v5059 = vadd.f32 %v5011, %v5051
          %v5060 = vadd.f32 %v5012, %v5052
          %v5061 = vadd.f32 %v5013, %v5053
          %5062 = vst [vmem:[%s339] sm:$0xff] %v5054
          %5063 = vst [vmem:[%s339 + $0x8] sm:$0xff] %v5055
          %5064 = vst [vmem:[%s339 + $0x10] sm:$0xff] %v5056
          %5065 = vst [vmem:[%s339 + $0x18] sm:$0xff] %v5057
          %5066 = vst [vmem:[%s339 + $0x20] sm:$0xff] %v5058
          %5067 = vst [vmem:[%s339 + $0x28] sm:$0xff] %v5059
          %5068 = vst [vmem:[%s339 + $0x30] sm:$0xff] %v5060
          %5069 = vst [vmem:[%s339 + $0x38] sm:$0xff] %v5061
        $region84: #{tpu_custom_call.1} parent=35 // pred_fallthru
          _
        %5070 = vrot.lane.b32.xlu0 %v811, 121
        %v5071 = vpop.permute.xlu0 %5070
        %5072 = vrot.lane.b32.xlu0 %v812, 121
        %v5073 = vpop.permute.xlu0 %5072
        %5074 = vrot.lane.b32.xlu0 %v813, 121
        %v5075 = vpop.permute.xlu0 %5074
        %5076 = vrot.lane.b32.xlu0 %v814, 121
        %v5077 = vpop.permute.xlu0 %5076
        %5078 = vrot.lane.b32.xlu0 %v815, 121
        %v5079 = vpop.permute.xlu0 %5078
        %5080 = vrot.lane.b32.xlu0 %v816, 121
        %v5081 = vpop.permute.xlu0 %5080
        %5082 = vrot.lane.b32.xlu0 %v817, 121
        %v5083 = vpop.permute.xlu0 %5082
        %5084 = vrot.lane.b32.xlu0 %v818, 121
        %v5085 = vpop.permute.xlu0 %5084
        %v5094 = vsel %vm859, %v5071, 0.0
        %v5095 = vsel %vm859, %v5073, 0.0
        %v5096 = vadd.f32 %v5094, %v5095
        %v5097 = vsel %vm859, %v5075, 0.0
        %v5098 = vadd.f32 %v5096, %v5097
        %v5099 = vsel %vm859, %v5077, 0.0
        %v5100 = vadd.f32 %v5098, %v5099
        %v5101 = vsel %vm859, %v5079, 0.0
        %v5102 = vadd.f32 %v5100, %v5101
        %v5103 = vsel %vm859, %v5081, 0.0
        %v5104 = vadd.f32 %v5102, %v5103
        %v5105 = vsel %vm859, %v5083, 0.0
        %v5106 = vadd.f32 %v5104, %v5105
        %v5107 = vsel %vm859, %v5085, 0.0
        %v5108 = vadd.f32 %v5106, %v5107
        %5109 = vadd.xlane.f32.xlu0 %v5108
        %v5110 = vpop.xlane.xlu0 %5109
        %v5111 = vrot.slane %v5110, 4
        %v5112 = vadd.f32 %v5110, %v5111
        %v5113 = vrot.slane %v5112, 2
        %v5114 = vadd.f32 %v5112, %v5113
        %v5115 = vrot.slane %v5114, 1
        %v5116 = vadd.f32 %v5114, %v5115
        %s5117 = vtos %v5116
        %p5118 = scmp.gt.f32.partialorder %s5117, 0.0
        // Predicated region
        $region85: #{tpu_custom_call.1} parent=35 // pred_check
          %p5119 = pneg %p5118
        $region86: #{tpu_custom_call.1} parent=35 // pred_check_branch
          %5121 = sbr.rel (%p5119) target = $region88
        $region87: #{tpu_custom_call.1} parent=35 // pred_region
          %s5122 = scalar_lea.vmem [#allocation8], 896
          %v5123 = vld [vmem:[%s5122] sm:$0xff]
          %v5124 = vld [vmem:[%s5122 + $0x8] sm:$0xff]
          %v5125 = vld [vmem:[%s5122 + $0x10] sm:$0xff]
          %v5126 = vld [vmem:[%s5122 + $0x18] sm:$0xff]
          %v5127 = vld [vmem:[%s5122 + $0x20] sm:$0xff]
          %v5128 = vld [vmem:[%s5122 + $0x28] sm:$0xff]
          %v5129 = vld [vmem:[%s5122 + $0x30] sm:$0xff]
          %v5130 = vld [vmem:[%s5122 + $0x38] sm:$0xff]
          %v5131 = vld [vmem:[%s5122 + $0x40] sm:$0xff]
          %v5132 = vld [vmem:[%s5122 + $0x48] sm:$0xff]
          %v5133 = vld [vmem:[%s5122 + $0x50] sm:$0xff]
          %v5134 = vld [vmem:[%s5122 + $0x58] sm:$0xff]
          %v5135 = vld [vmem:[%s5122 + $0x60] sm:$0xff]
          %v5136 = vld [vmem:[%s5122 + $0x68] sm:$0xff]
          %v5137 = vld [vmem:[%s5122 + $0x70] sm:$0xff]
          %v5138 = vld [vmem:[%s5122 + $0x78] sm:$0xff]
          %v5155 = vunpack.c.l.b16 %v5123
          %v5156 = vunpack.c.h.b16 %v5123
          %v5157 = vunpack.c.l.b16 %v5124
          %v5158 = vunpack.c.h.b16 %v5124
          %v5159 = vunpack.c.l.b16 %v5125
          %v5160 = vunpack.c.h.b16 %v5125
          %v5161 = vunpack.c.l.b16 %v5126
          %v5162 = vunpack.c.h.b16 %v5126
          %v5163 = vunpack.c.l.b16 %v5127
          %v5164 = vunpack.c.h.b16 %v5127
          %v5165 = vunpack.c.l.b16 %v5128
          %v5166 = vunpack.c.h.b16 %v5128
          %v5167 = vunpack.c.l.b16 %v5129
          %v5168 = vunpack.c.h.b16 %v5129
          %v5169 = vunpack.c.l.b16 %v5130
          %v5170 = vunpack.c.h.b16 %v5130
          %v5171 = vunpack.c.l.b16 %v5131
          %v5172 = vunpack.c.h.b16 %v5131
          %v5173 = vunpack.c.l.b16 %v5132
          %v5174 = vunpack.c.h.b16 %v5132
          %v5175 = vunpack.c.l.b16 %v5133
          %v5176 = vunpack.c.h.b16 %v5133
          %v5177 = vunpack.c.l.b16 %v5134
          %v5178 = vunpack.c.h.b16 %v5134
          %v5179 = vunpack.c.l.b16 %v5135
          %v5180 = vunpack.c.h.b16 %v5135
          %v5181 = vunpack.c.l.b16 %v5136
          %v5182 = vunpack.c.h.b16 %v5136
          %v5183 = vunpack.c.l.b16 %v5137
          %v5184 = vunpack.c.h.b16 %v5137
          %v5185 = vunpack.c.l.b16 %v5138
          %v5186 = vunpack.c.h.b16 %v5138
          %v5187 = vpack.c.b16 %v5157, %v5155
          %v5188 = vpack.c.b16 %v5158, %v5156
          %v5189 = vpack.c.b16 %v5161, %v5159
          %v5190 = vpack.c.b16 %v5162, %v5160
          %v5191 = vpack.c.b16 %v5165, %v5163
          %v5192 = vpack.c.b16 %v5166, %v5164
          %v5193 = vpack.c.b16 %v5169, %v5167
          %v5194 = vpack.c.b16 %v5170, %v5168
          %v5195 = vpack.c.b16 %v5173, %v5171
          %v5196 = vpack.c.b16 %v5174, %v5172
          %v5197 = vpack.c.b16 %v5177, %v5175
          %v5198 = vpack.c.b16 %v5178, %v5176
          %v5199 = vpack.c.b16 %v5181, %v5179
          %v5200 = vpack.c.b16 %v5182, %v5180
          %v5201 = vpack.c.b16 %v5185, %v5183
          %v5202 = vpack.c.b16 %v5186, %v5184
          %5219 = vmatprep.subr.bf16.mxu0 %v5202
          %5220 = vmatpush1.bf16.msra.mxu0 %v5201
          %5221 = vmatprep.subr.bf16.mxu0 %v5200
          %5222 = vmatpush1.bf16.msra.mxu0 %v5199
          %5223 = vmatprep.subr.bf16.mxu0 %v5198
          %5224 = vmatpush1.bf16.msra.mxu0 %v5197
          %5225 = vmatprep.subr.bf16.mxu0 %v5196
          %5226 = vmatpush1.bf16.msra.mxu0 %v5195
          %5227 = vmatprep.subr.bf16.mxu0 %v5194
          %5228 = vmatpush1.bf16.msra.mxu0 %v5193
          %5229 = vmatprep.subr.bf16.mxu0 %v5192
          %5230 = vmatpush1.bf16.msra.mxu0 %v5191
          %5231 = vmatprep.subr.bf16.mxu0 %v5190
          %5232 = vmatpush1.bf16.msra.mxu0 %v5189
          %5233 = vmatprep.subr.bf16.mxu0 %v5188
          %5234 = vmatpush1.bf16.msra.mxu0 %v5187
          %5235 = vmatprep.subr.bf16.mxu0 0
          %5236 = vmatpush2.bf16.msra.mxu0 0
          %5237 = vmatprep.subr.bf16.mxu0 0
          %5238 = vmatpush2.bf16.msra.mxu0 0
          %5239 = vmatprep.subr.bf16.mxu0 0
          %5240 = vmatpush2.bf16.msra.mxu0 0
          %5241 = vmatprep.subr.bf16.mxu0 0
          %5242 = vmatpush2.bf16.msra.mxu0 0
          %5243 = vmatprep.subr.bf16.mxu0 0
          %5244 = vmatpush2.bf16.msra.mxu0 0
          %5245 = vmatprep.subr.bf16.mxu0 0
          %5246 = vmatpush2.bf16.msra.mxu0 0
          %5247 = vmatprep.subr.bf16.mxu0 0
          %5248 = vmatpush2.bf16.msra.mxu0 0
          %5249 = vmatprep.subr.bf16.mxu0 0
          %5250 = vmatpush2.bf16.msra.mxu0 0
          %5251 = vmatprep.mubr.bf16.mxu0 0
          %5252 = vmatmul.mubr.bf16.gmra.mxu0 %v868
          %v5253 = vpop.f32.mrf.mxu0
          %v5254 = vadd.f32 0.0, %v5253
          %v5255 = vpop.f32.mrf.mxu0
          %v5256 = vadd.f32 0.0, %v5255
          %v5257 = vpop.f32.mrf.mxu0
          %v5258 = vadd.f32 0.0, %v5257
          %v5259 = vpop.f32.mrf.mxu0
          %v5260 = vadd.f32 0.0, %v5259
          %5261 = vmatprep.mubr.bf16.mxu0 0
          %5262 = vmatmul.mubr.bf16.gmra.mxu0 %v869
          %v5263 = vpop.f32.mrf.mxu0
          %v5264 = vadd.f32 0.0, %v5263
          %v5265 = vpop.f32.mrf.mxu0
          %v5266 = vadd.f32 0.0, %v5265
          %v5267 = vpop.f32.mrf.mxu0
          %v5268 = vadd.f32 0.0, %v5267
          %v5269 = vpop.f32.mrf.mxu0
          %v5270 = vadd.f32 0.0, %v5269
          %5271 = vmatprep.mubr.bf16.mxu0 0
          %5272 = vmatmul.mubr.bf16.gmra.mxu0 %v870
          %v5273 = vpop.f32.mrf.mxu0
          %v5274 = vadd.f32 0.0, %v5273
          %v5275 = vpop.f32.mrf.mxu0
          %v5276 = vadd.f32 0.0, %v5275
          %v5277 = vpop.f32.mrf.mxu0
          %v5278 = vadd.f32 0.0, %v5277
          %v5279 = vpop.f32.mrf.mxu0
          %v5280 = vadd.f32 0.0, %v5279
          %5281 = vmatprep.mubr.bf16.mxu0 0
          %5282 = vmatmul.mubr.bf16.gmra.mxu0 %v871
          %v5283 = vpop.f32.mrf.mxu0
          %v5284 = vadd.f32 0.0, %v5283
          %v5285 = vpop.f32.mrf.mxu0
          %v5286 = vadd.f32 0.0, %v5285
          %v5287 = vpop.f32.mrf.mxu0
          %v5288 = vadd.f32 0.0, %v5287
          %v5289 = vpop.f32.mrf.mxu0
          %v5290 = vadd.f32 0.0, %v5289
          %5291 = vdwg.mxu0
          %v5292 = vxor.u32 %v5254, 2147483648
          %v5293 = vxor.u32 %v5256, 2147483648
          %v5294 = vxor.u32 %v5258, 2147483648
          %v5295 = vxor.u32 %v5260, 2147483648
          %v5296 = vxor.u32 %v5264, 2147483648
          %v5297 = vxor.u32 %v5266, 2147483648
          %v5298 = vxor.u32 %v5268, 2147483648
          %v5299 = vxor.u32 %v5270, 2147483648
          %v5300 = vxor.u32 %v5274, 2147483648
          %v5301 = vxor.u32 %v5276, 2147483648
          %v5302 = vxor.u32 %v5278, 2147483648
          %v5303 = vxor.u32 %v5280, 2147483648
          %v5304 = vxor.u32 %v5284, 2147483648
          %v5305 = vxor.u32 %v5286, 2147483648
          %v5306 = vxor.u32 %v5288, 2147483648
          %v5307 = vxor.u32 %v5290, 2147483648
          %v5308 = vmul.f32 %v5292, 1.442695
          %v5309 = vpow.pop %v5308
          %v5310 = vmul.f32 %v5293, 1.442695
          %v5311 = vpow.pop %v5310
          %v5312 = vmul.f32 %v5294, 1.442695
          %v5313 = vpow.pop %v5312
          %v5314 = vmul.f32 %v5295, 1.442695
          %v5315 = vpow.pop %v5314
          %v5316 = vmul.f32 %v5296, 1.442695
          %v5317 = vpow.pop %v5316
          %v5318 = vmul.f32 %v5297, 1.442695
          %v5319 = vpow.pop %v5318
          %v5320 = vmul.f32 %v5298, 1.442695
          %v5321 = vpow.pop %v5320
          %v5322 = vmul.f32 %v5299, 1.442695
          %v5323 = vpow.pop %v5322
          %v5324 = vmul.f32 %v5300, 1.442695
          %v5325 = vpow.pop %v5324
          %v5326 = vmul.f32 %v5301, 1.442695
          %v5327 = vpow.pop %v5326
          %v5328 = vmul.f32 %v5302, 1.442695
          %v5329 = vpow.pop %v5328
          %v5330 = vmul.f32 %v5303, 1.442695
          %v5331 = vpow.pop %v5330
          %v5332 = vmul.f32 %v5304, 1.442695
          %v5333 = vpow.pop %v5332
          %v5334 = vmul.f32 %v5305, 1.442695
          %v5335 = vpow.pop %v5334
          %v5336 = vmul.f32 %v5306, 1.442695
          %v5337 = vpow.pop %v5336
          %v5338 = vmul.f32 %v5307, 1.442695
          %v5339 = vpow.pop %v5338
          %v5340 = vadd.f32 %v5309, 1.0
          %v5341 = vadd.f32 %v5311, 1.0
          %v5342 = vadd.f32 %v5313, 1.0
          %v5343 = vadd.f32 %v5315, 1.0
          %v5344 = vadd.f32 %v5317, 1.0
          %v5345 = vadd.f32 %v5319, 1.0
          %v5346 = vadd.f32 %v5321, 1.0
          %v5347 = vadd.f32 %v5323, 1.0
          %v5348 = vadd.f32 %v5325, 1.0
          %v5349 = vadd.f32 %v5327, 1.0
          %v5350 = vadd.f32 %v5329, 1.0
          %v5351 = vadd.f32 %v5331, 1.0
          %v5352 = vadd.f32 %v5333, 1.0
          %v5353 = vadd.f32 %v5335, 1.0
          %v5354 = vadd.f32 %v5337, 1.0
          %v5355 = vadd.f32 %v5339, 1.0
          %v5356 = vrcp.pop %v5340
          %v5357 = vmul.f32 1.0, %v5356
          %v5358 = vrcp.pop %v5341
          %v5359 = vmul.f32 1.0, %v5358
          %v5360 = vrcp.pop %v5342
          %v5361 = vmul.f32 1.0, %v5360
          %v5362 = vrcp.pop %v5343
          %v5363 = vmul.f32 1.0, %v5362
          %v5364 = vrcp.pop %v5344
          %v5365 = vmul.f32 1.0, %v5364
          %v5366 = vrcp.pop %v5345
          %v5367 = vmul.f32 1.0, %v5366
          %v5368 = vrcp.pop %v5346
          %v5369 = vmul.f32 1.0, %v5368
          %v5370 = vrcp.pop %v5347
          %v5371 = vmul.f32 1.0, %v5370
          %v5372 = vrcp.pop %v5348
          %v5373 = vmul.f32 1.0, %v5372
          %v5374 = vrcp.pop %v5349
          %v5375 = vmul.f32 1.0, %v5374
          %v5376 = vrcp.pop %v5350
          %v5377 = vmul.f32 1.0, %v5376
          %v5378 = vrcp.pop %v5351
          %v5379 = vmul.f32 1.0, %v5378
          %v5380 = vrcp.pop %v5352
          %v5381 = vmul.f32 1.0, %v5380
          %v5382 = vrcp.pop %v5353
          %v5383 = vmul.f32 1.0, %v5382
          %v5384 = vrcp.pop %v5354
          %v5385 = vmul.f32 1.0, %v5384
          %v5386 = vrcp.pop %v5355
          %v5387 = vmul.f32 1.0, %v5386
          %v5388 = vmul.f32 %v5254, %v5357
          %v5389 = vmul.f32 %v5256, %v5359
          %v5390 = vmul.f32 %v5258, %v5361
          %v5391 = vmul.f32 %v5260, %v5363
          %v5392 = vmul.f32 %v5264, %v5365
          %v5393 = vmul.f32 %v5266, %v5367
          %v5394 = vmul.f32 %v5268, %v5369
          %v5395 = vmul.f32 %v5270, %v5371
          %v5396 = vmul.f32 %v5274, %v5373
          %v5397 = vmul.f32 %v5276, %v5375
          %v5398 = vmul.f32 %v5278, %v5377
          %v5399 = vmul.f32 %v5280, %v5379
          %v5400 = vmul.f32 %v5284, %v5381
          %v5401 = vmul.f32 %v5286, %v5383
          %v5402 = vmul.f32 %v5288, %v5385
          %v5403 = vmul.f32 %v5290, %v5387
          %v5404 = vpack.c.bf16 %v5390, %v5388
          %v5405 = vpack.c.bf16 %v5391, %v5389
          %v5406 = vpack.c.bf16 %v5394, %v5392
          %v5407 = vpack.c.bf16 %v5395, %v5393
          %v5408 = vpack.c.bf16 %v5398, %v5396
          %v5409 = vpack.c.bf16 %v5399, %v5397
          %v5410 = vpack.c.bf16 %v5402, %v5400
          %v5411 = vpack.c.bf16 %v5403, %v5401
          %s5412 = scalar_lea.vmem [#allocation9], 896
          %v5413 = vld [vmem:[%s5412] sm:$0xf]
          %v5414 = vld [vmem:[%s5412 + $0x4] sm:$0xf]
          %v5415 = vld [vmem:[%s5412 + $0x8] sm:$0xf]
          %v5416 = vld [vmem:[%s5412 + $0xc] sm:$0xf]
          %v5417 = vld [vmem:[%s5412 + $0x10] sm:$0xf]
          %v5418 = vld [vmem:[%s5412 + $0x14] sm:$0xf]
          %v5419 = vld [vmem:[%s5412 + $0x18] sm:$0xf]
          %v5420 = vld [vmem:[%s5412 + $0x1c] sm:$0xf]
          %v5421 = vld [vmem:[%s5412 + $0x20] sm:$0xf]
          %v5422 = vld [vmem:[%s5412 + $0x24] sm:$0xf]
          %v5423 = vld [vmem:[%s5412 + $0x28] sm:$0xf]
          %v5424 = vld [vmem:[%s5412 + $0x2c] sm:$0xf]
          %v5425 = vld [vmem:[%s5412 + $0x30] sm:$0xf]
          %v5426 = vld [vmem:[%s5412 + $0x34] sm:$0xf]
          %v5427 = vld [vmem:[%s5412 + $0x38] sm:$0xf]
          %v5428 = vld [vmem:[%s5412 + $0x3c] sm:$0xf]
          %v5429 = vld [vmem:[%s5412 + $0x40] sm:$0xf]
          %v5430 = vld [vmem:[%s5412 + $0x44] sm:$0xf]
          %v5431 = vld [vmem:[%s5412 + $0x48] sm:$0xf]
          %v5432 = vld [vmem:[%s5412 + $0x4c] sm:$0xf]
          %v5433 = vld [vmem:[%s5412 + $0x50] sm:$0xf]
          %v5434 = vld [vmem:[%s5412 + $0x54] sm:$0xf]
          %v5435 = vld [vmem:[%s5412 + $0x58] sm:$0xf]
          %v5436 = vld [vmem:[%s5412 + $0x5c] sm:$0xf]
          %v5437 = vld [vmem:[%s5412 + $0x60] sm:$0xf]
          %v5438 = vld [vmem:[%s5412 + $0x64] sm:$0xf]
          %v5439 = vld [vmem:[%s5412 + $0x68] sm:$0xf]
          %v5440 = vld [vmem:[%s5412 + $0x6c] sm:$0xf]
          %v5441 = vld [vmem:[%s5412 + $0x70] sm:$0xf]
          %v5442 = vld [vmem:[%s5412 + $0x74] sm:$0xf]
          %v5443 = vld [vmem:[%s5412 + $0x78] sm:$0xf]
          %v5444 = vld [vmem:[%s5412 + $0x7c] sm:$0xf]
          %v5477 = vunpack.c.l.b16 %v5413
          %v5478 = vunpack.c.l.b16 %v5414
          %v5479 = vunpack.c.l.b16 %v5415
          %v5480 = vunpack.c.l.b16 %v5416
          %v5481 = vunpack.c.l.b16 %v5417
          %v5482 = vunpack.c.l.b16 %v5418
          %v5483 = vunpack.c.l.b16 %v5419
          %v5484 = vunpack.c.l.b16 %v5420
          %v5485 = vunpack.c.l.b16 %v5421
          %v5486 = vunpack.c.l.b16 %v5422
          %v5487 = vunpack.c.l.b16 %v5423
          %v5488 = vunpack.c.l.b16 %v5424
          %v5489 = vunpack.c.l.b16 %v5425
          %v5490 = vunpack.c.l.b16 %v5426
          %v5491 = vunpack.c.l.b16 %v5427
          %v5492 = vunpack.c.l.b16 %v5428
          %v5493 = vunpack.c.l.b16 %v5429
          %v5494 = vunpack.c.l.b16 %v5430
          %v5495 = vunpack.c.l.b16 %v5431
          %v5496 = vunpack.c.l.b16 %v5432
          %v5497 = vunpack.c.l.b16 %v5433
          %v5498 = vunpack.c.l.b16 %v5434
          %v5499 = vunpack.c.l.b16 %v5435
          %v5500 = vunpack.c.l.b16 %v5436
          %v5501 = vunpack.c.l.b16 %v5437
          %v5502 = vunpack.c.l.b16 %v5438
          %v5503 = vunpack.c.l.b16 %v5439
          %v5504 = vunpack.c.l.b16 %v5440
          %v5505 = vunpack.c.l.b16 %v5441
          %v5506 = vunpack.c.l.b16 %v5442
          %v5507 = vunpack.c.l.b16 %v5443
          %v5508 = vunpack.c.l.b16 %v5444
          %v5509 = vpack.c.b16 %v5478, %v5477
          %v5510 = vpack.c.b16 %v5480, %v5479
          %v5511 = vpack.c.b16 %v5482, %v5481
          %v5512 = vpack.c.b16 %v5484, %v5483
          %v5513 = vpack.c.b16 %v5486, %v5485
          %v5514 = vpack.c.b16 %v5488, %v5487
          %v5515 = vpack.c.b16 %v5490, %v5489
          %v5516 = vpack.c.b16 %v5492, %v5491
          %v5517 = vpack.c.b16 %v5494, %v5493
          %v5518 = vpack.c.b16 %v5496, %v5495
          %v5519 = vpack.c.b16 %v5498, %v5497
          %v5520 = vpack.c.b16 %v5500, %v5499
          %v5521 = vpack.c.b16 %v5502, %v5501
          %v5522 = vpack.c.b16 %v5504, %v5503
          %v5523 = vpack.c.b16 %v5506, %v5505
          %v5524 = vpack.c.b16 %v5508, %v5507
          %5541 = vmatprep.subr.bf16.mxu0 0
          %5542 = vmatpush1.bf16.msra.mxu0 %v5516
          %5543 = vmatprep.subr.bf16.mxu0 0
          %5544 = vmatpush1.bf16.msra.mxu0 %v5515
          %5545 = vmatprep.subr.bf16.mxu0 0
          %5546 = vmatpush1.bf16.msra.mxu0 %v5514
          %5547 = vmatprep.subr.bf16.mxu0 0
          %5548 = vmatpush1.bf16.msra.mxu0 %v5513
          %5549 = vmatprep.subr.bf16.mxu0 0
          %5550 = vmatpush1.bf16.msra.mxu0 %v5512
          %5551 = vmatprep.subr.bf16.mxu0 0
          %5552 = vmatpush1.bf16.msra.mxu0 %v5511
          %5553 = vmatprep.subr.bf16.mxu0 0
          %5554 = vmatpush1.bf16.msra.mxu0 %v5510
          %5555 = vmatprep.subr.bf16.mxu0 0
          %5556 = vmatpush1.bf16.msra.mxu0 %v5509
          %5557 = vmatprep.subr.bf16.mxu0 0
          %5558 = vmatpush2.bf16.msra.mxu0 %v5524
          %5559 = vmatprep.subr.bf16.mxu0 0
          %5560 = vmatpush2.bf16.msra.mxu0 %v5523
          %5561 = vmatprep.subr.bf16.mxu0 0
          %5562 = vmatpush2.bf16.msra.mxu0 %v5522
          %5563 = vmatprep.subr.bf16.mxu0 0
          %5564 = vmatpush2.bf16.msra.mxu0 %v5521
          %5565 = vmatprep.subr.bf16.mxu0 0
          %5566 = vmatpush2.bf16.msra.mxu0 %v5520
          %5567 = vmatprep.subr.bf16.mxu0 0
          %5568 = vmatpush2.bf16.msra.mxu0 %v5519
          %5569 = vmatprep.subr.bf16.mxu0 0
          %5570 = vmatpush2.bf16.msra.mxu0 %v5518
          %5571 = vmatprep.subr.bf16.mxu0 0
          %5572 = vmatpush2.bf16.msra.mxu0 %v5517
          %5573 = vmatprep.mubr.bf16.mxu0 %v5405
          %5574 = vmatmul.mubr.bf16.gmra.mxu0 %v5404
          %v5575 = vpop.f32.mrf.mxu0
          %v5576 = vadd.f32 0.0, %v5575
          %v5577 = vpop.f32.mrf.mxu0
          %v5578 = vpop.f32.mrf.mxu0
          %v5579 = vadd.f32 0.0, %v5578
          %v5580 = vpop.f32.mrf.mxu0
          %5581 = vmatprep.mubr.bf16.mxu0 %v5407
          %5582 = vmatmul.mubr.bf16.gmra.mxu0 %v5406
          %v5583 = vpop.f32.mrf.mxu0
          %v5584 = vadd.f32 0.0, %v5583
          %v5585 = vpop.f32.mrf.mxu0
          %v5586 = vpop.f32.mrf.mxu0
          %v5587 = vadd.f32 0.0, %v5586
          %v5588 = vpop.f32.mrf.mxu0
          %5589 = vmatprep.mubr.bf16.mxu0 %v5409
          %5590 = vmatmul.mubr.bf16.gmra.mxu0 %v5408
          %v5591 = vpop.f32.mrf.mxu0
          %v5592 = vadd.f32 0.0, %v5591
          %v5593 = vpop.f32.mrf.mxu0
          %v5594 = vpop.f32.mrf.mxu0
          %v5595 = vadd.f32 0.0, %v5594
          %v5596 = vpop.f32.mrf.mxu0
          %5597 = vmatprep.mubr.bf16.mxu0 %v5411
          %5598 = vmatmul.mubr.bf16.gmra.mxu0 %v5410
          %v5599 = vpop.f32.mrf.mxu0
          %v5600 = vadd.f32 0.0, %v5599
          %v5601 = vpop.f32.mrf.mxu0
          %v5602 = vpop.f32.mrf.mxu0
          %v5603 = vadd.f32 0.0, %v5602
          %v5604 = vpop.f32.mrf.mxu0
          %5605 = vdwg.mxu0
          %v5606 = vld [vmem:[%s339] sm:$0xff]
          %v5607 = vld [vmem:[%s339 + $0x8] sm:$0xff]
          %v5608 = vld [vmem:[%s339 + $0x10] sm:$0xff]
          %v5609 = vld [vmem:[%s339 + $0x18] sm:$0xff]
          %v5610 = vld [vmem:[%s339 + $0x20] sm:$0xff]
          %v5611 = vld [vmem:[%s339 + $0x28] sm:$0xff]
          %v5612 = vld [vmem:[%s339 + $0x30] sm:$0xff]
          %v5613 = vld [vmem:[%s339 + $0x38] sm:$0xff]
          %5614 = vset.pattern.permute.xlu0 7
          %5615 = vperm.xlu0 %5614, %v811
          %v5616 = vpop.permute.xlu0 %5615
          %5618 = vset.pattern.permute.xlu0 7
          %5619 = vperm.xlu0 %5618, %v812
          %v5620 = vpop.permute.xlu0 %5619
          %5622 = vset.pattern.permute.xlu0 7
          %5623 = vperm.xlu0 %5622, %v813
          %v5624 = vpop.permute.xlu0 %5623
          %5626 = vset.pattern.permute.xlu0 7
          %5627 = vperm.xlu0 %5626, %v814
          %v5628 = vpop.permute.xlu0 %5627
          %5630 = vset.pattern.permute.xlu0 7
          %5631 = vperm.xlu0 %5630, %v815
          %v5632 = vpop.permute.xlu0 %5631
          %5634 = vset.pattern.permute.xlu0 7
          %5635 = vperm.xlu0 %5634, %v816
          %v5636 = vpop.permute.xlu0 %5635
          %5638 = vset.pattern.permute.xlu0 7
          %5639 = vperm.xlu0 %5638, %v817
          %v5640 = vpop.permute.xlu0 %5639
          %5642 = vset.pattern.permute.xlu0 7
          %5643 = vperm.xlu0 %5642, %v818
          %v5644 = vpop.permute.xlu0 %5643
          %v5646 = vmul.f32 %v5616, %v5576
          %v5647 = vmul.f32 %v5620, %v5579
          %v5648 = vmul.f32 %v5624, %v5584
          %v5649 = vmul.f32 %v5628, %v5587
          %v5650 = vmul.f32 %v5632, %v5592
          %v5651 = vmul.f32 %v5636, %v5595
          %v5652 = vmul.f32 %v5640, %v5600
          %v5653 = vmul.f32 %v5644, %v5603
          %v5654 = vadd.f32 %v5606, %v5646
          %v5655 = vadd.f32 %v5607, %v5647
          %v5656 = vadd.f32 %v5608, %v5648
          %v5657 = vadd.f32 %v5609, %v5649
          %v5658 = vadd.f32 %v5610, %v5650
          %v5659 = vadd.f32 %v5611, %v5651
          %v5660 = vadd.f32 %v5612, %v5652
          %v5661 = vadd.f32 %v5613, %v5653
          %5662 = vst [vmem:[%s339] sm:$0xff] %v5654
          %5663 = vst [vmem:[%s339 + $0x8] sm:$0xff] %v5655
          %5664 = vst [vmem:[%s339 + $0x10] sm:$0xff] %v5656
          %5665 = vst [vmem:[%s339 + $0x18] sm:$0xff] %v5657
          %5666 = vst [vmem:[%s339 + $0x20] sm:$0xff] %v5658
          %5667 = vst [vmem:[%s339 + $0x28] sm:$0xff] %v5659
          %5668 = vst [vmem:[%s339 + $0x30] sm:$0xff] %v5660
          %5669 = vst [vmem:[%s339 + $0x38] sm:$0xff] %v5661
        $region88: #{tpu_custom_call.1} parent=35 // pred_fallthru
          _
        %v5670 = vld [vmem:[%s339] sm:$0xff]
        %v5671 = vld [vmem:[%s339 + $0x8] sm:$0xff]
        %v5672 = vld [vmem:[%s339 + $0x10] sm:$0xff]
        %v5673 = vld [vmem:[%s339 + $0x18] sm:$0xff]
        %v5674 = vld [vmem:[%s339 + $0x20] sm:$0xff]
        %v5675 = vld [vmem:[%s339 + $0x28] sm:$0xff]
        %v5676 = vld [vmem:[%s339 + $0x30] sm:$0xff]
        %v5677 = vld [vmem:[%s339 + $0x38] sm:$0xff]
        %v5678 = vsel %vm835, 1, 0
        %v5679 = vsel %vm836, 1, 0
        %v5680 = vsel %vm837, 1, 0
        %v5681 = vsel %vm838, 1, 0
        %v5682 = vsel %vm839, 1, 0
        %v5683 = vsel %vm840, 1, 0
        %v5684 = vsel %vm841, 1, 0
        %v5685 = vsel %vm842, 1, 0
        %vm5686 = vcmp.eq.s32.totalorder %v5678, 1
        %vm5687 = vcmp.eq.s32.totalorder %v5679, 1
        %vm5688 = vcmp.eq.s32.totalorder %v5680, 1
        %vm5689 = vcmp.eq.s32.totalorder %v5681, 1
        %vm5690 = vcmp.eq.s32.totalorder %v5682, 1
        %vm5691 = vcmp.eq.s32.totalorder %v5683, 1
        %vm5692 = vcmp.eq.s32.totalorder %v5684, 1
        %vm5693 = vcmp.eq.s32.totalorder %v5685, 1
        %v5694 = vsel %vm5686, %v5670, %v377
        %v5695 = vsel %vm5687, %v5671, %v378
        %v5696 = vsel %vm5688, %v5672, %v379
        %v5697 = vsel %vm5689, %v5673, %v380
        %v5698 = vsel %vm5690, %v5674, %v381
        %v5699 = vsel %vm5691, %v5675, %v382
        %v5700 = vsel %vm5692, %v5676, %v383
        %v5701 = vsel %vm5693, %v5677, %v384
        %v5702 = vmul.f32 %v581, %v5694
        %v5703 = vmul.f32 %v582, %v5695
        %v5704 = vmul.f32 %v583, %v5696
        %v5705 = vmul.f32 %v584, %v5697
        %v5706 = vmul.f32 %v585, %v5698
        %v5707 = vmul.f32 %v586, %v5699
        %v5708 = vmul.f32 %v587, %v5700
        %v5709 = vmul.f32 %v588, %v5701
        %5710 = vst [vmem:[%s339] sm:$0xff] %v5702
        %5711 = vst [vmem:[%s339 + $0x8] sm:$0xff] %v5703
        %5712 = vst [vmem:[%s339 + $0x10] sm:$0xff] %v5704
        %5713 = vst [vmem:[%s339 + $0x18] sm:$0xff] %v5705
        %5714 = vst [vmem:[%s339 + $0x20] sm:$0xff] %v5706
        %5715 = vst [vmem:[%s339 + $0x28] sm:$0xff] %v5707
        %5716 = vst [vmem:[%s339 + $0x30] sm:$0xff] %v5708
        %5717 = vst [vmem:[%s339 + $0x38] sm:$0xff] %v5709
        %s5718 = sand.u32 %s142, 1
        %s5719 = scalar_lea.sflag [#allocation5], %s5718
        %s5720 = sand.u32 %s142, 1
        %s5721 = smul.addr %s5720, 64
        %s5722 = scalar_lea.vmem [#allocation11], %s5721
        %s5723 = sand.u32 %s170, 1
        %s5724 = scalar_lea.sflag [#allocation13], %s5723
        %s5725 = sand.u32 %s170, 1
        %s5726 = smul.addr %s5725, 64
        %s5727 = scalar_lea.vmem [#allocation12], %s5726
        %s5728 = smul.u32 8, %s34
        %p5729 = scmp.lt.s32.totalorder %s33, 1
        %s5730 = scalar_select %p5729, %s33, 1
        %p5731 = scmp.lt.s32.totalorder %s5728, 15
        %s5732 = scalar_select %p5731, %s5728, 15
        %s5733 = smul.addr %s5730, 16
        %s5734 = sadd.s32 %s5732, %s5733
        %s5735 = smul.addr %s5734, 8
        %s5736 = scalar_lea.vmem %s6, %s5735
        // Predicated region
        $region89: #{tpu_custom_call.1} parent=35 // pred_check
          %p5737 = pneg %p152
        $region90: #{tpu_custom_call.1} parent=35 // pred_check_branch
          %5739 = sbr.rel (%p5737) target = $region92
        $region91: #{tpu_custom_call.1} parent=35 // pred_region
          %s5740 = smul.u32 8, %s34
          %s5742 = ssub.s32 1024, 1024
          %5743 = vsyncadd %s5719, %s5742
          %s5744 = smul.addr %s33, 16
          %s5745 = sadd.s32 %s5740, %s5744
          %s5746 = smul.addr %s5745, 128
          %s5747 = scalar_lea.hbm %s4, %s5746
          %s5748 = sshll.u32 %s5722, 4
          %s5749 = int_to_ptr.vmem [resolvable:$true] %s5748
          %5754 = dma.vmem_to_hbm [thread:$0]  %s5749, 1024, %s5747, %s5719, 128, 128, 8
        $region92: #{tpu_custom_call.1} parent=35 // pred_fallthru
          _
        // Predicated region
        $region93: #{tpu_custom_call.1} parent=35 // pred_check
          %p5755 = pneg %p180
        $region94: #{tpu_custom_call.1} parent=35 // pred_check_branch
          %5757 = sbr.rel (%p5755) target = $region96
        $region95: #{tpu_custom_call.1} parent=35 // pred_region
          %s5758 = smul.u32 8, %s34
          %s5760 = ssub.s32 1024, 1024
          %5761 = vsyncadd %s5724, %s5760
          %s5762 = smul.addr %s33, 16
          %s5763 = sadd.s32 %s5758, %s5762
          %s5764 = smul.addr %s5763, 128
          %s5765 = scalar_lea.hbm %s5, %s5764
          %s5766 = sshll.u32 %s5727, 4
          %s5767 = int_to_ptr.vmem [resolvable:$true] %s5766
          %5772 = dma.vmem_to_hbm [thread:$0]  %s5767, 1024, %s5765, %s5724, 128, 128, 8
        $region96: #{tpu_custom_call.1} parent=35 // pred_fallthru
          _
        // Predicated region
        $region97: #{tpu_custom_call.1} parent=35 // pred_check
          %p5773 = pneg %p208
        $region98: #{tpu_custom_call.1} parent=35 // pred_check_branch
          %5775 = sbr.rel (%p5773) target = $region100
        $region99: #{tpu_custom_call.1} parent=35 // pred_region
          %s5776 = smul.u32 8, %s34
        $region100: #{tpu_custom_call.1} parent=35 // pred_fallthru
          _
      $region36: #{tpu_custom_call.1} parent=5 // pred_fallthru
        _
      %p5777 = scmp.le.s32.totalorder 2, %s24
      // Predicated region
      $region101: #{tpu_custom_call.1} parent=5 // pred_check
        %p5778 = pneg %p5777
      $region102: #{tpu_custom_call.1} parent=5 // pred_check_branch
        %5780 = sbr.rel (%p5778) target = $region104
      $region103: #{tpu_custom_call.1} parent=5 // pred_region
        %s5781 = ssub.s32 %s24, 2
        // Predicated region
        $region105: #{tpu_custom_call.1} parent=103 // pred_check
          %p5782 = pneg %p158
        $region106: #{tpu_custom_call.1} parent=103 // pred_check_branch
          %5784 = sbr.rel (%p5782) target = $region108
        $region107: #{tpu_custom_call.1} parent=103 // pred_region
          %s5785 = sand.u32 %s143, 1
          %s5786 = scalar_lea.sflag [#allocation5], %s5785
          %s5787 = sand.u32 %s143, 1
          %s5788 = smul.addr %s5787, 64
          %s5789 = scalar_lea.vmem [#allocation11], %s5788
          %5790 = dma.done %s5786, 1024
        $region108: #{tpu_custom_call.1} parent=103 // pred_fallthru
          _
        // Predicated region
        $region109: #{tpu_custom_call.1} parent=103 // pred_check
          %p5791 = pneg %p186
        $region110: #{tpu_custom_call.1} parent=103 // pred_check_branch
          %5793 = sbr.rel (%p5791) target = $region112
        $region111: #{tpu_custom_call.1} parent=103 // pred_region
          %s5794 = sand.u32 %s171, 1
          %s5795 = scalar_lea.sflag [#allocation13], %s5794
          %s5796 = sand.u32 %s171, 1
          %s5797 = smul.addr %s5796, 64
          %s5798 = scalar_lea.vmem [#allocation12], %s5797
          %5799 = dma.done %s5795, 1024
        $region112: #{tpu_custom_call.1} parent=103 // pred_fallthru
          _
        // Predicated region
        $region113: #{tpu_custom_call.1} parent=103 // pred_check
          %p5800 = pneg %p214
        $region114: #{tpu_custom_call.1} parent=103 // pred_check_branch
          %5802 = sbr.rel (%p5800) target = $region116
        $region115: #{tpu_custom_call.1} parent=103 // pred_region
          %s5803 = smul.u32 8, %s36
          %p5804 = scmp.lt.s32.totalorder %s35, 1
          %s5805 = scalar_select %p5804, %s35, 1
          %p5806 = scmp.lt.s32.totalorder %s5803, 15
          %s5807 = scalar_select %p5806, %s5803, 15
          %s5808 = smul.addr %s5805, 16
          %s5809 = sadd.s32 %s5807, %s5808
          %s5810 = smul.addr %s5809, 8
          %s5811 = scalar_lea.vmem %s6, %s5810
        $region116: #{tpu_custom_call.1} parent=103 // pred_fallthru
          _
      $region104: #{tpu_custom_call.1} parent=5 // pred_fallthru
        _
    $region6: #{tpu_custom_call.1} parent=1 // loop_footer
      %s28 = sadd.s32 1, %s24
    $region7: #{tpu_custom_call.1} parent=1 // loop_footer_branch
      %23 = sbr.rel target = $region3
    $region8: #{tpu_custom_call.1} parent=1 // loop_exit
      _
    %5812 = vsyncpa [#allocation4], 1
    %s5813 = scalar_lea.sflag [#allocation4], 1
    %5814 = vsyncpa %s5813, 1
    %5815 = vsyncpa [#allocation7], 1
    %5816 = vsyncpa [#allocation10], 1
    %5817 = vsyncpa [#allocation5], 1
    %s5818 = scalar_lea.sflag [#allocation5], 1
    %5819 = vsyncpa %s5818, 1
    %5820 = vsyncpa [#allocation13], 1
    %s5821 = scalar_lea.sflag [#allocation13], 1
    %5822 = vsyncpa %s5821, 1

</llo_original>
